<compile_context>
chip_gen: v5e
topology: v5e:2x2
jax: 0.10.0
libtpu: 0.0.40
codegen_flags: <defaults>
</compile_context>

<pallas_src>
import functools

import jax
import jax.numpy as jnp
from jax.experimental import pallas as pl
from jax.experimental.pallas import tpu as pltpu

_VMEM_LIMIT = 32 * 1024 * 1024


# ----------------------------- Pallas kernels -----------------------------

def _conv_pool_kernel(p_ref, w_ref, b_ref, o_ref):
    """Fused im2col-GEMM + bias + ReLU + 2x2 max-pool.

    p_ref: (4, TILE_M, K) -- the 4 pooling-window corners of each pooled output
                             position; rows ordered (b, h_pooled, w_pooled).
    w_ref: (K, N) resident weight;  b_ref: (1, N);  o_ref: (TILE_M, N) pooled output.
    max-then-(bias,relu) == relu(conv+bias)-then-max because the bias is shared across
    the pooling window and ReLU is monotone.
    """
    w = w_ref[...]
    y = jnp.dot(p_ref[0], w, preferred_element_type=jnp.float32)
    y = jnp.maximum(y, jnp.dot(p_ref[1], w, preferred_element_type=jnp.float32))
    y = jnp.maximum(y, jnp.dot(p_ref[2], w, preferred_element_type=jnp.float32))
    y = jnp.maximum(y, jnp.dot(p_ref[3], w, preferred_element_type=jnp.float32))
    o_ref[...] = jnp.maximum(y + b_ref[...], 0.0).astype(o_ref.dtype)


def _head_kernel(x_ref, w1_ref, b1_ref, w2_ref, b2_ref, o_ref):
    """fc1 + ReLU + fc2 + log_softmax over one batch tile (weights resident).

    fc2 columns are zero-padded to a lane-dense multiple of 128; padded bias entries are
    -1e30 so they contribute nothing to the softmax normalization.
    """
    h = jnp.dot(x_ref[...], w1_ref[...], preferred_element_type=jnp.float32) + b1_ref[...]
    h = jnp.maximum(h, 0.0)
    logits = jnp.dot(h, w2_ref[...], preferred_element_type=jnp.float32) + b2_ref[...]
    m = jnp.max(logits, axis=1, keepdims=True)
    s = logits - m
    lse = jnp.log(jnp.sum(jnp.exp(s), axis=1, keepdims=True))
    o_ref[...] = (s - lse).astype(o_ref.dtype)


# ----------------------------- pallas_call wrappers -----------------------------

def conv_pool_gemm(patches4, w_mat, bias_row, *, tile_m=512):
    """(4, M, K) corner-major patches -> pooled (M, N) = relu(max_corner(p @ w) + b)."""
    _, M, K = patches4.shape
    N = w_mat.shape[1]
    tm = min(tile_m, M)                      # M is always a multiple of 8 here
    grid = (pl.cdiv(M, tm),)
    cost = pl.CostEstimate(
        flops=2 * 4 * M * K * N,
        transcendentals=0,
        bytes_accessed=4 * (4 * M * K + K * N + N + M * N),
    )
    return pl.pallas_call(
        _conv_pool_kernel,
        out_shape=jax.ShapeDtypeStruct((M, N), jnp.float32),
        grid=grid,
        in_specs=[
            pl.BlockSpec((4, tm, K), lambda i: (0, i, 0)),   # streamed row tiles
            pl.BlockSpec((K, N), lambda i: (0, 0)),          # resident weight
            pl.BlockSpec((1, N), lambda i: (0, 0)),          # resident bias
        ],
        out_specs=pl.BlockSpec((tm, N), lambda i: (i, 0)),
        compiler_params=pltpu.CompilerParams(
            dimension_semantics=("parallel",),
            vmem_limit_bytes=_VMEM_LIMIT,
        ),
        cost_estimate=cost,
    )(patches4, w_mat, bias_row)


def head(x, w1, b1, w2p, b2p, *, tile_b=256):
    """Batch-tiled fc1+ReLU+fc2+log_softmax; output is lane-dense (padded to 128)."""
    B, K1 = x.shape
    Hd = w1.shape[1]
    Np = w2p.shape[1]
    tb = min(tile_b, B)
    grid = (pl.cdiv(B, tb),)
    cost = pl.CostEstimate(
        flops=2 * B * (K1 * Hd + Hd * Np),
        transcendentals=B * Np,
        bytes_accessed=4 * (B * K1 + K1 * Hd + Hd + Hd * Np + Np + B * Np),
    )
    return pl.pallas_call(
        _head_kernel,
        out_shape=jax.ShapeDtypeStruct((B, Np), jnp.float32),
        grid=grid,
        in_specs=[
            pl.BlockSpec((tb, K1), lambda i: (i, 0)),        # streamed batch tiles
            pl.BlockSpec((K1, Hd), lambda i: (0, 0)),        # resident fc1 weight
            pl.BlockSpec((1, Hd), lambda i: (0, 0)),
            pl.BlockSpec((Hd, Np), lambda i: (0, 0)),        # resident fc2 weight (padded)
            pl.BlockSpec((1, Np), lambda i: (0, 0)),
        ],
        out_specs=pl.BlockSpec((tb, Np), lambda i: (i, 0)),
        compiler_params=pltpu.CompilerParams(
            dimension_semantics=("parallel",),
            vmem_limit_bytes=_VMEM_LIMIT,
        ),
        cost_estimate=cost,
    )(x, w1, b1, w2p, b2p)


# ----------------------------- XLA-side glue -----------------------------

def _im2col_pooled(x_nhwc, kh, kw):
    """Corner-major im2col for the fused conv+2x2-pool GEMM.

    Returns (4, B*oh2*ow2, kh*kw*C): leading axis enumerates the 4 positions of each 2x2
    pooling window (corner = (cy, cx)); rows ordered (b, hp, wp); features (ky, kx, cin).
    """
    # TODO(synk): build these patches inside the conv kernel (space-to-depth + in-kernel
    # slicing) to avoid materializing the K-times-larger patch matrix in HBM; current
    # Mosaic reshape/strided-slice limits make the XLA-side construction the safe choice.
    B, H, W, C = x_nhwc.shape
    oh, ow = H - kh + 1, W - kw + 1
    oh2, ow2 = oh // 2, ow // 2
    corners = []
    for cy in (0, 1):
        for cx in (0, 1):
            taps = []
            for ky in range(kh):
                for kx in range(kw):
                    ys, xs = cy + ky, cx + kx
                    taps.append(x_nhwc[:, ys: ys + 2 * oh2 - 1: 2,
                                       xs: xs + 2 * ow2 - 1: 2, :])
            corners.append(
                jnp.concatenate(taps, axis=-1).reshape(B * oh2 * ow2, kh * kw * C))
    return jnp.stack(corners, axis=0)


def prepare_params(params):
    """One-time (outside jit) weight massaging: GEMM-ready layouts, fc1 flatten
    permutation folded into the weight, lane-dense padded fc2, pre-shaped biases."""
    cin = params["conv1_w"].shape[1]
    conv1_w = jnp.transpose(params["conv1_w"], (2, 3, 1, 0)).reshape(25 * cin, 20)
    conv2_w = jnp.transpose(params["conv2_w"], (2, 3, 1, 0)).reshape(25 * 20, 50)
    # PyTorch flattens the (C=50, H=4, W=4) activation in (c, h, w) order; our activation
    # is flattened in NHWC (h, w, c) order, so permute fc1_w's input rows once.
    fc1_w = jnp.transpose(params["fc1_w"].reshape(500, 50, 4, 4), (2, 3, 1, 0))
    fc1_w = fc1_w.reshape(4 * 4 * 50, 500)
    fc2_w = params["fc2_w"].T                                  # (500, num_class)
    num_class = fc2_w.shape[1]
    n_pad = ((num_class + 127) // 128) * 128                   # lane-dense head output
    fc2_wp = jnp.zeros((500, n_pad), jnp.float32).at[:, :num_class].set(fc2_w)
    fc2_bp = jnp.full((1, n_pad), -1e30, jnp.float32).at[0, :num_class].set(
        params["fc2_b"])
    prep = {
        "conv1_w": conv1_w, "conv1_b": params["conv1_b"].reshape(1, -1),
        "conv2_w": conv2_w, "conv2_b": params["conv2_b"].reshape(1, -1),
        "fc1_w": fc1_w, "fc1_b": params["fc1_b"].reshape(1, -1),
        "fc2_w": fc2_wp, "fc2_b": fc2_bp,
    }
    return prep, num_class


def net_forward(prep, x_nchw, *, num_class):
    x = jnp.transpose(x_nchw, (0, 2, 3, 1))                       # NCHW -> NHWC
    B = x.shape[0]
    # conv1 (5x5, valid) + ReLU + 2x2 max-pool: one fused, M-gridded kernel
    p1 = _im2col_pooled(x, 5, 5)                                  # (4, B*144, 25*Cin)
    y1 = conv_pool_gemm(p1, prep["conv1_w"], prep["conv1_b"], tile_m=1024)
    y1 = y1.reshape(B, 12, 12, 20)
    # conv2 + ReLU + 2x2 max-pool
    p2 = _im2col_pooled(y1, 5, 5)                                 # (4, B*16, 500)
    y2 = conv_pool_gemm(p2, prep["conv2_w"], prep["conv2_b"], tile_m=512)
    feats = y2.reshape(B, 4 * 4 * 50)        # (h, w, c) flatten; fc1_w pre-permuted
    logp = head(feats, prep["fc1_w"], prep["fc1_b"], prep["fc2_w"], prep["fc2_b"])
    return logp[:, :num_class]                                    # drop lane padding


# ----------------------------- params (deterministic, PyTorch-shaped) ---------------

def init_params(key, channels, num_class):
    ks = jax.random.split(key, 8)

    def u(k, shape, fan_in):
        bound = 1.0 / jnp.sqrt(jnp.float32(fan_in))
        return jax.random.uniform(k, shape, jnp.float32, -bound, bound)

    return {
        "conv1_w": u(ks[0], (20, channels, 5, 5), channels * 25),
        "conv1_b": u(ks[1], (20,), channels * 25),
        "conv2_w": u(ks[2], (50, 20, 5, 5), 20 * 25),
        "conv2_b": u(ks[3], (50,), 20 * 25),
        "fc1_w": u(ks[4], (500, 4 * 4 * 50), 4 * 4 * 50),
        "fc1_b": u(ks[5], (500,), 4 * 4 * 50),
        "fc2_w": u(ks[6], (num_class, 500), 500),
        "fc2_b": u(ks[7], (num_class,), 500),
    }


if __name__ == "__main__":
    key = jax.random.PRNGKey(0)
    pkey, xkey = jax.random.split(key)

    channels, num_class, batch = 1, 10, 2
    params = init_params(pkey, channels, num_class)
    prep, n_cls = prepare_params(params)          # one-time weight prep, outside jit
    # 28x28 spatial is required by the architecture (-> 4x4x50 before fc1)
    x = jax.random.normal(xkey, (batch, channels, 28, 28), jnp.float32)

    fwd = jax.jit(functools.partial(net_forward, num_class=n_cls))
    out = fwd(prep, x)
    jax.block_until_ready(out)

    assert out.shape == (batch, n_cls)
    assert bool(jnp.all(jnp.isfinite(out)))
    # log_softmax rows must (approximately) exp-sum to 1
    assert bool(jnp.allclose(jnp.sum(jnp.exp(out), axis=1), 1.0, atol=1e-4))
    print("KERNEL_OK")
</pallas_src>

<mosaic_0001>
module attributes {stable_mosaic.version = 11 : i64} {
  func.func @_conv_pool_kernel(%arg0: i32, %arg1: memref<4x288x25xf32, #tpu.memory_space<vmem>>, %arg2: memref<25x20xf32, #tpu.memory_space<vmem>>, %arg3: memref<1x20xf32, #tpu.memory_space<vmem>>, %arg4: memref<288x20xf32, #tpu.memory_space<vmem>>) attributes {dimension_semantics = [#tpu.dimension_semantics<parallel>], iteration_bounds = array<i64: 1>, scalar_prefetch = 0 : i64, scratch_operands = 0 : i64, tpu.core_type = #tpu.core_type<tc>, window_params = [{transform_indices = @transform_0, window_bounds = array<i64: 4, 288, 25>}, {pipeline_mode = #tpu.pipeline_mode<synchronous>, transform_indices = @transform_1, window_bounds = array<i64: 25, 20>}, {pipeline_mode = #tpu.pipeline_mode<synchronous>, transform_indices = @transform_2, window_bounds = array<i64: 1, 20>}, {transform_indices = @transform_3, window_bounds = array<i64: 288, 20>}]} {
    %c0 = arith.constant 0 : index
    %c0_0 = arith.constant 0 : index
    %0 = vector.load %arg2[%c0, %c0_0] : memref<25x20xf32, #tpu.memory_space<vmem>>, vector<25x20xf32>
    %c0_1 = arith.constant 0 : index
    %c0_2 = arith.constant 0 : index
    %c0_3 = arith.constant 0 : index
    %1 = vector.load %arg1[%c0_1, %c0_2, %c0_3] : memref<4x288x25xf32, #tpu.memory_space<vmem>>, vector<1x288x25xf32>
    %2 = vector.shape_cast %1 : vector<1x288x25xf32> to vector<288x25xf32>
    %cst = arith.constant dense<0.000000e+00> : vector<288x20xf32>
    %3 = tpu.matmul %2, %0, %cst {dimension_numbers = #tpu.dot_dimension_numbers<[1], [0], [0], [1], [0, 0, 1, 1], [], []>} : vector<288x25xf32>, vector<25x20xf32>, vector<288x20xf32> -> vector<288x20xf32>
    %c1 = arith.constant 1 : index
    %c0_4 = arith.constant 0 : index
    %c0_5 = arith.constant 0 : index
    %4 = vector.load %arg1[%c1, %c0_4, %c0_5] : memref<4x288x25xf32, #tpu.memory_space<vmem>>, vector<1x288x25xf32>
    %5 = vector.shape_cast %4 : vector<1x288x25xf32> to vector<288x25xf32>
    %cst_6 = arith.constant dense<0.000000e+00> : vector<288x20xf32>
    %6 = tpu.matmul %5, %0, %cst_6 {dimension_numbers = #tpu.dot_dimension_numbers<[1], [0], [0], [1], [0, 0, 1, 1], [], []>} : vector<288x25xf32>, vector<25x20xf32>, vector<288x20xf32> -> vector<288x20xf32>
    %7 = arith.maximumf %3, %6 : vector<288x20xf32>
    %c2 = arith.constant 2 : index
    %c0_7 = arith.constant 0 : index
    %c0_8 = arith.constant 0 : index
    %8 = vector.load %arg1[%c2, %c0_7, %c0_8] : memref<4x288x25xf32, #tpu.memory_space<vmem>>, vector<1x288x25xf32>
    %9 = vector.shape_cast %8 : vector<1x288x25xf32> to vector<288x25xf32>
    %cst_9 = arith.constant dense<0.000000e+00> : vector<288x20xf32>
    %10 = tpu.matmul %9, %0, %cst_9 {dimension_numbers = #tpu.dot_dimension_numbers<[1], [0], [0], [1], [0, 0, 1, 1], [], []>} : vector<288x25xf32>, vector<25x20xf32>, vector<288x20xf32> -> vector<288x20xf32>
    %11 = arith.maximumf %7, %10 : vector<288x20xf32>
    %c3 = arith.constant 3 : index
    %c0_10 = arith.constant 0 : index
    %c0_11 = arith.constant 0 : index
    %12 = vector.load %arg1[%c3, %c0_10, %c0_11] : memref<4x288x25xf32, #tpu.memory_space<vmem>>, vector<1x288x25xf32>
    %13 = vector.shape_cast %12 : vector<1x288x25xf32> to vector<288x25xf32>
    %cst_12 = arith.constant dense<0.000000e+00> : vector<288x20xf32>
    %14 = tpu.matmul %13, %0, %cst_12 {dimension_numbers = #tpu.dot_dimension_numbers<[1], [0], [0], [1], [0, 0, 1, 1], [], []>} : vector<288x25xf32>, vector<25x20xf32>, vector<288x20xf32> -> vector<288x20xf32>
    %15 = arith.maximumf %11, %14 : vector<288x20xf32>
    %c0_13 = arith.constant 0 : index
    %c0_14 = arith.constant 0 : index
    %16 = vector.load %arg3[%c0_13, %c0_14] : memref<1x20xf32, #tpu.memory_space<vmem>>, vector<1x20xf32>
    %17 = vector.broadcast %16 : vector<1x20xf32> to vector<288x20xf32>
    %18 = arith.addf %15, %17 : vector<288x20xf32>
    %cst_15 = arith.constant 0.000000e+00 : f32
    %19 = vector.broadcast %cst_15 : f32 to vector<288x20xf32>
    %20 = arith.maximumf %18, %19 : vector<288x20xf32>
    %c0_16 = arith.constant 0 : index
    %c0_17 = arith.constant 0 : index
    %21 = vector.load %arg4[%c0_16, %c0_17] : memref<288x20xf32, #tpu.memory_space<vmem>>, vector<288x20xf32>
    tpu.vector_store %arg4[%c0_16, %c0_17], %20 {strides = array<i32>} : memref<288x20xf32, #tpu.memory_space<vmem>>, vector<288x20xf32>,
    return
  }
  func.func @transform_0(%arg0: i32) -> (i32, i32, i32) {
    %c0_i32 = arith.constant 0 : i32
    %c0_i32_0 = arith.constant 0 : i32
    %c0_i32_1 = arith.constant 0 : i32
    return %c0_i32, %arg0, %c0_i32_0 : i32, i32, i32
  }
  func.func @transform_1(%arg0: i32) -> (i32, i32) {
    %c0_i32 = arith.constant 0 : i32
    %c0_i32_0 = arith.constant 0 : i32
    %c0_i32_1 = arith.constant 0 : i32
    return %c0_i32, %c0_i32_0 : i32, i32
  }
  func.func @transform_2(%arg0: i32) -> (i32, i32) {
    %c0_i32 = arith.constant 0 : i32
    %c0_i32_0 = arith.constant 0 : i32
    %c0_i32_1 = arith.constant 0 : i32
    return %c0_i32, %c0_i32_0 : i32, i32
  }
  func.func @transform_3(%arg0: i32) -> (i32, i32) {
    %c0_i32 = arith.constant 0 : i32
    %c0_i32_0 = arith.constant 0 : i32
    return %arg0, %c0_i32 : i32, i32
  }
}

module attributes {stable_mosaic.version = 11 : i64} {
  func.func @_conv_pool_kernel(%arg0: i32, %arg1: memref<4x32x500xf32, #tpu.memory_space<vmem>>, %arg2: memref<500x50xf32, #tpu.memory_space<vmem>>, %arg3: memref<1x50xf32, #tpu.memory_space<vmem>>, %arg4: memref<32x50xf32, #tpu.memory_space<vmem>>) attributes {dimension_semantics = [#tpu.dimension_semantics<parallel>], iteration_bounds = array<i64: 1>, scalar_prefetch = 0 : i64, scratch_operands = 0 : i64, tpu.core_type = #tpu.core_type<tc>, window_params = [{transform_indices = @transform_0, window_bounds = array<i64: 4, 32, 500>}, {pipeline_mode = #tpu.pipeline_mode<synchronous>, transform_indices = @transform_1, window_bounds = array<i64: 500, 50>}, {pipeline_mode = #tpu.pipeline_mode<synchronous>, transform_indices = @transform_2, window_bounds = array<i64: 1, 50>}, {transform_indices = @transform_3, window_bounds = array<i64: 32, 50>}]} {
    %c0 = arith.constant 0 : index
    %c0_0 = arith.constant 0 : index
    %0 = vector.load %arg2[%c0, %c0_0] : memref<500x50xf32, #tpu.memory_space<vmem>>, vector<500x50xf32>
    %c0_1 = arith.constant 0 : index
    %c0_2 = arith.constant 0 : index
    %c0_3 = arith.constant 0 : index
    %1 = vector.load %arg1[%c0_1, %c0_2, %c0_3] : memref<4x32x500xf32, #tpu.memory_space<vmem>>, vector<1x32x500xf32>
    %2 = vector.shape_cast %1 : vector<1x32x500xf32> to vector<32x500xf32>
    %cst = arith.constant dense<0.000000e+00> : vector<32x50xf32>
    %3 = tpu.matmul %2, %0, %cst {dimension_numbers = #tpu.dot_dimension_numbers<[1], [0], [0], [1], [0, 0, 1, 1], [], []>} : vector<32x500xf32>, vector<500x50xf32>, vector<32x50xf32> -> vector<32x50xf32>
    %c1 = arith.constant 1 : index
    %c0_4 = arith.constant 0 : index
    %c0_5 = arith.constant 0 : index
    %4 = vector.load %arg1[%c1, %c0_4, %c0_5] : memref<4x32x500xf32, #tpu.memory_space<vmem>>, vector<1x32x500xf32>
    %5 = vector.shape_cast %4 : vector<1x32x500xf32> to vector<32x500xf32>
    %cst_6 = arith.constant dense<0.000000e+00> : vector<32x50xf32>
    %6 = tpu.matmul %5, %0, %cst_6 {dimension_numbers = #tpu.dot_dimension_numbers<[1], [0], [0], [1], [0, 0, 1, 1], [], []>} : vector<32x500xf32>, vector<500x50xf32>, vector<32x50xf32> -> vector<32x50xf32>
    %7 = arith.maximumf %3, %6 : vector<32x50xf32>
    %c2 = arith.constant 2 : index
    %c0_7 = arith.constant 0 : index
    %c0_8 = arith.constant 0 : index
    %8 = vector.load %arg1[%c2, %c0_7, %c0_8] : memref<4x32x500xf32, #tpu.memory_space<vmem>>, vector<1x32x500xf32>
    %9 = vector.shape_cast %8 : vector<1x32x500xf32> to vector<32x500xf32>
    %cst_9 = arith.constant dense<0.000000e+00> : vector<32x50xf32>
    %10 = tpu.matmul %9, %0, %cst_9 {dimension_numbers = #tpu.dot_dimension_numbers<[1], [0], [0], [1], [0, 0, 1, 1], [], []>} : vector<32x500xf32>, vector<500x50xf32>, vector<32x50xf32> -> vector<32x50xf32>
    %11 = arith.maximumf %7, %10 : vector<32x50xf32>
    %c3 = arith.constant 3 : index
    %c0_10 = arith.constant 0 : index
    %c0_11 = arith.constant 0 : index
    %12 = vector.load %arg1[%c3, %c0_10, %c0_11] : memref<4x32x500xf32, #tpu.memory_space<vmem>>, vector<1x32x500xf32>
    %13 = vector.shape_cast %12 : vector<1x32x500xf32> to vector<32x500xf32>
    %cst_12 = arith.constant dense<0.000000e+00> : vector<32x50xf32>
    %14 = tpu.matmul %13, %0, %cst_12 {dimension_numbers = #tpu.dot_dimension_numbers<[1], [0], [0], [1], [0, 0, 1, 1], [], []>} : vector<32x500xf32>, vector<500x50xf32>, vector<32x50xf32> -> vector<32x50xf32>
    %15 = arith.maximumf %11, %14 : vector<32x50xf32>
    %c0_13 = arith.constant 0 : index
    %c0_14 = arith.constant 0 : index
    %16 = vector.load %arg3[%c0_13, %c0_14] : memref<1x50xf32, #tpu.memory_space<vmem>>, vector<1x50xf32>
    %17 = vector.broadcast %16 : vector<1x50xf32> to vector<32x50xf32>
    %18 = arith.addf %15, %17 : vector<32x50xf32>
    %cst_15 = arith.constant 0.000000e+00 : f32
    %19 = vector.broadcast %cst_15 : f32 to vector<32x50xf32>
    %20 = arith.maximumf %18, %19 : vector<32x50xf32>
    %c0_16 = arith.constant 0 : index
    %c0_17 = arith.constant 0 : index
    %21 = vector.load %arg4[%c0_16, %c0_17] : memref<32x50xf32, #tpu.memory_space<vmem>>, vector<32x50xf32>
    tpu.vector_store %arg4[%c0_16, %c0_17], %20 {strides = array<i32>} : memref<32x50xf32, #tpu.memory_space<vmem>>, vector<32x50xf32>,
    return
  }
  func.func @transform_0(%arg0: i32) -> (i32, i32, i32) {
    %c0_i32 = arith.constant 0 : i32
    %c0_i32_0 = arith.constant 0 : i32
    %c0_i32_1 = arith.constant 0 : i32
    return %c0_i32, %arg0, %c0_i32_0 : i32, i32, i32
  }
  func.func @transform_1(%arg0: i32) -> (i32, i32) {
    %c0_i32 = arith.constant 0 : i32
    %c0_i32_0 = arith.constant 0 : i32
    %c0_i32_1 = arith.constant 0 : i32
    return %c0_i32, %c0_i32_0 : i32, i32
  }
  func.func @transform_2(%arg0: i32) -> (i32, i32) {
    %c0_i32 = arith.constant 0 : i32
    %c0_i32_0 = arith.constant 0 : i32
    %c0_i32_1 = arith.constant 0 : i32
    return %c0_i32, %c0_i32_0 : i32, i32
  }
  func.func @transform_3(%arg0: i32) -> (i32, i32) {
    %c0_i32 = arith.constant 0 : i32
    %c0_i32_0 = arith.constant 0 : i32
    return %arg0, %c0_i32 : i32, i32
  }
}

module attributes {stable_mosaic.version = 11 : i64} {
  func.func @_head_kernel(%arg0: i32, %arg1: memref<2x800xf32, #tpu.memory_space<vmem>>, %arg2: memref<800x500xf32, #tpu.memory_space<vmem>>, %arg3: memref<1x500xf32, #tpu.memory_space<vmem>>, %arg4: memref<500x128xf32, #tpu.memory_space<vmem>>, %arg5: memref<1x128xf32, #tpu.memory_space<vmem>>, %arg6: memref<2x128xf32, #tpu.memory_space<vmem>>) attributes {dimension_semantics = [#tpu.dimension_semantics<parallel>], iteration_bounds = array<i64: 1>, scalar_prefetch = 0 : i64, scratch_operands = 0 : i64, tpu.core_type = #tpu.core_type<tc>, window_params = [{transform_indices = @transform_0, window_bounds = array<i64: 2, 800>}, {pipeline_mode = #tpu.pipeline_mode<synchronous>, transform_indices = @transform_1, window_bounds = array<i64: 800, 500>}, {pipeline_mode = #tpu.pipeline_mode<synchronous>, transform_indices = @transform_2, window_bounds = array<i64: 1, 500>}, {pipeline_mode = #tpu.pipeline_mode<synchronous>, transform_indices = @transform_3, window_bounds = array<i64: 500, 128>}, {pipeline_mode = #tpu.pipeline_mode<synchronous>, transform_indices = @transform_4, window_bounds = array<i64: 1, 128>}, {transform_indices = @transform_5, window_bounds = array<i64: 2, 128>}]} {
    %c0 = arith.constant 0 : index
    %c0_0 = arith.constant 0 : index
    %0 = vector.load %arg1[%c0, %c0_0] : memref<2x800xf32, #tpu.memory_space<vmem>>, vector<2x800xf32>
    %c0_1 = arith.constant 0 : index
    %c0_2 = arith.constant 0 : index
    %1 = vector.load %arg2[%c0_1, %c0_2] : memref<800x500xf32, #tpu.memory_space<vmem>>, vector<800x500xf32>
    %cst = arith.constant dense<0.000000e+00> : vector<2x500xf32>
    %2 = tpu.matmul %0, %1, %cst {dimension_numbers = #tpu.dot_dimension_numbers<[1], [0], [0], [1], [0, 0, 1, 1], [], []>} : vector<2x800xf32>, vector<800x500xf32>, vector<2x500xf32> -> vector<2x500xf32>
    %c0_3 = arith.constant 0 : index
    %c0_4 = arith.constant 0 : index
    %3 = vector.load %arg3[%c0_3, %c0_4] : memref<1x500xf32, #tpu.memory_space<vmem>>, vector<1x500xf32>
    %4 = vector.broadcast %3 : vector<1x500xf32> to vector<2x500xf32>
    %5 = arith.addf %2, %4 : vector<2x500xf32>
    %cst_5 = arith.constant 0.000000e+00 : f32
    %6 = vector.broadcast %cst_5 : f32 to vector<2x500xf32>
    %7 = arith.maximumf %5, %6 : vector<2x500xf32>
    %c0_6 = arith.constant 0 : index
    %c0_7 = arith.constant 0 : index
    %8 = vector.load %arg4[%c0_6, %c0_7] : memref<500x128xf32, #tpu.memory_space<vmem>>, vector<500x128xf32>
    %cst_8 = arith.constant dense<0.000000e+00> : vector<2x128xf32>
    %9 = tpu.matmul %7, %8, %cst_8 {dimension_numbers = #tpu.dot_dimension_numbers<[1], [0], [0], [1], [0, 0, 1, 1], [], []>} : vector<2x500xf32>, vector<500x128xf32>, vector<2x128xf32> -> vector<2x128xf32>
    %c0_9 = arith.constant 0 : index
    %c0_10 = arith.constant 0 : index
    %10 = vector.load %arg5[%c0_9, %c0_10] : memref<1x128xf32, #tpu.memory_space<vmem>>, vector<1x128xf32>
    %11 = vector.broadcast %10 : vector<1x128xf32> to vector<2x128xf32>
    %12 = arith.addf %9, %11 : vector<2x128xf32>
    %cst_11 = arith.constant dense<0xFF800000> : vector<2xf32>
    %13 = vector.multi_reduction <maximumf>, %12, %cst_11 [1] : vector<2x128xf32> to vector<2xf32>
    %14 = vector.shape_cast %13 : vector<2xf32> to vector<2x1xf32>
    %15 = vector.broadcast %14 : vector<2x1xf32> to vector<2x128xf32>
    %16 = arith.subf %12, %15 : vector<2x128xf32>
    %17 = math.exp %16 : vector<2x128xf32>
    %cst_12 = arith.constant dense<0.000000e+00> : vector<2xf32>
    %18 = vector.multi_reduction <add>, %17, %cst_12 [1] : vector<2x128xf32> to vector<2xf32>
    %19 = vector.shape_cast %18 : vector<2xf32> to vector<2x1xf32>
    %20 = math.log %19 : vector<2x1xf32>
    %21 = vector.broadcast %20 : vector<2x1xf32> to vector<2x128xf32>
    %22 = arith.subf %16, %21 : vector<2x128xf32>
    %c0_13 = arith.constant 0 : index
    %c0_14 = arith.constant 0 : index
    %23 = vector.load %arg6[%c0_13, %c0_14] : memref<2x128xf32, #tpu.memory_space<vmem>>, vector<2x128xf32>
    tpu.vector_store %arg6[%c0_13, %c0_14], %22 {strides = array<i32>} : memref<2x128xf32, #tpu.memory_space<vmem>>, vector<2x128xf32>,
    return
  }
  func.func @transform_0(%arg0: i32) -> (i32, i32) {
    %c0_i32 = arith.constant 0 : i32
    %c0_i32_0 = arith.constant 0 : i32
    return %arg0, %c0_i32 : i32, i32
  }
  func.func @transform_1(%arg0: i32) -> (i32, i32) {
    %c0_i32 = arith.constant 0 : i32
    %c0_i32_0 = arith.constant 0 : i32
    %c0_i32_1 = arith.constant 0 : i32
    return %c0_i32, %c0_i32_0 : i32, i32
  }
  func.func @transform_2(%arg0: i32) -> (i32, i32) {
    %c0_i32 = arith.constant 0 : i32
    %c0_i32_0 = arith.constant 0 : i32
    %c0_i32_1 = arith.constant 0 : i32
    return %c0_i32, %c0_i32_0 : i32, i32
  }
  func.func @transform_3(%arg0: i32) -> (i32, i32) {
    %c0_i32 = arith.constant 0 : i32
    %c0_i32_0 = arith.constant 0 : i32
    %c0_i32_1 = arith.constant 0 : i32
    return %c0_i32, %c0_i32_0 : i32, i32
  }
  func.func @transform_4(%arg0: i32) -> (i32, i32) {
    %c0_i32 = arith.constant 0 : i32
    %c0_i32_0 = arith.constant 0 : i32
    %c0_i32_1 = arith.constant 0 : i32
    return %c0_i32, %c0_i32_0 : i32, i32
  }
  func.func @transform_5(%arg0: i32) -> (i32, i32) {
    %c0_i32 = arith.constant 0 : i32
    %c0_i32_0 = arith.constant 0 : i32
    return %arg0, %c0_i32 : i32, i32
  }
}

</mosaic_0001>

<llo_original>
// kernel: net_forward.3
$region0: #{net_forward.3}
  #allocation0 [shape = 'u32[]', space=smem, size = 0x4, offset = 0x4, fixed_abs, tag = 'smem constant byte address 0x4 - core index']
  #allocation1 [shape = 'u32[72,128]{1,0:T(1,128)}', space=vmem, size = 0x9000, scoped, tag = 'internal scratch']
  %s0 = inlined_call_operand.vmem [shape: f32[4,288,25], index: 0, kind: input, shape index: {}]
  %s1 = inlined_call_operand.vmem [shape: f32[25,20], index: 1, kind: input, shape index: {}]
  %s2 = inlined_call_operand.vmem [shape: f32[1,20], index: 2, kind: input, shape index: {}]
  %s3 = inlined_call_operand.vmem [shape: f32[288,20], index: 3, kind: output, shape index: {}]
  %s4 = sld [smem:[#allocation0]]
  $region22: #{net_forward.3} parent=0
    _
  %s6 = ssub.s32 1, %s4
  %s7 = scalar_select 0, %s6, %s4
  // Predicated region
  $region2: #{net_forward.3} parent=0 // pred_check
    _
  $region3: #{net_forward.3} parent=0 // pred_check_branch
    %9 = sbr.rel (0) target = $region5
  $region4: #{net_forward.3} parent=0 // pred_region
    _
  $region5: #{net_forward.3} parent=0 // pred_fallthru
    _
  // Predicated region
  $region6: #{net_forward.3} parent=0 // pred_check
    _
  $region7: #{net_forward.3} parent=0 // pred_check_branch
    %11 = sbr.rel (0) target = $region9
  $region8: #{net_forward.3} parent=0 // pred_region
    _
  $region9: #{net_forward.3} parent=0 // pred_fallthru
    _
  // Predicated region
  $region10: #{net_forward.3} parent=0 // pred_check
    _
  $region11: #{net_forward.3} parent=0 // pred_check_branch
    %13 = sbr.rel (0) target = $region13
  $region12: #{net_forward.3} parent=0 // pred_region
    _
  $region13: #{net_forward.3} parent=0 // pred_fallthru
    _
  %v14 = vld [vmem:[%s1] sm:$0xff]
  %v15 = vld [vmem:[%s1 + $0x8] sm:$0xff]
  %v16 = vld [vmem:[%s1 + $0x10] sm:$0xff]
  %v17 = vld [vmem:[%s1 + $0x18] sm:$0x1]
  %v18 = vld [vmem:[%s0] sm:$0xff]
  %v19 = vld [vmem:[%s0 + $0x8] sm:$0xff]
  %v20 = vld [vmem:[%s0 + $0x10] sm:$0xff]
  %v21 = vld [vmem:[%s0 + $0x18] sm:$0xff]
  %v22 = vld [vmem:[%s0 + $0x20] sm:$0xff]
  %v23 = vld [vmem:[%s0 + $0x28] sm:$0xff]
  %v24 = vld [vmem:[%s0 + $0x30] sm:$0xff]
  %v25 = vld [vmem:[%s0 + $0x38] sm:$0xff]
  %v26 = vld [vmem:[%s0 + $0x40] sm:$0xff]
  %v27 = vld [vmem:[%s0 + $0x48] sm:$0xff]
  %v28 = vld [vmem:[%s0 + $0x50] sm:$0xff]
  %v29 = vld [vmem:[%s0 + $0x58] sm:$0xff]
  %v30 = vld [vmem:[%s0 + $0x60] sm:$0xff]
  %v31 = vld [vmem:[%s0 + $0x68] sm:$0xff]
  %v32 = vld [vmem:[%s0 + $0x70] sm:$0xff]
  %v33 = vld [vmem:[%s0 + $0x78] sm:$0xff]
  %v34 = vld [vmem:[%s0 + $0x80] sm:$0xff]
  %v35 = vld [vmem:[%s0 + $0x88] sm:$0xff]
  %v36 = vld [vmem:[%s0 + $0x90] sm:$0xff]
  %v37 = vld [vmem:[%s0 + $0x98] sm:$0xff]
  %v38 = vld [vmem:[%s0 + $0xa0] sm:$0xff]
  %v39 = vld [vmem:[%s0 + $0xa8] sm:$0xff]
  %v40 = vld [vmem:[%s0 + $0xb0] sm:$0xff]
  %v41 = vld [vmem:[%s0 + $0xb8] sm:$0xff]
  %v42 = vld [vmem:[%s0 + $0xc0] sm:$0xff]
  %v43 = vld [vmem:[%s0 + $0xc8] sm:$0xff]
  %v44 = vld [vmem:[%s0 + $0xd0] sm:$0xff]
  %v45 = vld [vmem:[%s0 + $0xd8] sm:$0xff]
  %v46 = vld [vmem:[%s0 + $0xe0] sm:$0xff]
  %v47 = vld [vmem:[%s0 + $0xe8] sm:$0xff]
  %v48 = vld [vmem:[%s0 + $0xf0] sm:$0xff]
  %v49 = vld [vmem:[%s0 + $0xf8] sm:$0xff]
  %v50 = vld [vmem:[%s0 + $0x100] sm:$0xff]
  %v51 = vld [vmem:[%s0 + $0x108] sm:$0xff]
  %v52 = vld [vmem:[%s0 + $0x110] sm:$0xff]
  %v53 = vld [vmem:[%s0 + $0x118] sm:$0xff]
  %vm54 = vcmask 203776
  %v56 = vsel %vm54, %v18, 0
  %v59 = vsel %vm54, %v19, 0
  %v62 = vsel %vm54, %v20, 0
  %v65 = vsel %vm54, %v21, 0
  %v68 = vsel %vm54, %v22, 0
  %v71 = vsel %vm54, %v23, 0
  %v74 = vsel %vm54, %v24, 0
  %v77 = vsel %vm54, %v25, 0
  %v80 = vsel %vm54, %v26, 0
  %v83 = vsel %vm54, %v27, 0
  %v86 = vsel %vm54, %v28, 0
  %v89 = vsel %vm54, %v29, 0
  %v92 = vsel %vm54, %v30, 0
  %v95 = vsel %vm54, %v31, 0
  %v98 = vsel %vm54, %v32, 0
  %v101 = vsel %vm54, %v33, 0
  %v104 = vsel %vm54, %v34, 0
  %v107 = vsel %vm54, %v35, 0
  %v110 = vsel %vm54, %v36, 0
  %v113 = vsel %vm54, %v37, 0
  %v116 = vsel %vm54, %v38, 0
  %v119 = vsel %vm54, %v39, 0
  %v122 = vsel %vm54, %v40, 0
  %v125 = vsel %vm54, %v41, 0
  %v128 = vsel %vm54, %v42, 0
  %v131 = vsel %vm54, %v43, 0
  %v134 = vsel %vm54, %v44, 0
  %v137 = vsel %vm54, %v45, 0
  %v140 = vsel %vm54, %v46, 0
  %v143 = vsel %vm54, %v47, 0
  %v146 = vsel %vm54, %v48, 0
  %v149 = vsel %vm54, %v49, 0
  %v152 = vsel %vm54, %v50, 0
  %v155 = vsel %vm54, %v51, 0
  %v158 = vsel %vm54, %v52, 0
  %v161 = vsel %vm54, %v53, 0
  %vm163 = vcmask 1040384
  %v165 = vsel %vm163, %v17, 0
  %167 = vmatpush.msra.mxu0 0.0
  %168 = vmatpush.msra.mxu0 0.0
  %169 = vmatpush.msra.mxu0 0.0
  %170 = vmatpush.msra.mxu0 0.0
  %171 = vmatpush.msra.mxu0 0.0
  %172 = vmatpush.msra.mxu0 0.0
  %173 = vmatpush.msra.mxu0 0.0
  %174 = vmatpush.msra.mxu0 0.0
  %175 = vmatpush.msra.mxu0 0.0
  %176 = vmatpush.msra.mxu0 0.0
  %177 = vmatpush.msra.mxu0 0.0
  %178 = vmatpush.msra.mxu0 0.0
  %179 = vmatpush.msra.mxu0 %v165
  %180 = vmatpush.msra.mxu0 %v16
  %181 = vmatpush.msra.mxu0 %v15
  %182 = vmatpush.msra.mxu0 %v14
  %183 = vmatmul.f32.gmra.mxu0 %v56
  %v184 = vpop.f32.mrf.mxu0
  %v185 = vadd.f32 0.0, %v184
  %186 = vmatmul.f32.gmra.mxu0 %v59
  %v187 = vpop.f32.mrf.mxu0
  %v188 = vadd.f32 0.0, %v187
  %189 = vmatmul.f32.gmra.mxu0 %v62
  %v190 = vpop.f32.mrf.mxu0
  %v191 = vadd.f32 0.0, %v190
  %192 = vmatmul.f32.gmra.mxu0 %v65
  %v193 = vpop.f32.mrf.mxu0
  %v194 = vadd.f32 0.0, %v193
  %195 = vmatmul.f32.gmra.mxu0 %v68
  %v196 = vpop.f32.mrf.mxu0
  %v197 = vadd.f32 0.0, %v196
  %198 = vmatmul.f32.gmra.mxu0 %v71
  %v199 = vpop.f32.mrf.mxu0
  %v200 = vadd.f32 0.0, %v199
  %201 = vmatmul.f32.gmra.mxu0 %v74
  %v202 = vpop.f32.mrf.mxu0
  %v203 = vadd.f32 0.0, %v202
  %204 = vmatmul.f32.gmra.mxu0 %v77
  %v205 = vpop.f32.mrf.mxu0
  %v206 = vadd.f32 0.0, %v205
  %207 = vmatmul.f32.gmra.mxu0 %v80
  %v208 = vpop.f32.mrf.mxu0
  %v209 = vadd.f32 0.0, %v208
  %210 = vmatmul.f32.gmra.mxu0 %v83
  %v211 = vpop.f32.mrf.mxu0
  %v212 = vadd.f32 0.0, %v211
  %213 = vmatmul.f32.gmra.mxu0 %v86
  %v214 = vpop.f32.mrf.mxu0
  %v215 = vadd.f32 0.0, %v214
  %216 = vmatmul.f32.gmra.mxu0 %v89
  %v217 = vpop.f32.mrf.mxu0
  %v218 = vadd.f32 0.0, %v217
  %219 = vmatmul.f32.gmra.mxu0 %v92
  %v220 = vpop.f32.mrf.mxu0
  %v221 = vadd.f32 0.0, %v220
  %222 = vmatmul.f32.gmra.mxu0 %v95
  %v223 = vpop.f32.mrf.mxu0
  %v224 = vadd.f32 0.0, %v223
  %225 = vmatmul.f32.gmra.mxu0 %v98
  %v226 = vpop.f32.mrf.mxu0
  %v227 = vadd.f32 0.0, %v226
  %228 = vmatmul.f32.gmra.mxu0 %v101
  %v229 = vpop.f32.mrf.mxu0
  %v230 = vadd.f32 0.0, %v229
  %231 = vmatmul.f32.gmra.mxu0 %v104
  %v232 = vpop.f32.mrf.mxu0
  %v233 = vadd.f32 0.0, %v232
  %234 = vmatmul.f32.gmra.mxu0 %v107
  %v235 = vpop.f32.mrf.mxu0
  %v236 = vadd.f32 0.0, %v235
  %237 = vmatmul.f32.gmra.mxu0 %v110
  %v238 = vpop.f32.mrf.mxu0
  %v239 = vadd.f32 0.0, %v238
  %240 = vmatmul.f32.gmra.mxu0 %v113
  %v241 = vpop.f32.mrf.mxu0
  %v242 = vadd.f32 0.0, %v241
  %243 = vmatmul.f32.gmra.mxu0 %v116
  %v244 = vpop.f32.mrf.mxu0
  %v245 = vadd.f32 0.0, %v244
  %246 = vmatmul.f32.gmra.mxu0 %v119
  %v247 = vpop.f32.mrf.mxu0
  %v248 = vadd.f32 0.0, %v247
  %249 = vmatmul.f32.gmra.mxu0 %v122
  %v250 = vpop.f32.mrf.mxu0
  %v251 = vadd.f32 0.0, %v250
  %252 = vmatmul.f32.gmra.mxu0 %v125
  %v253 = vpop.f32.mrf.mxu0
  %v254 = vadd.f32 0.0, %v253
  %255 = vmatmul.f32.gmra.mxu0 %v128
  %v256 = vpop.f32.mrf.mxu0
  %v257 = vadd.f32 0.0, %v256
  %258 = vmatmul.f32.gmra.mxu0 %v131
  %v259 = vpop.f32.mrf.mxu0
  %v260 = vadd.f32 0.0, %v259
  %261 = vmatmul.f32.gmra.mxu0 %v134
  %v262 = vpop.f32.mrf.mxu0
  %v263 = vadd.f32 0.0, %v262
  %264 = vmatmul.f32.gmra.mxu0 %v137
  %v265 = vpop.f32.mrf.mxu0
  %v266 = vadd.f32 0.0, %v265
  %267 = vmatmul.f32.gmra.mxu0 %v140
  %v268 = vpop.f32.mrf.mxu0
  %v269 = vadd.f32 0.0, %v268
  %270 = vmatmul.f32.gmra.mxu0 %v143
  %v271 = vpop.f32.mrf.mxu0
  %v272 = vadd.f32 0.0, %v271
  %273 = vmatmul.f32.gmra.mxu0 %v146
  %v274 = vpop.f32.mrf.mxu0
  %v275 = vadd.f32 0.0, %v274
  %276 = vmatmul.f32.gmra.mxu0 %v149
  %v277 = vpop.f32.mrf.mxu0
  %v278 = vadd.f32 0.0, %v277
  %279 = vmatmul.f32.gmra.mxu0 %v152
  %v280 = vpop.f32.mrf.mxu0
  %v281 = vadd.f32 0.0, %v280
  %282 = vmatmul.f32.gmra.mxu0 %v155
  %v283 = vpop.f32.mrf.mxu0
  %v284 = vadd.f32 0.0, %v283
  %285 = vmatmul.f32.gmra.mxu0 %v158
  %v286 = vpop.f32.mrf.mxu0
  %v287 = vadd.f32 0.0, %v286
  %288 = vmatmul.f32.gmra.mxu0 %v161
  %v289 = vpop.f32.mrf.mxu0
  %v290 = vadd.f32 0.0, %v289
  %291 = vdwg.mxu0
  %s292 = scalar_lea.vmem %s0, 288
  %v293 = vld [vmem:[%s292] sm:$0xff]
  %v294 = vld [vmem:[%s292 + $0x8] sm:$0xff]
  %v295 = vld [vmem:[%s292 + $0x10] sm:$0xff]
  %v296 = vld [vmem:[%s292 + $0x18] sm:$0xff]
  %v297 = vld [vmem:[%s292 + $0x20] sm:$0xff]
  %v298 = vld [vmem:[%s292 + $0x28] sm:$0xff]
  %v299 = vld [vmem:[%s292 + $0x30] sm:$0xff]
  %v300 = vld [vmem:[%s292 + $0x38] sm:$0xff]
  %v301 = vld [vmem:[%s292 + $0x40] sm:$0xff]
  %v302 = vld [vmem:[%s292 + $0x48] sm:$0xff]
  %v303 = vld [vmem:[%s292 + $0x50] sm:$0xff]
  %v304 = vld [vmem:[%s292 + $0x58] sm:$0xff]
  %v305 = vld [vmem:[%s292 + $0x60] sm:$0xff]
  %v306 = vld [vmem:[%s292 + $0x68] sm:$0xff]
  %v307 = vld [vmem:[%s292 + $0x70] sm:$0xff]
  %v308 = vld [vmem:[%s292 + $0x78] sm:$0xff]
  %v309 = vld [vmem:[%s292 + $0x80] sm:$0xff]
  %v310 = vld [vmem:[%s292 + $0x88] sm:$0xff]
  %v311 = vld [vmem:[%s292 + $0x90] sm:$0xff]
  %v312 = vld [vmem:[%s292 + $0x98] sm:$0xff]
  %v313 = vld [vmem:[%s292 + $0xa0] sm:$0xff]
  %v314 = vld [vmem:[%s292 + $0xa8] sm:$0xff]
  %v315 = vld [vmem:[%s292 + $0xb0] sm:$0xff]
  %v316 = vld [vmem:[%s292 + $0xb8] sm:$0xff]
  %v317 = vld [vmem:[%s292 + $0xc0] sm:$0xff]
  %v318 = vld [vmem:[%s292 + $0xc8] sm:$0xff]
  %v319 = vld [vmem:[%s292 + $0xd0] sm:$0xff]
  %v320 = vld [vmem:[%s292 + $0xd8] sm:$0xff]
  %v321 = vld [vmem:[%s292 + $0xe0] sm:$0xff]
  %v322 = vld [vmem:[%s292 + $0xe8] sm:$0xff]
  %v323 = vld [vmem:[%s292 + $0xf0] sm:$0xff]
  %v324 = vld [vmem:[%s292 + $0xf8] sm:$0xff]
  %v325 = vld [vmem:[%s292 + $0x100] sm:$0xff]
  %v326 = vld [vmem:[%s292 + $0x108] sm:$0xff]
  %v327 = vld [vmem:[%s292 + $0x110] sm:$0xff]
  %v328 = vld [vmem:[%s292 + $0x118] sm:$0xff]
  %v330 = vsel %vm54, %v293, 0
  %v333 = vsel %vm54, %v294, 0
  %v336 = vsel %vm54, %v295, 0
  %v339 = vsel %vm54, %v296, 0
  %v342 = vsel %vm54, %v297, 0
  %v345 = vsel %vm54, %v298, 0
  %v348 = vsel %vm54, %v299, 0
  %v351 = vsel %vm54, %v300, 0
  %v354 = vsel %vm54, %v301, 0
  %v357 = vsel %vm54, %v302, 0
  %v360 = vsel %vm54, %v303, 0
  %v363 = vsel %vm54, %v304, 0
  %v366 = vsel %vm54, %v305, 0
  %v369 = vsel %vm54, %v306, 0
  %v372 = vsel %vm54, %v307, 0
  %v375 = vsel %vm54, %v308, 0
  %v378 = vsel %vm54, %v309, 0
  %v381 = vsel %vm54, %v310, 0
  %v384 = vsel %vm54, %v311, 0
  %v387 = vsel %vm54, %v312, 0
  %v390 = vsel %vm54, %v313, 0
  %v393 = vsel %vm54, %v314, 0
  %v396 = vsel %vm54, %v315, 0
  %v399 = vsel %vm54, %v316, 0
  %v402 = vsel %vm54, %v317, 0
  %v405 = vsel %vm54, %v318, 0
  %v408 = vsel %vm54, %v319, 0
  %v411 = vsel %vm54, %v320, 0
  %v414 = vsel %vm54, %v321, 0
  %v417 = vsel %vm54, %v322, 0
  %v420 = vsel %vm54, %v323, 0
  %v423 = vsel %vm54, %v324, 0
  %v426 = vsel %vm54, %v325, 0
  %v429 = vsel %vm54, %v326, 0
  %v432 = vsel %vm54, %v327, 0
  %v435 = vsel %vm54, %v328, 0
  %437 = vmatpush.msra.mxu0 0.0
  %438 = vmatpush.msra.mxu0 0.0
  %439 = vmatpush.msra.mxu0 0.0
  %440 = vmatpush.msra.mxu0 0.0
  %441 = vmatpush.msra.mxu0 0.0
  %442 = vmatpush.msra.mxu0 0.0
  %443 = vmatpush.msra.mxu0 0.0
  %444 = vmatpush.msra.mxu0 0.0
  %445 = vmatpush.msra.mxu0 0.0
  %446 = vmatpush.msra.mxu0 0.0
  %447 = vmatpush.msra.mxu0 0.0
  %448 = vmatpush.msra.mxu0 0.0
  %449 = vmatpush.msra.mxu0 %v165
  %450 = vmatpush.msra.mxu0 %v16
  %451 = vmatpush.msra.mxu0 %v15
  %452 = vmatpush.msra.mxu0 %v14
  %453 = vmatmul.f32.gmra.mxu0 %v330
  %v454 = vpop.f32.mrf.mxu0
  %v455 = vadd.f32 0.0, %v454
  %456 = vmatmul.f32.gmra.mxu0 %v333
  %v457 = vpop.f32.mrf.mxu0
  %v458 = vadd.f32 0.0, %v457
  %459 = vmatmul.f32.gmra.mxu0 %v336
  %v460 = vpop.f32.mrf.mxu0
  %v461 = vadd.f32 0.0, %v460
  %462 = vmatmul.f32.gmra.mxu0 %v339
  %v463 = vpop.f32.mrf.mxu0
  %v464 = vadd.f32 0.0, %v463
  %465 = vmatmul.f32.gmra.mxu0 %v342
  %v466 = vpop.f32.mrf.mxu0
  %v467 = vadd.f32 0.0, %v466
  %468 = vmatmul.f32.gmra.mxu0 %v345
  %v469 = vpop.f32.mrf.mxu0
  %v470 = vadd.f32 0.0, %v469
  %471 = vmatmul.f32.gmra.mxu0 %v348
  %v472 = vpop.f32.mrf.mxu0
  %v473 = vadd.f32 0.0, %v472
  %474 = vmatmul.f32.gmra.mxu0 %v351
  %v475 = vpop.f32.mrf.mxu0
  %v476 = vadd.f32 0.0, %v475
  %477 = vmatmul.f32.gmra.mxu0 %v354
  %v478 = vpop.f32.mrf.mxu0
  %v479 = vadd.f32 0.0, %v478
  %480 = vmatmul.f32.gmra.mxu0 %v357
  %v481 = vpop.f32.mrf.mxu0
  %v482 = vadd.f32 0.0, %v481
  %483 = vmatmul.f32.gmra.mxu0 %v360
  %v484 = vpop.f32.mrf.mxu0
  %v485 = vadd.f32 0.0, %v484
  %486 = vmatmul.f32.gmra.mxu0 %v363
  %v487 = vpop.f32.mrf.mxu0
  %v488 = vadd.f32 0.0, %v487
  %489 = vmatmul.f32.gmra.mxu0 %v366
  %v490 = vpop.f32.mrf.mxu0
  %v491 = vadd.f32 0.0, %v490
  %492 = vmatmul.f32.gmra.mxu0 %v369
  %v493 = vpop.f32.mrf.mxu0
  %v494 = vadd.f32 0.0, %v493
  %495 = vmatmul.f32.gmra.mxu0 %v372
  %v496 = vpop.f32.mrf.mxu0
  %v497 = vadd.f32 0.0, %v496
  %498 = vmatmul.f32.gmra.mxu0 %v375
  %v499 = vpop.f32.mrf.mxu0
  %v500 = vadd.f32 0.0, %v499
  %501 = vmatmul.f32.gmra.mxu0 %v378
  %v502 = vpop.f32.mrf.mxu0
  %v503 = vadd.f32 0.0, %v502
  %504 = vmatmul.f32.gmra.mxu0 %v381
  %v505 = vpop.f32.mrf.mxu0
  %v506 = vadd.f32 0.0, %v505
  %507 = vmatmul.f32.gmra.mxu0 %v384
  %v508 = vpop.f32.mrf.mxu0
  %v509 = vadd.f32 0.0, %v508
  %510 = vmatmul.f32.gmra.mxu0 %v387
  %v511 = vpop.f32.mrf.mxu0
  %v512 = vadd.f32 0.0, %v511
  %513 = vmatmul.f32.gmra.mxu0 %v390
  %v514 = vpop.f32.mrf.mxu0
  %v515 = vadd.f32 0.0, %v514
  %516 = vmatmul.f32.gmra.mxu0 %v393
  %v517 = vpop.f32.mrf.mxu0
  %v518 = vadd.f32 0.0, %v517
  %519 = vmatmul.f32.gmra.mxu0 %v396
  %v520 = vpop.f32.mrf.mxu0
  %v521 = vadd.f32 0.0, %v520
  %522 = vmatmul.f32.gmra.mxu0 %v399
  %v523 = vpop.f32.mrf.mxu0
  %v524 = vadd.f32 0.0, %v523
  %525 = vmatmul.f32.gmra.mxu0 %v402
  %v526 = vpop.f32.mrf.mxu0
  %v527 = vadd.f32 0.0, %v526
  %528 = vmatmul.f32.gmra.mxu0 %v405
  %v529 = vpop.f32.mrf.mxu0
  %v530 = vadd.f32 0.0, %v529
  %531 = vmatmul.f32.gmra.mxu0 %v408
  %v532 = vpop.f32.mrf.mxu0
  %v533 = vadd.f32 0.0, %v532
  %534 = vmatmul.f32.gmra.mxu0 %v411
  %v535 = vpop.f32.mrf.mxu0
  %v536 = vadd.f32 0.0, %v535
  %537 = vmatmul.f32.gmra.mxu0 %v414
  %v538 = vpop.f32.mrf.mxu0
  %v539 = vadd.f32 0.0, %v538
  %540 = vmatmul.f32.gmra.mxu0 %v417
  %v541 = vpop.f32.mrf.mxu0
  %v542 = vadd.f32 0.0, %v541
  %543 = vmatmul.f32.gmra.mxu0 %v420
  %v544 = vpop.f32.mrf.mxu0
  %v545 = vadd.f32 0.0, %v544
  %546 = vmatmul.f32.gmra.mxu0 %v423
  %v547 = vpop.f32.mrf.mxu0
  %v548 = vadd.f32 0.0, %v547
  %549 = vmatmul.f32.gmra.mxu0 %v426
  %v550 = vpop.f32.mrf.mxu0
  %v551 = vadd.f32 0.0, %v550
  %552 = vmatmul.f32.gmra.mxu0 %v429
  %v553 = vpop.f32.mrf.mxu0
  %v554 = vadd.f32 0.0, %v553
  %555 = vmatmul.f32.gmra.mxu0 %v432
  %v556 = vpop.f32.mrf.mxu0
  %v557 = vadd.f32 0.0, %v556
  %558 = vmatmul.f32.gmra.mxu0 %v435
  %v559 = vpop.f32.mrf.mxu0
  %v560 = vadd.f32 0.0, %v559
  %561 = vdwg.mxu0
  %v562 = vmax.f32 %v185, %v455
  %v563 = vmax.f32 %v188, %v458
  %v564 = vmax.f32 %v191, %v461
  %v565 = vmax.f32 %v194, %v464
  %v566 = vmax.f32 %v197, %v467
  %v567 = vmax.f32 %v200, %v470
  %v568 = vmax.f32 %v203, %v473
  %v569 = vmax.f32 %v206, %v476
  %v570 = vmax.f32 %v209, %v479
  %v571 = vmax.f32 %v212, %v482
  %v572 = vmax.f32 %v215, %v485
  %v573 = vmax.f32 %v218, %v488
  %v574 = vmax.f32 %v221, %v491
  %v575 = vmax.f32 %v224, %v494
  %v576 = vmax.f32 %v227, %v497
  %v577 = vmax.f32 %v230, %v500
  %v578 = vmax.f32 %v233, %v503
  %v579 = vmax.f32 %v236, %v506
  %v580 = vmax.f32 %v239, %v509
  %v581 = vmax.f32 %v242, %v512
  %v582 = vmax.f32 %v245, %v515
  %v583 = vmax.f32 %v248, %v518
  %v584 = vmax.f32 %v251, %v521
  %v585 = vmax.f32 %v254, %v524
  %v586 = vmax.f32 %v257, %v527
  %v587 = vmax.f32 %v260, %v530
  %v588 = vmax.f32 %v263, %v533
  %v589 = vmax.f32 %v266, %v536
  %v590 = vmax.f32 %v269, %v539
  %v591 = vmax.f32 %v272, %v542
  %v592 = vmax.f32 %v275, %v545
  %v593 = vmax.f32 %v278, %v548
  %v594 = vmax.f32 %v281, %v551
  %v595 = vmax.f32 %v284, %v554
  %v596 = vmax.f32 %v287, %v557
  %v597 = vmax.f32 %v290, %v560
  %s598 = scalar_lea.vmem %s0, 576
  %v599 = vld [vmem:[%s598] sm:$0xff]
  %v600 = vld [vmem:[%s598 + $0x8] sm:$0xff]
  %v601 = vld [vmem:[%s598 + $0x10] sm:$0xff]
  %v602 = vld [vmem:[%s598 + $0x18] sm:$0xff]
  %v603 = vld [vmem:[%s598 + $0x20] sm:$0xff]
  %v604 = vld [vmem:[%s598 + $0x28] sm:$0xff]
  %v605 = vld [vmem:[%s598 + $0x30] sm:$0xff]
  %v606 = vld [vmem:[%s598 + $0x38] sm:$0xff]
  %v607 = vld [vmem:[%s598 + $0x40] sm:$0xff]
  %v608 = vld [vmem:[%s598 + $0x48] sm:$0xff]
  %v609 = vld [vmem:[%s598 + $0x50] sm:$0xff]
  %v610 = vld [vmem:[%s598 + $0x58] sm:$0xff]
  %v611 = vld [vmem:[%s598 + $0x60] sm:$0xff]
  %v612 = vld [vmem:[%s598 + $0x68] sm:$0xff]
  %v613 = vld [vmem:[%s598 + $0x70] sm:$0xff]
  %v614 = vld [vmem:[%s598 + $0x78] sm:$0xff]
  %v615 = vld [vmem:[%s598 + $0x80] sm:$0xff]
  %v616 = vld [vmem:[%s598 + $0x88] sm:$0xff]
  %v617 = vld [vmem:[%s598 + $0x90] sm:$0xff]
  %v618 = vld [vmem:[%s598 + $0x98] sm:$0xff]
  %v619 = vld [vmem:[%s598 + $0xa0] sm:$0xff]
  %v620 = vld [vmem:[%s598 + $0xa8] sm:$0xff]
  %v621 = vld [vmem:[%s598 + $0xb0] sm:$0xff]
  %v622 = vld [vmem:[%s598 + $0xb8] sm:$0xff]
  %v623 = vld [vmem:[%s598 + $0xc0] sm:$0xff]
  %v624 = vld [vmem:[%s598 + $0xc8] sm:$0xff]
  %v625 = vld [vmem:[%s598 + $0xd0] sm:$0xff]
  %v626 = vld [vmem:[%s598 + $0xd8] sm:$0xff]
  %v627 = vld [vmem:[%s598 + $0xe0] sm:$0xff]
  %v628 = vld [vmem:[%s598 + $0xe8] sm:$0xff]
  %v629 = vld [vmem:[%s598 + $0xf0] sm:$0xff]
  %v630 = vld [vmem:[%s598 + $0xf8] sm:$0xff]
  %v631 = vld [vmem:[%s598 + $0x100] sm:$0xff]
  %v632 = vld [vmem:[%s598 + $0x108] sm:$0xff]
  %v633 = vld [vmem:[%s598 + $0x110] sm:$0xff]
  %v634 = vld [vmem:[%s598 + $0x118] sm:$0xff]
  %v636 = vsel %vm54, %v599, 0
  %v639 = vsel %vm54, %v600, 0
  %v642 = vsel %vm54, %v601, 0
  %v645 = vsel %vm54, %v602, 0
  %v648 = vsel %vm54, %v603, 0
  %v651 = vsel %vm54, %v604, 0
  %v654 = vsel %vm54, %v605, 0
  %v657 = vsel %vm54, %v606, 0
  %v660 = vsel %vm54, %v607, 0
  %v663 = vsel %vm54, %v608, 0
  %v666 = vsel %vm54, %v609, 0
  %v669 = vsel %vm54, %v610, 0
  %v672 = vsel %vm54, %v611, 0
  %v675 = vsel %vm54, %v612, 0
  %v678 = vsel %vm54, %v613, 0
  %v681 = vsel %vm54, %v614, 0
  %v684 = vsel %vm54, %v615, 0
  %v687 = vsel %vm54, %v616, 0
  %v690 = vsel %vm54, %v617, 0
  %v693 = vsel %vm54, %v618, 0
  %v696 = vsel %vm54, %v619, 0
  %v699 = vsel %vm54, %v620, 0
  %v702 = vsel %vm54, %v621, 0
  %v705 = vsel %vm54, %v622, 0
  %v708 = vsel %vm54, %v623, 0
  %v711 = vsel %vm54, %v624, 0
  %v714 = vsel %vm54, %v625, 0
  %v717 = vsel %vm54, %v626, 0
  %v720 = vsel %vm54, %v627, 0
  %v723 = vsel %vm54, %v628, 0
  %v726 = vsel %vm54, %v629, 0
  %v729 = vsel %vm54, %v630, 0
  %v732 = vsel %vm54, %v631, 0
  %v735 = vsel %vm54, %v632, 0
  %v738 = vsel %vm54, %v633, 0
  %v741 = vsel %vm54, %v634, 0
  %743 = vmatpush.msra.mxu0 0.0
  %744 = vmatpush.msra.mxu0 0.0
  %745 = vmatpush.msra.mxu0 0.0
  %746 = vmatpush.msra.mxu0 0.0
  %747 = vmatpush.msra.mxu0 0.0
  %748 = vmatpush.msra.mxu0 0.0
  %749 = vmatpush.msra.mxu0 0.0
  %750 = vmatpush.msra.mxu0 0.0
  %751 = vmatpush.msra.mxu0 0.0
  %752 = vmatpush.msra.mxu0 0.0
  %753 = vmatpush.msra.mxu0 0.0
  %754 = vmatpush.msra.mxu0 0.0
  %755 = vmatpush.msra.mxu0 %v165
  %756 = vmatpush.msra.mxu0 %v16
  %757 = vmatpush.msra.mxu0 %v15
  %758 = vmatpush.msra.mxu0 %v14
  %759 = vmatmul.f32.gmra.mxu0 %v636
  %v760 = vpop.f32.mrf.mxu0
  %v761 = vadd.f32 0.0, %v760
  %762 = vmatmul.f32.gmra.mxu0 %v639
  %v763 = vpop.f32.mrf.mxu0
  %v764 = vadd.f32 0.0, %v763
  %765 = vmatmul.f32.gmra.mxu0 %v642
  %v766 = vpop.f32.mrf.mxu0
  %v767 = vadd.f32 0.0, %v766
  %768 = vmatmul.f32.gmra.mxu0 %v645
  %v769 = vpop.f32.mrf.mxu0
  %v770 = vadd.f32 0.0, %v769
  %771 = vmatmul.f32.gmra.mxu0 %v648
  %v772 = vpop.f32.mrf.mxu0
  %v773 = vadd.f32 0.0, %v772
  %774 = vmatmul.f32.gmra.mxu0 %v651
  %v775 = vpop.f32.mrf.mxu0
  %v776 = vadd.f32 0.0, %v775
  %777 = vmatmul.f32.gmra.mxu0 %v654
  %v778 = vpop.f32.mrf.mxu0
  %v779 = vadd.f32 0.0, %v778
  %780 = vmatmul.f32.gmra.mxu0 %v657
  %v781 = vpop.f32.mrf.mxu0
  %v782 = vadd.f32 0.0, %v781
  %783 = vmatmul.f32.gmra.mxu0 %v660
  %v784 = vpop.f32.mrf.mxu0
  %v785 = vadd.f32 0.0, %v784
  %786 = vmatmul.f32.gmra.mxu0 %v663
  %v787 = vpop.f32.mrf.mxu0
  %v788 = vadd.f32 0.0, %v787
  %789 = vmatmul.f32.gmra.mxu0 %v666
  %v790 = vpop.f32.mrf.mxu0
  %v791 = vadd.f32 0.0, %v790
  %792 = vmatmul.f32.gmra.mxu0 %v669
  %v793 = vpop.f32.mrf.mxu0
  %v794 = vadd.f32 0.0, %v793
  %795 = vmatmul.f32.gmra.mxu0 %v672
  %v796 = vpop.f32.mrf.mxu0
  %v797 = vadd.f32 0.0, %v796
  %798 = vmatmul.f32.gmra.mxu0 %v675
  %v799 = vpop.f32.mrf.mxu0
  %v800 = vadd.f32 0.0, %v799
  %801 = vmatmul.f32.gmra.mxu0 %v678
  %v802 = vpop.f32.mrf.mxu0
  %v803 = vadd.f32 0.0, %v802
  %804 = vmatmul.f32.gmra.mxu0 %v681
  %v805 = vpop.f32.mrf.mxu0
  %v806 = vadd.f32 0.0, %v805
  %807 = vmatmul.f32.gmra.mxu0 %v684
  %v808 = vpop.f32.mrf.mxu0
  %v809 = vadd.f32 0.0, %v808
  %810 = vmatmul.f32.gmra.mxu0 %v687
  %v811 = vpop.f32.mrf.mxu0
  %v812 = vadd.f32 0.0, %v811
  %813 = vmatmul.f32.gmra.mxu0 %v690
  %v814 = vpop.f32.mrf.mxu0
  %v815 = vadd.f32 0.0, %v814
  %816 = vmatmul.f32.gmra.mxu0 %v693
  %v817 = vpop.f32.mrf.mxu0
  %v818 = vadd.f32 0.0, %v817
  %819 = vmatmul.f32.gmra.mxu0 %v696
  %v820 = vpop.f32.mrf.mxu0
  %v821 = vadd.f32 0.0, %v820
  %822 = vmatmul.f32.gmra.mxu0 %v699
  %v823 = vpop.f32.mrf.mxu0
  %v824 = vadd.f32 0.0, %v823
  %825 = vmatmul.f32.gmra.mxu0 %v702
  %v826 = vpop.f32.mrf.mxu0
  %v827 = vadd.f32 0.0, %v826
  %828 = vmatmul.f32.gmra.mxu0 %v705
  %v829 = vpop.f32.mrf.mxu0
  %v830 = vadd.f32 0.0, %v829
  %831 = vmatmul.f32.gmra.mxu0 %v708
  %v832 = vpop.f32.mrf.mxu0
  %v833 = vadd.f32 0.0, %v832
  %834 = vmatmul.f32.gmra.mxu0 %v711
  %v835 = vpop.f32.mrf.mxu0
  %v836 = vadd.f32 0.0, %v835
  %837 = vmatmul.f32.gmra.mxu0 %v714
  %v838 = vpop.f32.mrf.mxu0
  %v839 = vadd.f32 0.0, %v838
  %840 = vmatmul.f32.gmra.mxu0 %v717
  %v841 = vpop.f32.mrf.mxu0
  %v842 = vadd.f32 0.0, %v841
  %843 = vmatmul.f32.gmra.mxu0 %v720
  %v844 = vpop.f32.mrf.mxu0
  %v845 = vadd.f32 0.0, %v844
  %846 = vmatmul.f32.gmra.mxu0 %v723
  %v847 = vpop.f32.mrf.mxu0
  %v848 = vadd.f32 0.0, %v847
  %849 = vmatmul.f32.gmra.mxu0 %v726
  %v850 = vpop.f32.mrf.mxu0
  %v851 = vadd.f32 0.0, %v850
  %852 = vmatmul.f32.gmra.mxu0 %v729
  %v853 = vpop.f32.mrf.mxu0
  %v854 = vadd.f32 0.0, %v853
  %855 = vmatmul.f32.gmra.mxu0 %v732
  %v856 = vpop.f32.mrf.mxu0
  %v857 = vadd.f32 0.0, %v856
  %858 = vmatmul.f32.gmra.mxu0 %v735
  %v859 = vpop.f32.mrf.mxu0
  %v860 = vadd.f32 0.0, %v859
  %861 = vmatmul.f32.gmra.mxu0 %v738
  %v862 = vpop.f32.mrf.mxu0
  %v863 = vadd.f32 0.0, %v862
  %864 = vmatmul.f32.gmra.mxu0 %v741
  %v865 = vpop.f32.mrf.mxu0
  %v866 = vadd.f32 0.0, %v865
  %867 = vdwg.mxu0
  %v868 = vmax.f32 %v562, %v761
  %v869 = vmax.f32 %v563, %v764
  %v870 = vmax.f32 %v564, %v767
  %v871 = vmax.f32 %v565, %v770
  %v872 = vmax.f32 %v566, %v773
  %v873 = vmax.f32 %v567, %v776
  %v874 = vmax.f32 %v568, %v779
  %v875 = vmax.f32 %v569, %v782
  %v876 = vmax.f32 %v570, %v785
  %v877 = vmax.f32 %v571, %v788
  %v878 = vmax.f32 %v572, %v791
  %v879 = vmax.f32 %v573, %v794
  %v880 = vmax.f32 %v574, %v797
  %v881 = vmax.f32 %v575, %v800
  %v882 = vmax.f32 %v576, %v803
  %v883 = vmax.f32 %v577, %v806
  %v884 = vmax.f32 %v578, %v809
  %v885 = vmax.f32 %v579, %v812
  %v886 = vmax.f32 %v580, %v815
  %v887 = vmax.f32 %v581, %v818
  %v888 = vmax.f32 %v582, %v821
  %v889 = vmax.f32 %v583, %v824
  %v890 = vmax.f32 %v584, %v827
  %v891 = vmax.f32 %v585, %v830
  %v892 = vmax.f32 %v586, %v833
  %v893 = vmax.f32 %v587, %v836
  %v894 = vmax.f32 %v588, %v839
  %v895 = vmax.f32 %v589, %v842
  %v896 = vmax.f32 %v590, %v845
  %v897 = vmax.f32 %v591, %v848
  %v898 = vmax.f32 %v592, %v851
  %v899 = vmax.f32 %v593, %v854
  %v900 = vmax.f32 %v594, %v857
  %v901 = vmax.f32 %v595, %v860
  %v902 = vmax.f32 %v596, %v863
  %v903 = vmax.f32 %v597, %v866
  %s904 = scalar_lea.vmem %s0, 864
  %v905 = vld [vmem:[%s904] sm:$0xff]
  %v906 = vld [vmem:[%s904 + $0x8] sm:$0xff]
  %v907 = vld [vmem:[%s904 + $0x10] sm:$0xff]
  %v908 = vld [vmem:[%s904 + $0x18] sm:$0xff]
  %v909 = vld [vmem:[%s904 + $0x20] sm:$0xff]
  %v910 = vld [vmem:[%s904 + $0x28] sm:$0xff]
  %v911 = vld [vmem:[%s904 + $0x30] sm:$0xff]
  %v912 = vld [vmem:[%s904 + $0x38] sm:$0xff]
  %v913 = vld [vmem:[%s904 + $0x40] sm:$0xff]
  %v914 = vld [vmem:[%s904 + $0x48] sm:$0xff]
  %v915 = vld [vmem:[%s904 + $0x50] sm:$0xff]
  %v916 = vld [vmem:[%s904 + $0x58] sm:$0xff]
  %v917 = vld [vmem:[%s904 + $0x60] sm:$0xff]
  %v918 = vld [vmem:[%s904 + $0x68] sm:$0xff]
  %v919 = vld [vmem:[%s904 + $0x70] sm:$0xff]
  %v920 = vld [vmem:[%s904 + $0x78] sm:$0xff]
  %v921 = vld [vmem:[%s904 + $0x80] sm:$0xff]
  %v922 = vld [vmem:[%s904 + $0x88] sm:$0xff]
  %v923 = vld [vmem:[%s904 + $0x90] sm:$0xff]
  %v924 = vld [vmem:[%s904 + $0x98] sm:$0xff]
  %v925 = vld [vmem:[%s904 + $0xa0] sm:$0xff]
  %v926 = vld [vmem:[%s904 + $0xa8] sm:$0xff]
  %v927 = vld [vmem:[%s904 + $0xb0] sm:$0xff]
  %v928 = vld [vmem:[%s904 + $0xb8] sm:$0xff]
  %v929 = vld [vmem:[%s904 + $0xc0] sm:$0xff]
  %v930 = vld [vmem:[%s904 + $0xc8] sm:$0xff]
  %v931 = vld [vmem:[%s904 + $0xd0] sm:$0xff]
  %v932 = vld [vmem:[%s904 + $0xd8] sm:$0xff]
  %v933 = vld [vmem:[%s904 + $0xe0] sm:$0xff]
  %v934 = vld [vmem:[%s904 + $0xe8] sm:$0xff]
  %v935 = vld [vmem:[%s904 + $0xf0] sm:$0xff]
  %v936 = vld [vmem:[%s904 + $0xf8] sm:$0xff]
  %v937 = vld [vmem:[%s904 + $0x100] sm:$0xff]
  %v938 = vld [vmem:[%s904 + $0x108] sm:$0xff]
  %v939 = vld [vmem:[%s904 + $0x110] sm:$0xff]
  %v940 = vld [vmem:[%s904 + $0x118] sm:$0xff]
  %v942 = vsel %vm54, %v905, 0
  %v945 = vsel %vm54, %v906, 0
  %v948 = vsel %vm54, %v907, 0
  %v951 = vsel %vm54, %v908, 0
  %v954 = vsel %vm54, %v909, 0
  %v957 = vsel %vm54, %v910, 0
  %v960 = vsel %vm54, %v911, 0
  %v963 = vsel %vm54, %v912, 0
  %v966 = vsel %vm54, %v913, 0
  %v969 = vsel %vm54, %v914, 0
  %v972 = vsel %vm54, %v915, 0
  %v975 = vsel %vm54, %v916, 0
  %v978 = vsel %vm54, %v917, 0
  %v981 = vsel %vm54, %v918, 0
  %v984 = vsel %vm54, %v919, 0
  %v987 = vsel %vm54, %v920, 0
  %v990 = vsel %vm54, %v921, 0
  %v993 = vsel %vm54, %v922, 0
  %v996 = vsel %vm54, %v923, 0
  %v999 = vsel %vm54, %v924, 0
  %v1002 = vsel %vm54, %v925, 0
  %v1005 = vsel %vm54, %v926, 0
  %v1008 = vsel %vm54, %v927, 0
  %v1011 = vsel %vm54, %v928, 0
  %v1014 = vsel %vm54, %v929, 0
  %v1017 = vsel %vm54, %v930, 0
  %v1020 = vsel %vm54, %v931, 0
  %v1023 = vsel %vm54, %v932, 0
  %v1026 = vsel %vm54, %v933, 0
  %v1029 = vsel %vm54, %v934, 0
  %v1032 = vsel %vm54, %v935, 0
  %v1035 = vsel %vm54, %v936, 0
  %v1038 = vsel %vm54, %v937, 0
  %v1041 = vsel %vm54, %v938, 0
  %v1044 = vsel %vm54, %v939, 0
  %v1047 = vsel %vm54, %v940, 0
  %1049 = vmatpush.msra.mxu0 0.0
  %1050 = vmatpush.msra.mxu0 0.0
  %1051 = vmatpush.msra.mxu0 0.0
  %1052 = vmatpush.msra.mxu0 0.0
  %1053 = vmatpush.msra.mxu0 0.0
  %1054 = vmatpush.msra.mxu0 0.0
  %1055 = vmatpush.msra.mxu0 0.0
  %1056 = vmatpush.msra.mxu0 0.0
  %1057 = vmatpush.msra.mxu0 0.0
  %1058 = vmatpush.msra.mxu0 0.0
  %1059 = vmatpush.msra.mxu0 0.0
  %1060 = vmatpush.msra.mxu0 0.0
  %1061 = vmatpush.msra.mxu0 %v165
  %1062 = vmatpush.msra.mxu0 %v16
  %1063 = vmatpush.msra.mxu0 %v15
  %1064 = vmatpush.msra.mxu0 %v14
  %1065 = vmatmul.f32.gmra.mxu0 %v942
  %v1066 = vpop.f32.mrf.mxu0
  %v1067 = vadd.f32 0.0, %v1066
  %1068 = vmatmul.f32.gmra.mxu0 %v945
  %v1069 = vpop.f32.mrf.mxu0
  %v1070 = vadd.f32 0.0, %v1069
  %1071 = vmatmul.f32.gmra.mxu0 %v948
  %v1072 = vpop.f32.mrf.mxu0
  %v1073 = vadd.f32 0.0, %v1072
  %1074 = vmatmul.f32.gmra.mxu0 %v951
  %v1075 = vpop.f32.mrf.mxu0
  %v1076 = vadd.f32 0.0, %v1075
  %1077 = vmatmul.f32.gmra.mxu0 %v954
  %v1078 = vpop.f32.mrf.mxu0
  %v1079 = vadd.f32 0.0, %v1078
  %1080 = vmatmul.f32.gmra.mxu0 %v957
  %v1081 = vpop.f32.mrf.mxu0
  %v1082 = vadd.f32 0.0, %v1081
  %1083 = vmatmul.f32.gmra.mxu0 %v960
  %v1084 = vpop.f32.mrf.mxu0
  %v1085 = vadd.f32 0.0, %v1084
  %1086 = vmatmul.f32.gmra.mxu0 %v963
  %v1087 = vpop.f32.mrf.mxu0
  %v1088 = vadd.f32 0.0, %v1087
  %1089 = vmatmul.f32.gmra.mxu0 %v966
  %v1090 = vpop.f32.mrf.mxu0
  %v1091 = vadd.f32 0.0, %v1090
  %1092 = vmatmul.f32.gmra.mxu0 %v969
  %v1093 = vpop.f32.mrf.mxu0
  %v1094 = vadd.f32 0.0, %v1093
  %1095 = vmatmul.f32.gmra.mxu0 %v972
  %v1096 = vpop.f32.mrf.mxu0
  %v1097 = vadd.f32 0.0, %v1096
  %1098 = vmatmul.f32.gmra.mxu0 %v975
  %v1099 = vpop.f32.mrf.mxu0
  %v1100 = vadd.f32 0.0, %v1099
  %1101 = vmatmul.f32.gmra.mxu0 %v978
  %v1102 = vpop.f32.mrf.mxu0
  %v1103 = vadd.f32 0.0, %v1102
  %1104 = vmatmul.f32.gmra.mxu0 %v981
  %v1105 = vpop.f32.mrf.mxu0
  %v1106 = vadd.f32 0.0, %v1105
  %1107 = vmatmul.f32.gmra.mxu0 %v984
  %v1108 = vpop.f32.mrf.mxu0
  %v1109 = vadd.f32 0.0, %v1108
  %1110 = vmatmul.f32.gmra.mxu0 %v987
  %v1111 = vpop.f32.mrf.mxu0
  %v1112 = vadd.f32 0.0, %v1111
  %1113 = vmatmul.f32.gmra.mxu0 %v990
  %v1114 = vpop.f32.mrf.mxu0
  %v1115 = vadd.f32 0.0, %v1114
  %1116 = vmatmul.f32.gmra.mxu0 %v993
  %v1117 = vpop.f32.mrf.mxu0
  %v1118 = vadd.f32 0.0, %v1117
  %1119 = vmatmul.f32.gmra.mxu0 %v996
  %v1120 = vpop.f32.mrf.mxu0
  %v1121 = vadd.f32 0.0, %v1120
  %1122 = vmatmul.f32.gmra.mxu0 %v999
  %v1123 = vpop.f32.mrf.mxu0
  %v1124 = vadd.f32 0.0, %v1123
  %1125 = vmatmul.f32.gmra.mxu0 %v1002
  %v1126 = vpop.f32.mrf.mxu0
  %v1127 = vadd.f32 0.0, %v1126
  %1128 = vmatmul.f32.gmra.mxu0 %v1005
  %v1129 = vpop.f32.mrf.mxu0
  %v1130 = vadd.f32 0.0, %v1129
  %1131 = vmatmul.f32.gmra.mxu0 %v1008
  %v1132 = vpop.f32.mrf.mxu0
  %v1133 = vadd.f32 0.0, %v1132
  %1134 = vmatmul.f32.gmra.mxu0 %v1011
  %v1135 = vpop.f32.mrf.mxu0
  %v1136 = vadd.f32 0.0, %v1135
  %1137 = vmatmul.f32.gmra.mxu0 %v1014
  %v1138 = vpop.f32.mrf.mxu0
  %v1139 = vadd.f32 0.0, %v1138
  %1140 = vmatmul.f32.gmra.mxu0 %v1017
  %v1141 = vpop.f32.mrf.mxu0
  %v1142 = vadd.f32 0.0, %v1141
  %1143 = vmatmul.f32.gmra.mxu0 %v1020
  %v1144 = vpop.f32.mrf.mxu0
  %v1145 = vadd.f32 0.0, %v1144
  %1146 = vmatmul.f32.gmra.mxu0 %v1023
  %v1147 = vpop.f32.mrf.mxu0
  %v1148 = vadd.f32 0.0, %v1147
  %1149 = vmatmul.f32.gmra.mxu0 %v1026
  %v1150 = vpop.f32.mrf.mxu0
  %v1151 = vadd.f32 0.0, %v1150
  %1152 = vmatmul.f32.gmra.mxu0 %v1029
  %v1153 = vpop.f32.mrf.mxu0
  %v1154 = vadd.f32 0.0, %v1153
  %1155 = vmatmul.f32.gmra.mxu0 %v1032
  %v1156 = vpop.f32.mrf.mxu0
  %v1157 = vadd.f32 0.0, %v1156
  %1158 = vmatmul.f32.gmra.mxu0 %v1035
  %v1159 = vpop.f32.mrf.mxu0
  %v1160 = vadd.f32 0.0, %v1159
  %1161 = vmatmul.f32.gmra.mxu0 %v1038
  %v1162 = vpop.f32.mrf.mxu0
  %v1163 = vadd.f32 0.0, %v1162
  %1164 = vmatmul.f32.gmra.mxu0 %v1041
  %v1165 = vpop.f32.mrf.mxu0
  %v1166 = vadd.f32 0.0, %v1165
  %1167 = vmatmul.f32.gmra.mxu0 %v1044
  %v1168 = vpop.f32.mrf.mxu0
  %v1169 = vadd.f32 0.0, %v1168
  %1170 = vmatmul.f32.gmra.mxu0 %v1047
  %v1171 = vpop.f32.mrf.mxu0
  %v1172 = vadd.f32 0.0, %v1171
  %1173 = vdwg.mxu0
  %v1174 = vmax.f32 %v868, %v1067
  %v1175 = vmax.f32 %v869, %v1070
  %v1176 = vmax.f32 %v870, %v1073
  %v1177 = vmax.f32 %v871, %v1076
  %v1178 = vmax.f32 %v872, %v1079
  %v1179 = vmax.f32 %v873, %v1082
  %v1180 = vmax.f32 %v874, %v1085
  %v1181 = vmax.f32 %v875, %v1088
  %v1182 = vmax.f32 %v876, %v1091
  %v1183 = vmax.f32 %v877, %v1094
  %v1184 = vmax.f32 %v878, %v1097
  %v1185 = vmax.f32 %v879, %v1100
  %v1186 = vmax.f32 %v880, %v1103
  %v1187 = vmax.f32 %v881, %v1106
  %v1188 = vmax.f32 %v882, %v1109
  %v1189 = vmax.f32 %v883, %v1112
  %v1190 = vmax.f32 %v884, %v1115
  %v1191 = vmax.f32 %v885, %v1118
  %v1192 = vmax.f32 %v886, %v1121
  %v1193 = vmax.f32 %v887, %v1124
  %v1194 = vmax.f32 %v888, %v1127
  %v1195 = vmax.f32 %v889, %v1130
  %v1196 = vmax.f32 %v890, %v1133
  %v1197 = vmax.f32 %v891, %v1136
  %v1198 = vmax.f32 %v892, %v1139
  %v1199 = vmax.f32 %v893, %v1142
  %v1200 = vmax.f32 %v894, %v1145
  %v1201 = vmax.f32 %v895, %v1148
  %v1202 = vmax.f32 %v896, %v1151
  %v1203 = vmax.f32 %v897, %v1154
  %v1204 = vmax.f32 %v898, %v1157
  %v1205 = vmax.f32 %v899, %v1160
  %v1206 = vmax.f32 %v900, %v1163
  %v1207 = vmax.f32 %v901, %v1166
  %v1208 = vmax.f32 %v902, %v1169
  %v1209 = vmax.f32 %v903, %v1172
  %v1210 = vld [vmem:[%s2] sm:$0x1]
  %v1212 = vperm.slane %v1210, 0
  %v1214 = vadd.f32 %v1174, %v1212
  %v1215 = vadd.f32 %v1175, %v1212
  %v1216 = vadd.f32 %v1176, %v1212
  %v1217 = vadd.f32 %v1177, %v1212
  %v1218 = vadd.f32 %v1178, %v1212
  %v1219 = vadd.f32 %v1179, %v1212
  %v1220 = vadd.f32 %v1180, %v1212
  %v1221 = vadd.f32 %v1181, %v1212
  %v1222 = vadd.f32 %v1182, %v1212
  %v1223 = vadd.f32 %v1183, %v1212
  %v1224 = vadd.f32 %v1184, %v1212
  %v1225 = vadd.f32 %v1185, %v1212
  %v1226 = vadd.f32 %v1186, %v1212
  %v1227 = vadd.f32 %v1187, %v1212
  %v1228 = vadd.f32 %v1188, %v1212
  %v1229 = vadd.f32 %v1189, %v1212
  %v1230 = vadd.f32 %v1190, %v1212
  %v1231 = vadd.f32 %v1191, %v1212
  %v1232 = vadd.f32 %v1192, %v1212
  %v1233 = vadd.f32 %v1193, %v1212
  %v1234 = vadd.f32 %v1194, %v1212
  %v1235 = vadd.f32 %v1195, %v1212
  %v1236 = vadd.f32 %v1196, %v1212
  %v1237 = vadd.f32 %v1197, %v1212
  %v1238 = vadd.f32 %v1198, %v1212
  %v1239 = vadd.f32 %v1199, %v1212
  %v1240 = vadd.f32 %v1200, %v1212
  %v1241 = vadd.f32 %v1201, %v1212
  %v1242 = vadd.f32 %v1202, %v1212
  %v1243 = vadd.f32 %v1203, %v1212
  %v1244 = vadd.f32 %v1204, %v1212
  %v1245 = vadd.f32 %v1205, %v1212
  %v1246 = vadd.f32 %v1206, %v1212
  %v1247 = vadd.f32 %v1207, %v1212
  %v1248 = vadd.f32 %v1208, %v1212
  %v1249 = vadd.f32 %v1209, %v1212
  %v1250 = vmax.f32 %v1214, 0.0
  %v1251 = vmax.f32 %v1215, 0.0
  %v1252 = vmax.f32 %v1216, 0.0
  %v1253 = vmax.f32 %v1217, 0.0
  %v1254 = vmax.f32 %v1218, 0.0
  %v1255 = vmax.f32 %v1219, 0.0
  %v1256 = vmax.f32 %v1220, 0.0
  %v1257 = vmax.f32 %v1221, 0.0
  %v1258 = vmax.f32 %v1222, 0.0
  %v1259 = vmax.f32 %v1223, 0.0
  %v1260 = vmax.f32 %v1224, 0.0
  %v1261 = vmax.f32 %v1225, 0.0
  %v1262 = vmax.f32 %v1226, 0.0
  %v1263 = vmax.f32 %v1227, 0.0
  %v1264 = vmax.f32 %v1228, 0.0
  %v1265 = vmax.f32 %v1229, 0.0
  %v1266 = vmax.f32 %v1230, 0.0
  %v1267 = vmax.f32 %v1231, 0.0
  %v1268 = vmax.f32 %v1232, 0.0
  %v1269 = vmax.f32 %v1233, 0.0
  %v1270 = vmax.f32 %v1234, 0.0
  %v1271 = vmax.f32 %v1235, 0.0
  %v1272 = vmax.f32 %v1236, 0.0
  %v1273 = vmax.f32 %v1237, 0.0
  %v1274 = vmax.f32 %v1238, 0.0
  %v1275 = vmax.f32 %v1239, 0.0
  %v1276 = vmax.f32 %v1240, 0.0
  %v1277 = vmax.f32 %v1241, 0.0
  %v1278 = vmax.f32 %v1242, 0.0
  %v1279 = vmax.f32 %v1243, 0.0
  %v1280 = vmax.f32 %v1244, 0.0
  %v1281 = vmax.f32 %v1245, 0.0
  %v1282 = vmax.f32 %v1246, 0.0
  %v1283 = vmax.f32 %v1247, 0.0
  %v1284 = vmax.f32 %v1248, 0.0
  %v1285 = vmax.f32 %v1249, 0.0
  %vm1286 = vcmask 162816
  %1287 = vst.msk [vmem:[%s3] sm:$0xff] %vm1286, %v1250
  %1288 = vst.msk [vmem:[%s3 + $0x8] sm:$0xff] %vm1286, %v1251
  %1289 = vst.msk [vmem:[%s3 + $0x10] sm:$0xff] %vm1286, %v1252
  %1290 = vst.msk [vmem:[%s3 + $0x18] sm:$0xff] %vm1286, %v1253
  %1291 = vst.msk [vmem:[%s3 + $0x20] sm:$0xff] %vm1286, %v1254
  %1292 = vst.msk [vmem:[%s3 + $0x28] sm:$0xff] %vm1286, %v1255
  %1293 = vst.msk [vmem:[%s3 + $0x30] sm:$0xff] %vm1286, %v1256
  %1294 = vst.msk [vmem:[%s3 + $0x38] sm:$0xff] %vm1286, %v1257
  %1295 = vst.msk [vmem:[%s3 + $0x40] sm:$0xff] %vm1286, %v1258
  %1296 = vst.msk [vmem:[%s3 + $0x48] sm:$0xff] %vm1286, %v1259
  %1297 = vst.msk [vmem:[%s3 + $0x50] sm:$0xff] %vm1286, %v1260
  %1298 = vst.msk [vmem:[%s3 + $0x58] sm:$0xff] %vm1286, %v1261
  %1299 = vst.msk [vmem:[%s3 + $0x60] sm:$0xff] %vm1286, %v1262
  %1300 = vst.msk [vmem:[%s3 + $0x68] sm:$0xff] %vm1286, %v1263
  %1301 = vst.msk [vmem:[%s3 + $0x70] sm:$0xff] %vm1286, %v1264
  %1302 = vst.msk [vmem:[%s3 + $0x78] sm:$0xff] %vm1286, %v1265
  %1303 = vst.msk [vmem:[%s3 + $0x80] sm:$0xff] %vm1286, %v1266
  %1304 = vst.msk [vmem:[%s3 + $0x88] sm:$0xff] %vm1286, %v1267
  %1305 = vst.msk [vmem:[%s3 + $0x90] sm:$0xff] %vm1286, %v1268
  %1306 = vst.msk [vmem:[%s3 + $0x98] sm:$0xff] %vm1286, %v1269
  %1307 = vst.msk [vmem:[%s3 + $0xa0] sm:$0xff] %vm1286, %v1270
  %1308 = vst.msk [vmem:[%s3 + $0xa8] sm:$0xff] %vm1286, %v1271
  %1309 = vst.msk [vmem:[%s3 + $0xb0] sm:$0xff] %vm1286, %v1272
  %1310 = vst.msk [vmem:[%s3 + $0xb8] sm:$0xff] %vm1286, %v1273
  %1311 = vst.msk [vmem:[%s3 + $0xc0] sm:$0xff] %vm1286, %v1274
  %1312 = vst.msk [vmem:[%s3 + $0xc8] sm:$0xff] %vm1286, %v1275
  %1313 = vst.msk [vmem:[%s3 + $0xd0] sm:$0xff] %vm1286, %v1276
  %1314 = vst.msk [vmem:[%s3 + $0xd8] sm:$0xff] %vm1286, %v1277
  %1315 = vst.msk [vmem:[%s3 + $0xe0] sm:$0xff] %vm1286, %v1278
  %1316 = vst.msk [vmem:[%s3 + $0xe8] sm:$0xff] %vm1286, %v1279
  %1317 = vst.msk [vmem:[%s3 + $0xf0] sm:$0xff] %vm1286, %v1280
  %1318 = vst.msk [vmem:[%s3 + $0xf8] sm:$0xff] %vm1286, %v1281
  %1319 = vst.msk [vmem:[%s3 + $0x100] sm:$0xff] %vm1286, %v1282
  %1320 = vst.msk [vmem:[%s3 + $0x108] sm:$0xff] %vm1286, %v1283
  %1321 = vst.msk [vmem:[%s3 + $0x110] sm:$0xff] %vm1286, %v1284
  %1322 = vst.msk [vmem:[%s3 + $0x118] sm:$0xff] %vm1286, %v1285
  // Predicated region
  $region14: #{net_forward.3} parent=0 // pred_check
    _
  $region15: #{net_forward.3} parent=0 // pred_check_branch
    %1324 = sbr.rel (0) target = $region17
  $region16: #{net_forward.3} parent=0 // pred_region
    _
  $region17: #{net_forward.3} parent=0 // pred_fallthru
    _
  // Predicated region
  $region18: #{net_forward.3} parent=0 // pred_check
    _
  $region19: #{net_forward.3} parent=0 // pred_check_branch
    %1326 = sbr.rel (0) target = $region21
  $region20: #{net_forward.3} parent=0 // pred_region
    _
  $region21: #{net_forward.3} parent=0 // pred_fallthru
    _

// kernel: net_forward.4
$region0: #{net_forward.4}
  #allocation0 [shape = 'u32[]', space=smem, size = 0x4, offset = 0x4, fixed_abs, tag = 'smem constant byte address 0x4 - core index']
  #allocation1 [shape = 'u32[72,128]{1,0:T(1,128)}', space=vmem, size = 0x9000, scoped, tag = 'internal scratch']
  %s0 = inlined_call_operand.vmem [shape: f32[4,32,500], index: 0, kind: input, shape index: {}]
  %s1 = inlined_call_operand.vmem [shape: f32[500,50], index: 1, kind: input, shape index: {}]
  %s2 = inlined_call_operand.vmem [shape: f32[1,50], index: 2, kind: input, shape index: {}]
  %s3 = inlined_call_operand.vmem [shape: f32[32,50], index: 3, kind: output, shape index: {}]
  %s4 = sld [smem:[#allocation0]]
  $region22: #{net_forward.4} parent=0
    _
  %s6 = ssub.s32 1, %s4
  %s7 = scalar_select 0, %s6, %s4
  // Predicated region
  $region2: #{net_forward.4} parent=0 // pred_check
    _
  $region3: #{net_forward.4} parent=0 // pred_check_branch
    %9 = sbr.rel (0) target = $region5
  $region4: #{net_forward.4} parent=0 // pred_region
    _
  $region5: #{net_forward.4} parent=0 // pred_fallthru
    _
  // Predicated region
  $region6: #{net_forward.4} parent=0 // pred_check
    _
  $region7: #{net_forward.4} parent=0 // pred_check_branch
    %11 = sbr.rel (0) target = $region9
  $region8: #{net_forward.4} parent=0 // pred_region
    _
  $region9: #{net_forward.4} parent=0 // pred_fallthru
    _
  // Predicated region
  $region10: #{net_forward.4} parent=0 // pred_check
    _
  $region11: #{net_forward.4} parent=0 // pred_check_branch
    %13 = sbr.rel (0) target = $region13
  $region12: #{net_forward.4} parent=0 // pred_region
    _
  $region13: #{net_forward.4} parent=0 // pred_fallthru
    _
  %v14 = vld [vmem:[%s1] sm:$0xff]
  %v15 = vld [vmem:[%s1 + $0x8] sm:$0xff]
  %v16 = vld [vmem:[%s1 + $0x10] sm:$0xff]
  %v17 = vld [vmem:[%s1 + $0x18] sm:$0xff]
  %v18 = vld [vmem:[%s1 + $0x20] sm:$0xff]
  %v19 = vld [vmem:[%s1 + $0x28] sm:$0xff]
  %v20 = vld [vmem:[%s1 + $0x30] sm:$0xff]
  %v21 = vld [vmem:[%s1 + $0x38] sm:$0xff]
  %v22 = vld [vmem:[%s1 + $0x40] sm:$0xff]
  %v23 = vld [vmem:[%s1 + $0x48] sm:$0xff]
  %v24 = vld [vmem:[%s1 + $0x50] sm:$0xff]
  %v25 = vld [vmem:[%s1 + $0x58] sm:$0xff]
  %v26 = vld [vmem:[%s1 + $0x60] sm:$0xff]
  %v27 = vld [vmem:[%s1 + $0x68] sm:$0xff]
  %v28 = vld [vmem:[%s1 + $0x70] sm:$0xff]
  %v29 = vld [vmem:[%s1 + $0x78] sm:$0xff]
  %v30 = vld [vmem:[%s1 + $0x80] sm:$0xff]
  %v31 = vld [vmem:[%s1 + $0x88] sm:$0xff]
  %v32 = vld [vmem:[%s1 + $0x90] sm:$0xff]
  %v33 = vld [vmem:[%s1 + $0x98] sm:$0xff]
  %v34 = vld [vmem:[%s1 + $0xa0] sm:$0xff]
  %v35 = vld [vmem:[%s1 + $0xa8] sm:$0xff]
  %v36 = vld [vmem:[%s1 + $0xb0] sm:$0xff]
  %v37 = vld [vmem:[%s1 + $0xb8] sm:$0xff]
  %v38 = vld [vmem:[%s1 + $0xc0] sm:$0xff]
  %v39 = vld [vmem:[%s1 + $0xc8] sm:$0xff]
  %v40 = vld [vmem:[%s1 + $0xd0] sm:$0xff]
  %v41 = vld [vmem:[%s1 + $0xd8] sm:$0xff]
  %v42 = vld [vmem:[%s1 + $0xe0] sm:$0xff]
  %v43 = vld [vmem:[%s1 + $0xe8] sm:$0xff]
  %v44 = vld [vmem:[%s1 + $0xf0] sm:$0xff]
  %v45 = vld [vmem:[%s1 + $0xf8] sm:$0xff]
  %v46 = vld [vmem:[%s1 + $0x100] sm:$0xff]
  %v47 = vld [vmem:[%s1 + $0x108] sm:$0xff]
  %v48 = vld [vmem:[%s1 + $0x110] sm:$0xff]
  %v49 = vld [vmem:[%s1 + $0x118] sm:$0xff]
  %v50 = vld [vmem:[%s1 + $0x120] sm:$0xff]
  %v51 = vld [vmem:[%s1 + $0x128] sm:$0xff]
  %v52 = vld [vmem:[%s1 + $0x130] sm:$0xff]
  %v53 = vld [vmem:[%s1 + $0x138] sm:$0xff]
  %v54 = vld [vmem:[%s1 + $0x140] sm:$0xff]
  %v55 = vld [vmem:[%s1 + $0x148] sm:$0xff]
  %v56 = vld [vmem:[%s1 + $0x150] sm:$0xff]
  %v57 = vld [vmem:[%s1 + $0x158] sm:$0xff]
  %v58 = vld [vmem:[%s1 + $0x160] sm:$0xff]
  %v59 = vld [vmem:[%s1 + $0x168] sm:$0xff]
  %v60 = vld [vmem:[%s1 + $0x170] sm:$0xff]
  %v61 = vld [vmem:[%s1 + $0x178] sm:$0xff]
  %v62 = vld [vmem:[%s1 + $0x180] sm:$0xff]
  %v63 = vld [vmem:[%s1 + $0x188] sm:$0xff]
  %v64 = vld [vmem:[%s1 + $0x190] sm:$0xff]
  %v65 = vld [vmem:[%s1 + $0x198] sm:$0xff]
  %v66 = vld [vmem:[%s1 + $0x1a0] sm:$0xff]
  %v67 = vld [vmem:[%s1 + $0x1a8] sm:$0xff]
  %v68 = vld [vmem:[%s1 + $0x1b0] sm:$0xff]
  %v69 = vld [vmem:[%s1 + $0x1b8] sm:$0xff]
  %v70 = vld [vmem:[%s1 + $0x1c0] sm:$0xff]
  %v71 = vld [vmem:[%s1 + $0x1c8] sm:$0xff]
  %v72 = vld [vmem:[%s1 + $0x1d0] sm:$0xff]
  %v73 = vld [vmem:[%s1 + $0x1d8] sm:$0xff]
  %v74 = vld [vmem:[%s1 + $0x1e0] sm:$0xff]
  %v75 = vld [vmem:[%s1 + $0x1e8] sm:$0xff]
  %v76 = vld [vmem:[%s1 + $0x1f0] sm:$0xf]
  %v77 = vld [vmem:[%s0] sm:$0xff]
  %v78 = vld [vmem:[%s0 + $0x8] sm:$0xff]
  %v79 = vld [vmem:[%s0 + $0x10] sm:$0xff]
  %v80 = vld [vmem:[%s0 + $0x18] sm:$0xff]
  %v81 = vld [vmem:[%s0 + $0x20] sm:$0xff]
  %v82 = vld [vmem:[%s0 + $0x28] sm:$0xff]
  %v83 = vld [vmem:[%s0 + $0x30] sm:$0xff]
  %v84 = vld [vmem:[%s0 + $0x38] sm:$0xff]
  %v85 = vld [vmem:[%s0 + $0x40] sm:$0xff]
  %v86 = vld [vmem:[%s0 + $0x48] sm:$0xff]
  %v87 = vld [vmem:[%s0 + $0x50] sm:$0xff]
  %v88 = vld [vmem:[%s0 + $0x58] sm:$0xff]
  %v89 = vld [vmem:[%s0 + $0x60] sm:$0xff]
  %v90 = vld [vmem:[%s0 + $0x68] sm:$0xff]
  %v91 = vld [vmem:[%s0 + $0x70] sm:$0xff]
  %v92 = vld [vmem:[%s0 + $0x78] sm:$0xff]
  %vm93 = vcmask 949248
  %v95 = vsel %vm93, %v80, 0
  %v98 = vsel %vm93, %v84, 0
  %v101 = vsel %vm93, %v88, 0
  %v104 = vsel %vm93, %v92, 0
  %vm106 = vcmask 1043456
  %v108 = vsel %vm106, %v76, 0
  %110 = vmatpush.msra.mxu0 %v29
  %111 = vmatpush.msra.mxu0 %v28
  %112 = vmatpush.msra.mxu0 %v27
  %113 = vmatpush.msra.mxu0 %v26
  %114 = vmatpush.msra.mxu0 %v25
  %115 = vmatpush.msra.mxu0 %v24
  %116 = vmatpush.msra.mxu0 %v23
  %117 = vmatpush.msra.mxu0 %v22
  %118 = vmatpush.msra.mxu0 %v21
  %119 = vmatpush.msra.mxu0 %v20
  %120 = vmatpush.msra.mxu0 %v19
  %121 = vmatpush.msra.mxu0 %v18
  %122 = vmatpush.msra.mxu0 %v17
  %123 = vmatpush.msra.mxu0 %v16
  %124 = vmatpush.msra.mxu0 %v15
  %125 = vmatpush.msra.mxu0 %v14
  %126 = vmatmul.f32.gmra.mxu0 %v77
  %v127 = vpop.f32.mrf.mxu0
  %v128 = vadd.f32 0.0, %v127
  %129 = vmatmul.f32.gmra.mxu0 %v81
  %v130 = vpop.f32.mrf.mxu0
  %v131 = vadd.f32 0.0, %v130
  %132 = vmatmul.f32.gmra.mxu0 %v85
  %v133 = vpop.f32.mrf.mxu0
  %v134 = vadd.f32 0.0, %v133
  %135 = vmatmul.f32.gmra.mxu0 %v89
  %v136 = vpop.f32.mrf.mxu0
  %v137 = vadd.f32 0.0, %v136
  %138 = vdwg.mxu0
  %139 = vmatpush.msra.mxu0 %v45
  %140 = vmatpush.msra.mxu0 %v44
  %141 = vmatpush.msra.mxu0 %v43
  %142 = vmatpush.msra.mxu0 %v42
  %143 = vmatpush.msra.mxu0 %v41
  %144 = vmatpush.msra.mxu0 %v40
  %145 = vmatpush.msra.mxu0 %v39
  %146 = vmatpush.msra.mxu0 %v38
  %147 = vmatpush.msra.mxu0 %v37
  %148 = vmatpush.msra.mxu0 %v36
  %149 = vmatpush.msra.mxu0 %v35
  %150 = vmatpush.msra.mxu0 %v34
  %151 = vmatpush.msra.mxu0 %v33
  %152 = vmatpush.msra.mxu0 %v32
  %153 = vmatpush.msra.mxu0 %v31
  %154 = vmatpush.msra.mxu0 %v30
  %155 = vmatmul.f32.gmra.mxu0 %v78
  %v156 = vpop.f32.mrf.mxu0
  %v157 = vadd.f32 %v128, %v156
  %158 = vmatmul.f32.gmra.mxu0 %v82
  %v159 = vpop.f32.mrf.mxu0
  %v160 = vadd.f32 %v131, %v159
  %161 = vmatmul.f32.gmra.mxu0 %v86
  %v162 = vpop.f32.mrf.mxu0
  %v163 = vadd.f32 %v134, %v162
  %164 = vmatmul.f32.gmra.mxu0 %v90
  %v165 = vpop.f32.mrf.mxu0
  %v166 = vadd.f32 %v137, %v165
  %167 = vdwg.mxu0
  %168 = vmatpush.msra.mxu0 %v61
  %169 = vmatpush.msra.mxu0 %v60
  %170 = vmatpush.msra.mxu0 %v59
  %171 = vmatpush.msra.mxu0 %v58
  %172 = vmatpush.msra.mxu0 %v57
  %173 = vmatpush.msra.mxu0 %v56
  %174 = vmatpush.msra.mxu0 %v55
  %175 = vmatpush.msra.mxu0 %v54
  %176 = vmatpush.msra.mxu0 %v53
  %177 = vmatpush.msra.mxu0 %v52
  %178 = vmatpush.msra.mxu0 %v51
  %179 = vmatpush.msra.mxu0 %v50
  %180 = vmatpush.msra.mxu0 %v49
  %181 = vmatpush.msra.mxu0 %v48
  %182 = vmatpush.msra.mxu0 %v47
  %183 = vmatpush.msra.mxu0 %v46
  %184 = vmatmul.f32.gmra.mxu0 %v79
  %v185 = vpop.f32.mrf.mxu0
  %v186 = vadd.f32 %v157, %v185
  %187 = vmatmul.f32.gmra.mxu0 %v83
  %v188 = vpop.f32.mrf.mxu0
  %v189 = vadd.f32 %v160, %v188
  %190 = vmatmul.f32.gmra.mxu0 %v87
  %v191 = vpop.f32.mrf.mxu0
  %v192 = vadd.f32 %v163, %v191
  %193 = vmatmul.f32.gmra.mxu0 %v91
  %v194 = vpop.f32.mrf.mxu0
  %v195 = vadd.f32 %v166, %v194
  %196 = vdwg.mxu0
  %197 = vmatpush.msra.mxu0 0.0
  %198 = vmatpush.msra.mxu0 %v108
  %199 = vmatpush.msra.mxu0 %v75
  %200 = vmatpush.msra.mxu0 %v74
  %201 = vmatpush.msra.mxu0 %v73
  %202 = vmatpush.msra.mxu0 %v72
  %203 = vmatpush.msra.mxu0 %v71
  %204 = vmatpush.msra.mxu0 %v70
  %205 = vmatpush.msra.mxu0 %v69
  %206 = vmatpush.msra.mxu0 %v68
  %207 = vmatpush.msra.mxu0 %v67
  %208 = vmatpush.msra.mxu0 %v66
  %209 = vmatpush.msra.mxu0 %v65
  %210 = vmatpush.msra.mxu0 %v64
  %211 = vmatpush.msra.mxu0 %v63
  %212 = vmatpush.msra.mxu0 %v62
  %213 = vmatmul.f32.gmra.mxu0 %v95
  %v214 = vpop.f32.mrf.mxu0
  %v215 = vadd.f32 %v186, %v214
  %216 = vmatmul.f32.gmra.mxu0 %v98
  %v217 = vpop.f32.mrf.mxu0
  %v218 = vadd.f32 %v189, %v217
  %219 = vmatmul.f32.gmra.mxu0 %v101
  %v220 = vpop.f32.mrf.mxu0
  %v221 = vadd.f32 %v192, %v220
  %222 = vmatmul.f32.gmra.mxu0 %v104
  %v223 = vpop.f32.mrf.mxu0
  %v224 = vadd.f32 %v195, %v223
  %225 = vdwg.mxu0
  %s226 = scalar_lea.vmem %s0, 128
  %v227 = vld [vmem:[%s226] sm:$0xff]
  %v228 = vld [vmem:[%s226 + $0x8] sm:$0xff]
  %v229 = vld [vmem:[%s226 + $0x10] sm:$0xff]
  %v230 = vld [vmem:[%s226 + $0x18] sm:$0xff]
  %v231 = vld [vmem:[%s226 + $0x20] sm:$0xff]
  %v232 = vld [vmem:[%s226 + $0x28] sm:$0xff]
  %v233 = vld [vmem:[%s226 + $0x30] sm:$0xff]
  %v234 = vld [vmem:[%s226 + $0x38] sm:$0xff]
  %v235 = vld [vmem:[%s226 + $0x40] sm:$0xff]
  %v236 = vld [vmem:[%s226 + $0x48] sm:$0xff]
  %v237 = vld [vmem:[%s226 + $0x50] sm:$0xff]
  %v238 = vld [vmem:[%s226 + $0x58] sm:$0xff]
  %v239 = vld [vmem:[%s226 + $0x60] sm:$0xff]
  %v240 = vld [vmem:[%s226 + $0x68] sm:$0xff]
  %v241 = vld [vmem:[%s226 + $0x70] sm:$0xff]
  %v242 = vld [vmem:[%s226 + $0x78] sm:$0xff]
  %v244 = vsel %vm93, %v230, 0
  %v247 = vsel %vm93, %v234, 0
  %v250 = vsel %vm93, %v238, 0
  %v253 = vsel %vm93, %v242, 0
  %255 = vmatpush.msra.mxu0 %v29
  %256 = vmatpush.msra.mxu0 %v28
  %257 = vmatpush.msra.mxu0 %v27
  %258 = vmatpush.msra.mxu0 %v26
  %259 = vmatpush.msra.mxu0 %v25
  %260 = vmatpush.msra.mxu0 %v24
  %261 = vmatpush.msra.mxu0 %v23
  %262 = vmatpush.msra.mxu0 %v22
  %263 = vmatpush.msra.mxu0 %v21
  %264 = vmatpush.msra.mxu0 %v20
  %265 = vmatpush.msra.mxu0 %v19
  %266 = vmatpush.msra.mxu0 %v18
  %267 = vmatpush.msra.mxu0 %v17
  %268 = vmatpush.msra.mxu0 %v16
  %269 = vmatpush.msra.mxu0 %v15
  %270 = vmatpush.msra.mxu0 %v14
  %271 = vmatmul.f32.gmra.mxu0 %v227
  %v272 = vpop.f32.mrf.mxu0
  %v273 = vadd.f32 0.0, %v272
  %274 = vmatmul.f32.gmra.mxu0 %v231
  %v275 = vpop.f32.mrf.mxu0
  %v276 = vadd.f32 0.0, %v275
  %277 = vmatmul.f32.gmra.mxu0 %v235
  %v278 = vpop.f32.mrf.mxu0
  %v279 = vadd.f32 0.0, %v278
  %280 = vmatmul.f32.gmra.mxu0 %v239
  %v281 = vpop.f32.mrf.mxu0
  %v282 = vadd.f32 0.0, %v281
  %283 = vdwg.mxu0
  %284 = vmatpush.msra.mxu0 %v45
  %285 = vmatpush.msra.mxu0 %v44
  %286 = vmatpush.msra.mxu0 %v43
  %287 = vmatpush.msra.mxu0 %v42
  %288 = vmatpush.msra.mxu0 %v41
  %289 = vmatpush.msra.mxu0 %v40
  %290 = vmatpush.msra.mxu0 %v39
  %291 = vmatpush.msra.mxu0 %v38
  %292 = vmatpush.msra.mxu0 %v37
  %293 = vmatpush.msra.mxu0 %v36
  %294 = vmatpush.msra.mxu0 %v35
  %295 = vmatpush.msra.mxu0 %v34
  %296 = vmatpush.msra.mxu0 %v33
  %297 = vmatpush.msra.mxu0 %v32
  %298 = vmatpush.msra.mxu0 %v31
  %299 = vmatpush.msra.mxu0 %v30
  %300 = vmatmul.f32.gmra.mxu0 %v228
  %v301 = vpop.f32.mrf.mxu0
  %v302 = vadd.f32 %v273, %v301
  %303 = vmatmul.f32.gmra.mxu0 %v232
  %v304 = vpop.f32.mrf.mxu0
  %v305 = vadd.f32 %v276, %v304
  %306 = vmatmul.f32.gmra.mxu0 %v236
  %v307 = vpop.f32.mrf.mxu0
  %v308 = vadd.f32 %v279, %v307
  %309 = vmatmul.f32.gmra.mxu0 %v240
  %v310 = vpop.f32.mrf.mxu0
  %v311 = vadd.f32 %v282, %v310
  %312 = vdwg.mxu0
  %313 = vmatpush.msra.mxu0 %v61
  %314 = vmatpush.msra.mxu0 %v60
  %315 = vmatpush.msra.mxu0 %v59
  %316 = vmatpush.msra.mxu0 %v58
  %317 = vmatpush.msra.mxu0 %v57
  %318 = vmatpush.msra.mxu0 %v56
  %319 = vmatpush.msra.mxu0 %v55
  %320 = vmatpush.msra.mxu0 %v54
  %321 = vmatpush.msra.mxu0 %v53
  %322 = vmatpush.msra.mxu0 %v52
  %323 = vmatpush.msra.mxu0 %v51
  %324 = vmatpush.msra.mxu0 %v50
  %325 = vmatpush.msra.mxu0 %v49
  %326 = vmatpush.msra.mxu0 %v48
  %327 = vmatpush.msra.mxu0 %v47
  %328 = vmatpush.msra.mxu0 %v46
  %329 = vmatmul.f32.gmra.mxu0 %v229
  %v330 = vpop.f32.mrf.mxu0
  %v331 = vadd.f32 %v302, %v330
  %332 = vmatmul.f32.gmra.mxu0 %v233
  %v333 = vpop.f32.mrf.mxu0
  %v334 = vadd.f32 %v305, %v333
  %335 = vmatmul.f32.gmra.mxu0 %v237
  %v336 = vpop.f32.mrf.mxu0
  %v337 = vadd.f32 %v308, %v336
  %338 = vmatmul.f32.gmra.mxu0 %v241
  %v339 = vpop.f32.mrf.mxu0
  %v340 = vadd.f32 %v311, %v339
  %341 = vdwg.mxu0
  %342 = vmatpush.msra.mxu0 0.0
  %343 = vmatpush.msra.mxu0 %v108
  %344 = vmatpush.msra.mxu0 %v75
  %345 = vmatpush.msra.mxu0 %v74
  %346 = vmatpush.msra.mxu0 %v73
  %347 = vmatpush.msra.mxu0 %v72
  %348 = vmatpush.msra.mxu0 %v71
  %349 = vmatpush.msra.mxu0 %v70
  %350 = vmatpush.msra.mxu0 %v69
  %351 = vmatpush.msra.mxu0 %v68
  %352 = vmatpush.msra.mxu0 %v67
  %353 = vmatpush.msra.mxu0 %v66
  %354 = vmatpush.msra.mxu0 %v65
  %355 = vmatpush.msra.mxu0 %v64
  %356 = vmatpush.msra.mxu0 %v63
  %357 = vmatpush.msra.mxu0 %v62
  %358 = vmatmul.f32.gmra.mxu0 %v244
  %v359 = vpop.f32.mrf.mxu0
  %v360 = vadd.f32 %v331, %v359
  %361 = vmatmul.f32.gmra.mxu0 %v247
  %v362 = vpop.f32.mrf.mxu0
  %v363 = vadd.f32 %v334, %v362
  %364 = vmatmul.f32.gmra.mxu0 %v250
  %v365 = vpop.f32.mrf.mxu0
  %v366 = vadd.f32 %v337, %v365
  %367 = vmatmul.f32.gmra.mxu0 %v253
  %v368 = vpop.f32.mrf.mxu0
  %v369 = vadd.f32 %v340, %v368
  %370 = vdwg.mxu0
  %v371 = vmax.f32 %v215, %v360
  %v372 = vmax.f32 %v218, %v363
  %v373 = vmax.f32 %v221, %v366
  %v374 = vmax.f32 %v224, %v369
  %s375 = scalar_lea.vmem %s0, 256
  %v376 = vld [vmem:[%s375] sm:$0xff]
  %v377 = vld [vmem:[%s375 + $0x8] sm:$0xff]
  %v378 = vld [vmem:[%s375 + $0x10] sm:$0xff]
  %v379 = vld [vmem:[%s375 + $0x18] sm:$0xff]
  %v380 = vld [vmem:[%s375 + $0x20] sm:$0xff]
  %v381 = vld [vmem:[%s375 + $0x28] sm:$0xff]
  %v382 = vld [vmem:[%s375 + $0x30] sm:$0xff]
  %v383 = vld [vmem:[%s375 + $0x38] sm:$0xff]
  %v384 = vld [vmem:[%s375 + $0x40] sm:$0xff]
  %v385 = vld [vmem:[%s375 + $0x48] sm:$0xff]
  %v386 = vld [vmem:[%s375 + $0x50] sm:$0xff]
  %v387 = vld [vmem:[%s375 + $0x58] sm:$0xff]
  %v388 = vld [vmem:[%s375 + $0x60] sm:$0xff]
  %v389 = vld [vmem:[%s375 + $0x68] sm:$0xff]
  %v390 = vld [vmem:[%s375 + $0x70] sm:$0xff]
  %v391 = vld [vmem:[%s375 + $0x78] sm:$0xff]
  %v393 = vsel %vm93, %v379, 0
  %v396 = vsel %vm93, %v383, 0
  %v399 = vsel %vm93, %v387, 0
  %v402 = vsel %vm93, %v391, 0
  %404 = vmatpush.msra.mxu0 %v29
  %405 = vmatpush.msra.mxu0 %v28
  %406 = vmatpush.msra.mxu0 %v27
  %407 = vmatpush.msra.mxu0 %v26
  %408 = vmatpush.msra.mxu0 %v25
  %409 = vmatpush.msra.mxu0 %v24
  %410 = vmatpush.msra.mxu0 %v23
  %411 = vmatpush.msra.mxu0 %v22
  %412 = vmatpush.msra.mxu0 %v21
  %413 = vmatpush.msra.mxu0 %v20
  %414 = vmatpush.msra.mxu0 %v19
  %415 = vmatpush.msra.mxu0 %v18
  %416 = vmatpush.msra.mxu0 %v17
  %417 = vmatpush.msra.mxu0 %v16
  %418 = vmatpush.msra.mxu0 %v15
  %419 = vmatpush.msra.mxu0 %v14
  %420 = vmatmul.f32.gmra.mxu0 %v376
  %v421 = vpop.f32.mrf.mxu0
  %v422 = vadd.f32 0.0, %v421
  %423 = vmatmul.f32.gmra.mxu0 %v380
  %v424 = vpop.f32.mrf.mxu0
  %v425 = vadd.f32 0.0, %v424
  %426 = vmatmul.f32.gmra.mxu0 %v384
  %v427 = vpop.f32.mrf.mxu0
  %v428 = vadd.f32 0.0, %v427
  %429 = vmatmul.f32.gmra.mxu0 %v388
  %v430 = vpop.f32.mrf.mxu0
  %v431 = vadd.f32 0.0, %v430
  %432 = vdwg.mxu0
  %433 = vmatpush.msra.mxu0 %v45
  %434 = vmatpush.msra.mxu0 %v44
  %435 = vmatpush.msra.mxu0 %v43
  %436 = vmatpush.msra.mxu0 %v42
  %437 = vmatpush.msra.mxu0 %v41
  %438 = vmatpush.msra.mxu0 %v40
  %439 = vmatpush.msra.mxu0 %v39
  %440 = vmatpush.msra.mxu0 %v38
  %441 = vmatpush.msra.mxu0 %v37
  %442 = vmatpush.msra.mxu0 %v36
  %443 = vmatpush.msra.mxu0 %v35
  %444 = vmatpush.msra.mxu0 %v34
  %445 = vmatpush.msra.mxu0 %v33
  %446 = vmatpush.msra.mxu0 %v32
  %447 = vmatpush.msra.mxu0 %v31
  %448 = vmatpush.msra.mxu0 %v30
  %449 = vmatmul.f32.gmra.mxu0 %v377
  %v450 = vpop.f32.mrf.mxu0
  %v451 = vadd.f32 %v422, %v450
  %452 = vmatmul.f32.gmra.mxu0 %v381
  %v453 = vpop.f32.mrf.mxu0
  %v454 = vadd.f32 %v425, %v453
  %455 = vmatmul.f32.gmra.mxu0 %v385
  %v456 = vpop.f32.mrf.mxu0
  %v457 = vadd.f32 %v428, %v456
  %458 = vmatmul.f32.gmra.mxu0 %v389
  %v459 = vpop.f32.mrf.mxu0
  %v460 = vadd.f32 %v431, %v459
  %461 = vdwg.mxu0
  %462 = vmatpush.msra.mxu0 %v61
  %463 = vmatpush.msra.mxu0 %v60
  %464 = vmatpush.msra.mxu0 %v59
  %465 = vmatpush.msra.mxu0 %v58
  %466 = vmatpush.msra.mxu0 %v57
  %467 = vmatpush.msra.mxu0 %v56
  %468 = vmatpush.msra.mxu0 %v55
  %469 = vmatpush.msra.mxu0 %v54
  %470 = vmatpush.msra.mxu0 %v53
  %471 = vmatpush.msra.mxu0 %v52
  %472 = vmatpush.msra.mxu0 %v51
  %473 = vmatpush.msra.mxu0 %v50
  %474 = vmatpush.msra.mxu0 %v49
  %475 = vmatpush.msra.mxu0 %v48
  %476 = vmatpush.msra.mxu0 %v47
  %477 = vmatpush.msra.mxu0 %v46
  %478 = vmatmul.f32.gmra.mxu0 %v378
  %v479 = vpop.f32.mrf.mxu0
  %v480 = vadd.f32 %v451, %v479
  %481 = vmatmul.f32.gmra.mxu0 %v382
  %v482 = vpop.f32.mrf.mxu0
  %v483 = vadd.f32 %v454, %v482
  %484 = vmatmul.f32.gmra.mxu0 %v386
  %v485 = vpop.f32.mrf.mxu0
  %v486 = vadd.f32 %v457, %v485
  %487 = vmatmul.f32.gmra.mxu0 %v390
  %v488 = vpop.f32.mrf.mxu0
  %v489 = vadd.f32 %v460, %v488
  %490 = vdwg.mxu0
  %491 = vmatpush.msra.mxu0 0.0
  %492 = vmatpush.msra.mxu0 %v108
  %493 = vmatpush.msra.mxu0 %v75
  %494 = vmatpush.msra.mxu0 %v74
  %495 = vmatpush.msra.mxu0 %v73
  %496 = vmatpush.msra.mxu0 %v72
  %497 = vmatpush.msra.mxu0 %v71
  %498 = vmatpush.msra.mxu0 %v70
  %499 = vmatpush.msra.mxu0 %v69
  %500 = vmatpush.msra.mxu0 %v68
  %501 = vmatpush.msra.mxu0 %v67
  %502 = vmatpush.msra.mxu0 %v66
  %503 = vmatpush.msra.mxu0 %v65
  %504 = vmatpush.msra.mxu0 %v64
  %505 = vmatpush.msra.mxu0 %v63
  %506 = vmatpush.msra.mxu0 %v62
  %507 = vmatmul.f32.gmra.mxu0 %v393
  %v508 = vpop.f32.mrf.mxu0
  %v509 = vadd.f32 %v480, %v508
  %510 = vmatmul.f32.gmra.mxu0 %v396
  %v511 = vpop.f32.mrf.mxu0
  %v512 = vadd.f32 %v483, %v511
  %513 = vmatmul.f32.gmra.mxu0 %v399
  %v514 = vpop.f32.mrf.mxu0
  %v515 = vadd.f32 %v486, %v514
  %516 = vmatmul.f32.gmra.mxu0 %v402
  %v517 = vpop.f32.mrf.mxu0
  %v518 = vadd.f32 %v489, %v517
  %519 = vdwg.mxu0
  %v520 = vmax.f32 %v371, %v509
  %v521 = vmax.f32 %v372, %v512
  %v522 = vmax.f32 %v373, %v515
  %v523 = vmax.f32 %v374, %v518
  %s524 = scalar_lea.vmem %s0, 384
  %v525 = vld [vmem:[%s524] sm:$0xff]
  %v526 = vld [vmem:[%s524 + $0x8] sm:$0xff]
  %v527 = vld [vmem:[%s524 + $0x10] sm:$0xff]
  %v528 = vld [vmem:[%s524 + $0x18] sm:$0xff]
  %v529 = vld [vmem:[%s524 + $0x20] sm:$0xff]
  %v530 = vld [vmem:[%s524 + $0x28] sm:$0xff]
  %v531 = vld [vmem:[%s524 + $0x30] sm:$0xff]
  %v532 = vld [vmem:[%s524 + $0x38] sm:$0xff]
  %v533 = vld [vmem:[%s524 + $0x40] sm:$0xff]
  %v534 = vld [vmem:[%s524 + $0x48] sm:$0xff]
  %v535 = vld [vmem:[%s524 + $0x50] sm:$0xff]
  %v536 = vld [vmem:[%s524 + $0x58] sm:$0xff]
  %v537 = vld [vmem:[%s524 + $0x60] sm:$0xff]
  %v538 = vld [vmem:[%s524 + $0x68] sm:$0xff]
  %v539 = vld [vmem:[%s524 + $0x70] sm:$0xff]
  %v540 = vld [vmem:[%s524 + $0x78] sm:$0xff]
  %v542 = vsel %vm93, %v528, 0
  %v545 = vsel %vm93, %v532, 0
  %v548 = vsel %vm93, %v536, 0
  %v551 = vsel %vm93, %v540, 0
  %553 = vmatpush.msra.mxu0 %v29
  %554 = vmatpush.msra.mxu0 %v28
  %555 = vmatpush.msra.mxu0 %v27
  %556 = vmatpush.msra.mxu0 %v26
  %557 = vmatpush.msra.mxu0 %v25
  %558 = vmatpush.msra.mxu0 %v24
  %559 = vmatpush.msra.mxu0 %v23
  %560 = vmatpush.msra.mxu0 %v22
  %561 = vmatpush.msra.mxu0 %v21
  %562 = vmatpush.msra.mxu0 %v20
  %563 = vmatpush.msra.mxu0 %v19
  %564 = vmatpush.msra.mxu0 %v18
  %565 = vmatpush.msra.mxu0 %v17
  %566 = vmatpush.msra.mxu0 %v16
  %567 = vmatpush.msra.mxu0 %v15
  %568 = vmatpush.msra.mxu0 %v14
  %569 = vmatmul.f32.gmra.mxu0 %v525
  %v570 = vpop.f32.mrf.mxu0
  %v571 = vadd.f32 0.0, %v570
  %572 = vmatmul.f32.gmra.mxu0 %v529
  %v573 = vpop.f32.mrf.mxu0
  %v574 = vadd.f32 0.0, %v573
  %575 = vmatmul.f32.gmra.mxu0 %v533
  %v576 = vpop.f32.mrf.mxu0
  %v577 = vadd.f32 0.0, %v576
  %578 = vmatmul.f32.gmra.mxu0 %v537
  %v579 = vpop.f32.mrf.mxu0
  %v580 = vadd.f32 0.0, %v579
  %581 = vdwg.mxu0
  %582 = vmatpush.msra.mxu0 %v45
  %583 = vmatpush.msra.mxu0 %v44
  %584 = vmatpush.msra.mxu0 %v43
  %585 = vmatpush.msra.mxu0 %v42
  %586 = vmatpush.msra.mxu0 %v41
  %587 = vmatpush.msra.mxu0 %v40
  %588 = vmatpush.msra.mxu0 %v39
  %589 = vmatpush.msra.mxu0 %v38
  %590 = vmatpush.msra.mxu0 %v37
  %591 = vmatpush.msra.mxu0 %v36
  %592 = vmatpush.msra.mxu0 %v35
  %593 = vmatpush.msra.mxu0 %v34
  %594 = vmatpush.msra.mxu0 %v33
  %595 = vmatpush.msra.mxu0 %v32
  %596 = vmatpush.msra.mxu0 %v31
  %597 = vmatpush.msra.mxu0 %v30
  %598 = vmatmul.f32.gmra.mxu0 %v526
  %v599 = vpop.f32.mrf.mxu0
  %v600 = vadd.f32 %v571, %v599
  %601 = vmatmul.f32.gmra.mxu0 %v530
  %v602 = vpop.f32.mrf.mxu0
  %v603 = vadd.f32 %v574, %v602
  %604 = vmatmul.f32.gmra.mxu0 %v534
  %v605 = vpop.f32.mrf.mxu0
  %v606 = vadd.f32 %v577, %v605
  %607 = vmatmul.f32.gmra.mxu0 %v538
  %v608 = vpop.f32.mrf.mxu0
  %v609 = vadd.f32 %v580, %v608
  %610 = vdwg.mxu0
  %611 = vmatpush.msra.mxu0 %v61
  %612 = vmatpush.msra.mxu0 %v60
  %613 = vmatpush.msra.mxu0 %v59
  %614 = vmatpush.msra.mxu0 %v58
  %615 = vmatpush.msra.mxu0 %v57
  %616 = vmatpush.msra.mxu0 %v56
  %617 = vmatpush.msra.mxu0 %v55
  %618 = vmatpush.msra.mxu0 %v54
  %619 = vmatpush.msra.mxu0 %v53
  %620 = vmatpush.msra.mxu0 %v52
  %621 = vmatpush.msra.mxu0 %v51
  %622 = vmatpush.msra.mxu0 %v50
  %623 = vmatpush.msra.mxu0 %v49
  %624 = vmatpush.msra.mxu0 %v48
  %625 = vmatpush.msra.mxu0 %v47
  %626 = vmatpush.msra.mxu0 %v46
  %627 = vmatmul.f32.gmra.mxu0 %v527
  %v628 = vpop.f32.mrf.mxu0
  %v629 = vadd.f32 %v600, %v628
  %630 = vmatmul.f32.gmra.mxu0 %v531
  %v631 = vpop.f32.mrf.mxu0
  %v632 = vadd.f32 %v603, %v631
  %633 = vmatmul.f32.gmra.mxu0 %v535
  %v634 = vpop.f32.mrf.mxu0
  %v635 = vadd.f32 %v606, %v634
  %636 = vmatmul.f32.gmra.mxu0 %v539
  %v637 = vpop.f32.mrf.mxu0
  %v638 = vadd.f32 %v609, %v637
  %639 = vdwg.mxu0
  %640 = vmatpush.msra.mxu0 0.0
  %641 = vmatpush.msra.mxu0 %v108
  %642 = vmatpush.msra.mxu0 %v75
  %643 = vmatpush.msra.mxu0 %v74
  %644 = vmatpush.msra.mxu0 %v73
  %645 = vmatpush.msra.mxu0 %v72
  %646 = vmatpush.msra.mxu0 %v71
  %647 = vmatpush.msra.mxu0 %v70
  %648 = vmatpush.msra.mxu0 %v69
  %649 = vmatpush.msra.mxu0 %v68
  %650 = vmatpush.msra.mxu0 %v67
  %651 = vmatpush.msra.mxu0 %v66
  %652 = vmatpush.msra.mxu0 %v65
  %653 = vmatpush.msra.mxu0 %v64
  %654 = vmatpush.msra.mxu0 %v63
  %655 = vmatpush.msra.mxu0 %v62
  %656 = vmatmul.f32.gmra.mxu0 %v542
  %v657 = vpop.f32.mrf.mxu0
  %v658 = vadd.f32 %v629, %v657
  %659 = vmatmul.f32.gmra.mxu0 %v545
  %v660 = vpop.f32.mrf.mxu0
  %v661 = vadd.f32 %v632, %v660
  %662 = vmatmul.f32.gmra.mxu0 %v548
  %v663 = vpop.f32.mrf.mxu0
  %v664 = vadd.f32 %v635, %v663
  %665 = vmatmul.f32.gmra.mxu0 %v551
  %v666 = vpop.f32.mrf.mxu0
  %v667 = vadd.f32 %v638, %v666
  %668 = vdwg.mxu0
  %v669 = vmax.f32 %v520, %v658
  %v670 = vmax.f32 %v521, %v661
  %v671 = vmax.f32 %v522, %v664
  %v672 = vmax.f32 %v523, %v667
  %v673 = vld [vmem:[%s2] sm:$0x1]
  %v675 = vperm.slane %v673, 0
  %v677 = vadd.f32 %v669, %v675
  %v678 = vadd.f32 %v670, %v675
  %v679 = vadd.f32 %v671, %v675
  %v680 = vadd.f32 %v672, %v675
  %v681 = vmax.f32 %v677, 0.0
  %v682 = vmax.f32 %v678, 0.0
  %v683 = vmax.f32 %v679, 0.0
  %v684 = vmax.f32 %v680, 0.0
  %vm685 = vcmask 408576
  %686 = vst.msk [vmem:[%s3] sm:$0xff] %vm685, %v681
  %687 = vst.msk [vmem:[%s3 + $0x8] sm:$0xff] %vm685, %v682
  %688 = vst.msk [vmem:[%s3 + $0x10] sm:$0xff] %vm685, %v683
  %689 = vst.msk [vmem:[%s3 + $0x18] sm:$0xff] %vm685, %v684
  // Predicated region
  $region14: #{net_forward.4} parent=0 // pred_check
    _
  $region15: #{net_forward.4} parent=0 // pred_check_branch
    %691 = sbr.rel (0) target = $region17
  $region16: #{net_forward.4} parent=0 // pred_region
    _
  $region17: #{net_forward.4} parent=0 // pred_fallthru
    _
  // Predicated region
  $region18: #{net_forward.4} parent=0 // pred_check
    _
  $region19: #{net_forward.4} parent=0 // pred_check_branch
    %693 = sbr.rel (0) target = $region21
  $region20: #{net_forward.4} parent=0 // pred_region
    _
  $region21: #{net_forward.4} parent=0 // pred_fallthru
    _

// kernel: net_forward.5
$region0: #{net_forward.5}
  #allocation0 [shape = 'u32[]', space=smem, size = 0x4, offset = 0x4, fixed_abs, tag = 'smem constant byte address 0x4 - core index']
  #allocation1 [shape = 'u32[72,128]{1,0:T(1,128)}', space=vmem, size = 0x9000, scoped, tag = 'internal scratch']
  %s0 = inlined_call_operand.vmem [shape: f32[2,800], index: 0, kind: input, shape index: {}]
  %s1 = inlined_call_operand.vmem [shape: f32[800,500], index: 1, kind: input, shape index: {}]
  %s2 = inlined_call_operand.vmem [shape: f32[1,500], index: 2, kind: input, shape index: {}]
  %s3 = inlined_call_operand.vmem [shape: f32[500,128], index: 3, kind: input, shape index: {}]
  %s4 = inlined_call_operand.vmem [shape: f32[1,128], index: 4, kind: input, shape index: {}]
  %s5 = inlined_call_operand.hbm [shape: f32[2,128], index: 5, kind: output, shape index: {}]
  %s6 = sld [smem:[#allocation0]]
  $region30: #{net_forward.5} parent=0
    _
  %s8 = ssub.s32 1, %s6
  %s9 = scalar_select 0, %s8, %s6
  $region1: #{net_forward.5} parent=0
    #allocation2 [shape = 'u8[1024]{0}', space=vmem, size = 0x400, scoped, tag = 'output window, operand 0, single buffered']
    #allocation3 [shape = 's32[1]{0}', space=sflag, size = 0x4, scoped, tag = 'scoped memory for net_forward.5']
    %10 = vsyncpa [#allocation3], 0
    // Predicated region
    $region2: #{net_forward.5} parent=1 // pred_check
      _
    $region3: #{net_forward.5} parent=1 // pred_check_branch
      %12 = sbr.rel (0) target = $region5
    $region4: #{net_forward.5} parent=1 // pred_region
      _
    $region5: #{net_forward.5} parent=1 // pred_fallthru
      _
    // Predicated region
    $region6: #{net_forward.5} parent=1 // pred_check
      _
    $region7: #{net_forward.5} parent=1 // pred_check_branch
      %14 = sbr.rel (0) target = $region9
    $region8: #{net_forward.5} parent=1 // pred_region
      _
    $region9: #{net_forward.5} parent=1 // pred_fallthru
      _
    // Predicated region
    $region10: #{net_forward.5} parent=1 // pred_check
      _
    $region11: #{net_forward.5} parent=1 // pred_check_branch
      %16 = sbr.rel (0) target = $region13
    $region12: #{net_forward.5} parent=1 // pred_region
      _
    $region13: #{net_forward.5} parent=1 // pred_fallthru
      _
    // Predicated region
    $region14: #{net_forward.5} parent=1 // pred_check
      _
    $region15: #{net_forward.5} parent=1 // pred_check_branch
      %18 = sbr.rel (0) target = $region17
    $region16: #{net_forward.5} parent=1 // pred_region
      _
    $region17: #{net_forward.5} parent=1 // pred_fallthru
      _
    // Predicated region
    $region18: #{net_forward.5} parent=1 // pred_check
      _
    $region19: #{net_forward.5} parent=1 // pred_check_branch
      %20 = sbr.rel (0) target = $region21
    $region20: #{net_forward.5} parent=1 // pred_region
      _
    $region21: #{net_forward.5} parent=1 // pred_fallthru
      _
    %v21 = vld [vmem:[%s0] sm:$0xff]
    %v22 = vld [vmem:[%s0 + $0x8] sm:$0x3f]
    %v23 = vld [vmem:[%s1] sm:$0xff]
    %v24 = vld [vmem:[%s1 + $0x8] sm:$0xff]
    %v25 = vld [vmem:[%s1 + $0x10] sm:$0xff]
    %v26 = vld [vmem:[%s1 + $0x18] sm:$0xff]
    %v27 = vld [vmem:[%s1 + $0x20] sm:$0xff]
    %v28 = vld [vmem:[%s1 + $0x28] sm:$0xff]
    %v29 = vld [vmem:[%s1 + $0x30] sm:$0xff]
    %v30 = vld [vmem:[%s1 + $0x38] sm:$0xff]
    %v31 = vld [vmem:[%s1 + $0x40] sm:$0xff]
    %v32 = vld [vmem:[%s1 + $0x48] sm:$0xff]
    %v33 = vld [vmem:[%s1 + $0x50] sm:$0xff]
    %v34 = vld [vmem:[%s1 + $0x58] sm:$0xff]
    %v35 = vld [vmem:[%s1 + $0x60] sm:$0xff]
    %v36 = vld [vmem:[%s1 + $0x68] sm:$0xff]
    %v37 = vld [vmem:[%s1 + $0x70] sm:$0xff]
    %v38 = vld [vmem:[%s1 + $0x78] sm:$0xff]
    %v39 = vld [vmem:[%s1 + $0x80] sm:$0xff]
    %v40 = vld [vmem:[%s1 + $0x88] sm:$0xff]
    %v41 = vld [vmem:[%s1 + $0x90] sm:$0xff]
    %v42 = vld [vmem:[%s1 + $0x98] sm:$0xff]
    %v43 = vld [vmem:[%s1 + $0xa0] sm:$0xff]
    %v44 = vld [vmem:[%s1 + $0xa8] sm:$0xff]
    %v45 = vld [vmem:[%s1 + $0xb0] sm:$0xff]
    %v46 = vld [vmem:[%s1 + $0xb8] sm:$0xff]
    %v47 = vld [vmem:[%s1 + $0xc0] sm:$0xff]
    %v48 = vld [vmem:[%s1 + $0xc8] sm:$0xff]
    %v49 = vld [vmem:[%s1 + $0xd0] sm:$0xff]
    %v50 = vld [vmem:[%s1 + $0xd8] sm:$0xff]
    %v51 = vld [vmem:[%s1 + $0xe0] sm:$0xff]
    %v52 = vld [vmem:[%s1 + $0xe8] sm:$0xff]
    %v53 = vld [vmem:[%s1 + $0xf0] sm:$0xff]
    %v54 = vld [vmem:[%s1 + $0xf8] sm:$0xff]
    %v55 = vld [vmem:[%s1 + $0x100] sm:$0xff]
    %v56 = vld [vmem:[%s1 + $0x108] sm:$0xff]
    %v57 = vld [vmem:[%s1 + $0x110] sm:$0xff]
    %v58 = vld [vmem:[%s1 + $0x118] sm:$0xff]
    %v59 = vld [vmem:[%s1 + $0x120] sm:$0xff]
    %v60 = vld [vmem:[%s1 + $0x128] sm:$0xff]
    %v61 = vld [vmem:[%s1 + $0x130] sm:$0xff]
    %v62 = vld [vmem:[%s1 + $0x138] sm:$0xff]
    %v63 = vld [vmem:[%s1 + $0x140] sm:$0xff]
    %v64 = vld [vmem:[%s1 + $0x148] sm:$0xff]
    %v65 = vld [vmem:[%s1 + $0x150] sm:$0xff]
    %v66 = vld [vmem:[%s1 + $0x158] sm:$0xff]
    %v67 = vld [vmem:[%s1 + $0x160] sm:$0xff]
    %v68 = vld [vmem:[%s1 + $0x168] sm:$0xff]
    %v69 = vld [vmem:[%s1 + $0x170] sm:$0xff]
    %v70 = vld [vmem:[%s1 + $0x178] sm:$0xff]
    %v71 = vld [vmem:[%s1 + $0x180] sm:$0xff]
    %v72 = vld [vmem:[%s1 + $0x188] sm:$0xff]
    %v73 = vld [vmem:[%s1 + $0x190] sm:$0xff]
    %v74 = vld [vmem:[%s1 + $0x198] sm:$0xff]
    %v75 = vld [vmem:[%s1 + $0x1a0] sm:$0xff]
    %v76 = vld [vmem:[%s1 + $0x1a8] sm:$0xff]
    %v77 = vld [vmem:[%s1 + $0x1b0] sm:$0xff]
    %v78 = vld [vmem:[%s1 + $0x1b8] sm:$0xff]
    %v79 = vld [vmem:[%s1 + $0x1c0] sm:$0xff]
    %v80 = vld [vmem:[%s1 + $0x1c8] sm:$0xff]
    %v81 = vld [vmem:[%s1 + $0x1d0] sm:$0xff]
    %v82 = vld [vmem:[%s1 + $0x1d8] sm:$0xff]
    %v83 = vld [vmem:[%s1 + $0x1e0] sm:$0xff]
    %v84 = vld [vmem:[%s1 + $0x1e8] sm:$0xff]
    %v85 = vld [vmem:[%s1 + $0x1f0] sm:$0xff]
    %v86 = vld [vmem:[%s1 + $0x1f8] sm:$0xff]
    %v87 = vld [vmem:[%s1 + $0x200] sm:$0xff]
    %v88 = vld [vmem:[%s1 + $0x208] sm:$0xff]
    %v89 = vld [vmem:[%s1 + $0x210] sm:$0xff]
    %v90 = vld [vmem:[%s1 + $0x218] sm:$0xff]
    %v91 = vld [vmem:[%s1 + $0x220] sm:$0xff]
    %v92 = vld [vmem:[%s1 + $0x228] sm:$0xff]
    %v93 = vld [vmem:[%s1 + $0x230] sm:$0xff]
    %v94 = vld [vmem:[%s1 + $0x238] sm:$0xff]
    %v95 = vld [vmem:[%s1 + $0x240] sm:$0xff]
    %v96 = vld [vmem:[%s1 + $0x248] sm:$0xff]
    %v97 = vld [vmem:[%s1 + $0x250] sm:$0xff]
    %v98 = vld [vmem:[%s1 + $0x258] sm:$0xff]
    %v99 = vld [vmem:[%s1 + $0x260] sm:$0xff]
    %v100 = vld [vmem:[%s1 + $0x268] sm:$0xff]
    %v101 = vld [vmem:[%s1 + $0x270] sm:$0xff]
    %v102 = vld [vmem:[%s1 + $0x278] sm:$0xff]
    %v103 = vld [vmem:[%s1 + $0x280] sm:$0xff]
    %v104 = vld [vmem:[%s1 + $0x288] sm:$0xff]
    %v105 = vld [vmem:[%s1 + $0x290] sm:$0xff]
    %v106 = vld [vmem:[%s1 + $0x298] sm:$0xff]
    %v107 = vld [vmem:[%s1 + $0x2a0] sm:$0xff]
    %v108 = vld [vmem:[%s1 + $0x2a8] sm:$0xff]
    %v109 = vld [vmem:[%s1 + $0x2b0] sm:$0xff]
    %v110 = vld [vmem:[%s1 + $0x2b8] sm:$0xff]
    %v111 = vld [vmem:[%s1 + $0x2c0] sm:$0xff]
    %v112 = vld [vmem:[%s1 + $0x2c8] sm:$0xff]
    %v113 = vld [vmem:[%s1 + $0x2d0] sm:$0xff]
    %v114 = vld [vmem:[%s1 + $0x2d8] sm:$0xff]
    %v115 = vld [vmem:[%s1 + $0x2e0] sm:$0xff]
    %v116 = vld [vmem:[%s1 + $0x2e8] sm:$0xff]
    %v117 = vld [vmem:[%s1 + $0x2f0] sm:$0xff]
    %v118 = vld [vmem:[%s1 + $0x2f8] sm:$0xff]
    %v119 = vld [vmem:[%s1 + $0x300] sm:$0xff]
    %v120 = vld [vmem:[%s1 + $0x308] sm:$0xff]
    %v121 = vld [vmem:[%s1 + $0x310] sm:$0xff]
    %v122 = vld [vmem:[%s1 + $0x318] sm:$0xff]
    %v123 = vld [vmem:[%s1 + $0x320] sm:$0xff]
    %v124 = vld [vmem:[%s1 + $0x328] sm:$0xff]
    %v125 = vld [vmem:[%s1 + $0x330] sm:$0xff]
    %v126 = vld [vmem:[%s1 + $0x338] sm:$0xff]
    %v127 = vld [vmem:[%s1 + $0x340] sm:$0xff]
    %v128 = vld [vmem:[%s1 + $0x348] sm:$0xff]
    %v129 = vld [vmem:[%s1 + $0x350] sm:$0xff]
    %v130 = vld [vmem:[%s1 + $0x358] sm:$0xff]
    %v131 = vld [vmem:[%s1 + $0x360] sm:$0xff]
    %v132 = vld [vmem:[%s1 + $0x368] sm:$0xff]
    %v133 = vld [vmem:[%s1 + $0x370] sm:$0xff]
    %v134 = vld [vmem:[%s1 + $0x378] sm:$0xff]
    %v135 = vld [vmem:[%s1 + $0x380] sm:$0xff]
    %v136 = vld [vmem:[%s1 + $0x388] sm:$0xff]
    %v137 = vld [vmem:[%s1 + $0x390] sm:$0xff]
    %v138 = vld [vmem:[%s1 + $0x398] sm:$0xff]
    %v139 = vld [vmem:[%s1 + $0x3a0] sm:$0xff]
    %v140 = vld [vmem:[%s1 + $0x3a8] sm:$0xff]
    %v141 = vld [vmem:[%s1 + $0x3b0] sm:$0xff]
    %v142 = vld [vmem:[%s1 + $0x3b8] sm:$0xff]
    %v143 = vld [vmem:[%s1 + $0x3c0] sm:$0xff]
    %v144 = vld [vmem:[%s1 + $0x3c8] sm:$0xff]
    %v145 = vld [vmem:[%s1 + $0x3d0] sm:$0xff]
    %v146 = vld [vmem:[%s1 + $0x3d8] sm:$0xff]
    %v147 = vld [vmem:[%s1 + $0x3e0] sm:$0xff]
    %v148 = vld [vmem:[%s1 + $0x3e8] sm:$0xff]
    %v149 = vld [vmem:[%s1 + $0x3f0] sm:$0xff]
    %v150 = vld [vmem:[%s1 + $0x3f8] sm:$0xff]
    %v151 = vld [vmem:[%s1 + $0x400] sm:$0xff]
    %v152 = vld [vmem:[%s1 + $0x408] sm:$0xff]
    %v153 = vld [vmem:[%s1 + $0x410] sm:$0xff]
    %v154 = vld [vmem:[%s1 + $0x418] sm:$0xff]
    %v155 = vld [vmem:[%s1 + $0x420] sm:$0xff]
    %v156 = vld [vmem:[%s1 + $0x428] sm:$0xff]
    %v157 = vld [vmem:[%s1 + $0x430] sm:$0xff]
    %v158 = vld [vmem:[%s1 + $0x438] sm:$0xff]
    %v159 = vld [vmem:[%s1 + $0x440] sm:$0xff]
    %v160 = vld [vmem:[%s1 + $0x448] sm:$0xff]
    %v161 = vld [vmem:[%s1 + $0x450] sm:$0xff]
    %v162 = vld [vmem:[%s1 + $0x458] sm:$0xff]
    %v163 = vld [vmem:[%s1 + $0x460] sm:$0xff]
    %v164 = vld [vmem:[%s1 + $0x468] sm:$0xff]
    %v165 = vld [vmem:[%s1 + $0x470] sm:$0xff]
    %v166 = vld [vmem:[%s1 + $0x478] sm:$0xff]
    %v167 = vld [vmem:[%s1 + $0x480] sm:$0xff]
    %v168 = vld [vmem:[%s1 + $0x488] sm:$0xff]
    %v169 = vld [vmem:[%s1 + $0x490] sm:$0xff]
    %v170 = vld [vmem:[%s1 + $0x498] sm:$0xff]
    %v171 = vld [vmem:[%s1 + $0x4a0] sm:$0xff]
    %v172 = vld [vmem:[%s1 + $0x4a8] sm:$0xff]
    %v173 = vld [vmem:[%s1 + $0x4b0] sm:$0xff]
    %v174 = vld [vmem:[%s1 + $0x4b8] sm:$0xff]
    %v175 = vld [vmem:[%s1 + $0x4c0] sm:$0xff]
    %v176 = vld [vmem:[%s1 + $0x4c8] sm:$0xff]
    %v177 = vld [vmem:[%s1 + $0x4d0] sm:$0xff]
    %v178 = vld [vmem:[%s1 + $0x4d8] sm:$0xff]
    %v179 = vld [vmem:[%s1 + $0x4e0] sm:$0xff]
    %v180 = vld [vmem:[%s1 + $0x4e8] sm:$0xff]
    %v181 = vld [vmem:[%s1 + $0x4f0] sm:$0xff]
    %v182 = vld [vmem:[%s1 + $0x4f8] sm:$0xff]
    %v183 = vld [vmem:[%s1 + $0x500] sm:$0xff]
    %v184 = vld [vmem:[%s1 + $0x508] sm:$0xff]
    %v185 = vld [vmem:[%s1 + $0x510] sm:$0xff]
    %v186 = vld [vmem:[%s1 + $0x518] sm:$0xff]
    %v187 = vld [vmem:[%s1 + $0x520] sm:$0xff]
    %v188 = vld [vmem:[%s1 + $0x528] sm:$0xff]
    %v189 = vld [vmem:[%s1 + $0x530] sm:$0xff]
    %v190 = vld [vmem:[%s1 + $0x538] sm:$0xff]
    %v191 = vld [vmem:[%s1 + $0x540] sm:$0xff]
    %v192 = vld [vmem:[%s1 + $0x548] sm:$0xff]
    %v193 = vld [vmem:[%s1 + $0x550] sm:$0xff]
    %v194 = vld [vmem:[%s1 + $0x558] sm:$0xff]
    %v195 = vld [vmem:[%s1 + $0x560] sm:$0xff]
    %v196 = vld [vmem:[%s1 + $0x568] sm:$0xff]
    %v197 = vld [vmem:[%s1 + $0x570] sm:$0xff]
    %v198 = vld [vmem:[%s1 + $0x578] sm:$0xff]
    %v199 = vld [vmem:[%s1 + $0x580] sm:$0xff]
    %v200 = vld [vmem:[%s1 + $0x588] sm:$0xff]
    %v201 = vld [vmem:[%s1 + $0x590] sm:$0xff]
    %v202 = vld [vmem:[%s1 + $0x598] sm:$0xff]
    %v203 = vld [vmem:[%s1 + $0x5a0] sm:$0xff]
    %v204 = vld [vmem:[%s1 + $0x5a8] sm:$0xff]
    %v205 = vld [vmem:[%s1 + $0x5b0] sm:$0xff]
    %v206 = vld [vmem:[%s1 + $0x5b8] sm:$0xff]
    %v207 = vld [vmem:[%s1 + $0x5c0] sm:$0xff]
    %v208 = vld [vmem:[%s1 + $0x5c8] sm:$0xff]
    %v209 = vld [vmem:[%s1 + $0x5d0] sm:$0xff]
    %v210 = vld [vmem:[%s1 + $0x5d8] sm:$0xff]
    %v211 = vld [vmem:[%s1 + $0x5e0] sm:$0xff]
    %v212 = vld [vmem:[%s1 + $0x5e8] sm:$0xff]
    %v213 = vld [vmem:[%s1 + $0x5f0] sm:$0xff]
    %v214 = vld [vmem:[%s1 + $0x5f8] sm:$0xff]
    %v215 = vld [vmem:[%s1 + $0x600] sm:$0xff]
    %v216 = vld [vmem:[%s1 + $0x608] sm:$0xff]
    %v217 = vld [vmem:[%s1 + $0x610] sm:$0xff]
    %v218 = vld [vmem:[%s1 + $0x618] sm:$0xff]
    %v219 = vld [vmem:[%s1 + $0x620] sm:$0xff]
    %v220 = vld [vmem:[%s1 + $0x628] sm:$0xff]
    %v221 = vld [vmem:[%s1 + $0x630] sm:$0xff]
    %v222 = vld [vmem:[%s1 + $0x638] sm:$0xff]
    %v223 = vld [vmem:[%s1 + $0x640] sm:$0xff]
    %v224 = vld [vmem:[%s1 + $0x648] sm:$0xff]
    %v225 = vld [vmem:[%s1 + $0x650] sm:$0xff]
    %v226 = vld [vmem:[%s1 + $0x658] sm:$0xff]
    %v227 = vld [vmem:[%s1 + $0x660] sm:$0xff]
    %v228 = vld [vmem:[%s1 + $0x668] sm:$0xff]
    %v229 = vld [vmem:[%s1 + $0x670] sm:$0xff]
    %v230 = vld [vmem:[%s1 + $0x678] sm:$0xff]
    %v231 = vld [vmem:[%s1 + $0x680] sm:$0xff]
    %v232 = vld [vmem:[%s1 + $0x688] sm:$0xff]
    %v233 = vld [vmem:[%s1 + $0x690] sm:$0xff]
    %v234 = vld [vmem:[%s1 + $0x698] sm:$0xff]
    %v235 = vld [vmem:[%s1 + $0x6a0] sm:$0xff]
    %v236 = vld [vmem:[%s1 + $0x6a8] sm:$0xff]
    %v237 = vld [vmem:[%s1 + $0x6b0] sm:$0xff]
    %v238 = vld [vmem:[%s1 + $0x6b8] sm:$0xff]
    %v239 = vld [vmem:[%s1 + $0x6c0] sm:$0xff]
    %v240 = vld [vmem:[%s1 + $0x6c8] sm:$0xff]
    %v241 = vld [vmem:[%s1 + $0x6d0] sm:$0xff]
    %v242 = vld [vmem:[%s1 + $0x6d8] sm:$0xff]
    %v243 = vld [vmem:[%s1 + $0x6e0] sm:$0xff]
    %v244 = vld [vmem:[%s1 + $0x6e8] sm:$0xff]
    %v245 = vld [vmem:[%s1 + $0x6f0] sm:$0xff]
    %v246 = vld [vmem:[%s1 + $0x6f8] sm:$0xff]
    %v247 = vld [vmem:[%s1 + $0x700] sm:$0xff]
    %v248 = vld [vmem:[%s1 + $0x708] sm:$0xff]
    %v249 = vld [vmem:[%s1 + $0x710] sm:$0xff]
    %v250 = vld [vmem:[%s1 + $0x718] sm:$0xff]
    %v251 = vld [vmem:[%s1 + $0x720] sm:$0xff]
    %v252 = vld [vmem:[%s1 + $0x728] sm:$0xff]
    %v253 = vld [vmem:[%s1 + $0x730] sm:$0xff]
    %v254 = vld [vmem:[%s1 + $0x738] sm:$0xff]
    %v255 = vld [vmem:[%s1 + $0x740] sm:$0xff]
    %v256 = vld [vmem:[%s1 + $0x748] sm:$0xff]
    %v257 = vld [vmem:[%s1 + $0x750] sm:$0xff]
    %v258 = vld [vmem:[%s1 + $0x758] sm:$0xff]
    %v259 = vld [vmem:[%s1 + $0x760] sm:$0xff]
    %v260 = vld [vmem:[%s1 + $0x768] sm:$0xff]
    %v261 = vld [vmem:[%s1 + $0x770] sm:$0xff]
    %v262 = vld [vmem:[%s1 + $0x778] sm:$0xff]
    %v263 = vld [vmem:[%s1 + $0x780] sm:$0xff]
    %v264 = vld [vmem:[%s1 + $0x788] sm:$0xff]
    %v265 = vld [vmem:[%s1 + $0x790] sm:$0xff]
    %v266 = vld [vmem:[%s1 + $0x798] sm:$0xff]
    %v267 = vld [vmem:[%s1 + $0x7a0] sm:$0xff]
    %v268 = vld [vmem:[%s1 + $0x7a8] sm:$0xff]
    %v269 = vld [vmem:[%s1 + $0x7b0] sm:$0xff]
    %v270 = vld [vmem:[%s1 + $0x7b8] sm:$0xff]
    %v271 = vld [vmem:[%s1 + $0x7c0] sm:$0xff]
    %v272 = vld [vmem:[%s1 + $0x7c8] sm:$0xff]
    %v273 = vld [vmem:[%s1 + $0x7d0] sm:$0xff]
    %v274 = vld [vmem:[%s1 + $0x7d8] sm:$0xff]
    %v275 = vld [vmem:[%s1 + $0x7e0] sm:$0xff]
    %v276 = vld [vmem:[%s1 + $0x7e8] sm:$0xff]
    %v277 = vld [vmem:[%s1 + $0x7f0] sm:$0xff]
    %v278 = vld [vmem:[%s1 + $0x7f8] sm:$0xff]
    %v279 = vld [vmem:[%s1 + $0x800] sm:$0xff]
    %v280 = vld [vmem:[%s1 + $0x808] sm:$0xff]
    %v281 = vld [vmem:[%s1 + $0x810] sm:$0xff]
    %v282 = vld [vmem:[%s1 + $0x818] sm:$0xff]
    %v283 = vld [vmem:[%s1 + $0x820] sm:$0xff]
    %v284 = vld [vmem:[%s1 + $0x828] sm:$0xff]
    %v285 = vld [vmem:[%s1 + $0x830] sm:$0xff]
    %v286 = vld [vmem:[%s1 + $0x838] sm:$0xff]
    %v287 = vld [vmem:[%s1 + $0x840] sm:$0xff]
    %v288 = vld [vmem:[%s1 + $0x848] sm:$0xff]
    %v289 = vld [vmem:[%s1 + $0x850] sm:$0xff]
    %v290 = vld [vmem:[%s1 + $0x858] sm:$0xff]
    %v291 = vld [vmem:[%s1 + $0x860] sm:$0xff]
    %v292 = vld [vmem:[%s1 + $0x868] sm:$0xff]
    %v293 = vld [vmem:[%s1 + $0x870] sm:$0xff]
    %v294 = vld [vmem:[%s1 + $0x878] sm:$0xff]
    %v295 = vld [vmem:[%s1 + $0x880] sm:$0xff]
    %v296 = vld [vmem:[%s1 + $0x888] sm:$0xff]
    %v297 = vld [vmem:[%s1 + $0x890] sm:$0xff]
    %v298 = vld [vmem:[%s1 + $0x898] sm:$0xff]
    %v299 = vld [vmem:[%s1 + $0x8a0] sm:$0xff]
    %v300 = vld [vmem:[%s1 + $0x8a8] sm:$0xff]
    %v301 = vld [vmem:[%s1 + $0x8b0] sm:$0xff]
    %v302 = vld [vmem:[%s1 + $0x8b8] sm:$0xff]
    %v303 = vld [vmem:[%s1 + $0x8c0] sm:$0xff]
    %v304 = vld [vmem:[%s1 + $0x8c8] sm:$0xff]
    %v305 = vld [vmem:[%s1 + $0x8d0] sm:$0xff]
    %v306 = vld [vmem:[%s1 + $0x8d8] sm:$0xff]
    %v307 = vld [vmem:[%s1 + $0x8e0] sm:$0xff]
    %v308 = vld [vmem:[%s1 + $0x8e8] sm:$0xff]
    %v309 = vld [vmem:[%s1 + $0x8f0] sm:$0xff]
    %v310 = vld [vmem:[%s1 + $0x8f8] sm:$0xff]
    %v311 = vld [vmem:[%s1 + $0x900] sm:$0xff]
    %v312 = vld [vmem:[%s1 + $0x908] sm:$0xff]
    %v313 = vld [vmem:[%s1 + $0x910] sm:$0xff]
    %v314 = vld [vmem:[%s1 + $0x918] sm:$0xff]
    %v315 = vld [vmem:[%s1 + $0x920] sm:$0xff]
    %v316 = vld [vmem:[%s1 + $0x928] sm:$0xff]
    %v317 = vld [vmem:[%s1 + $0x930] sm:$0xff]
    %v318 = vld [vmem:[%s1 + $0x938] sm:$0xff]
    %v319 = vld [vmem:[%s1 + $0x940] sm:$0xff]
    %v320 = vld [vmem:[%s1 + $0x948] sm:$0xff]
    %v321 = vld [vmem:[%s1 + $0x950] sm:$0xff]
    %v322 = vld [vmem:[%s1 + $0x958] sm:$0xff]
    %v323 = vld [vmem:[%s1 + $0x960] sm:$0xff]
    %v324 = vld [vmem:[%s1 + $0x968] sm:$0xff]
    %v325 = vld [vmem:[%s1 + $0x970] sm:$0xff]
    %v326 = vld [vmem:[%s1 + $0x978] sm:$0xff]
    %v327 = vld [vmem:[%s1 + $0x980] sm:$0xff]
    %v328 = vld [vmem:[%s1 + $0x988] sm:$0xff]
    %v329 = vld [vmem:[%s1 + $0x990] sm:$0xff]
    %v330 = vld [vmem:[%s1 + $0x998] sm:$0xff]
    %v331 = vld [vmem:[%s1 + $0x9a0] sm:$0xff]
    %v332 = vld [vmem:[%s1 + $0x9a8] sm:$0xff]
    %v333 = vld [vmem:[%s1 + $0x9b0] sm:$0xff]
    %v334 = vld [vmem:[%s1 + $0x9b8] sm:$0xff]
    %v335 = vld [vmem:[%s1 + $0x9c0] sm:$0xff]
    %v336 = vld [vmem:[%s1 + $0x9c8] sm:$0xff]
    %v337 = vld [vmem:[%s1 + $0x9d0] sm:$0xff]
    %v338 = vld [vmem:[%s1 + $0x9d8] sm:$0xff]
    %v339 = vld [vmem:[%s1 + $0x9e0] sm:$0xff]
    %v340 = vld [vmem:[%s1 + $0x9e8] sm:$0xff]
    %v341 = vld [vmem:[%s1 + $0x9f0] sm:$0xff]
    %v342 = vld [vmem:[%s1 + $0x9f8] sm:$0xff]
    %v343 = vld [vmem:[%s1 + $0xa00] sm:$0xff]
    %v344 = vld [vmem:[%s1 + $0xa08] sm:$0xff]
    %v345 = vld [vmem:[%s1 + $0xa10] sm:$0xff]
    %v346 = vld [vmem:[%s1 + $0xa18] sm:$0xff]
    %v347 = vld [vmem:[%s1 + $0xa20] sm:$0xff]
    %v348 = vld [vmem:[%s1 + $0xa28] sm:$0xff]
    %v349 = vld [vmem:[%s1 + $0xa30] sm:$0xff]
    %v350 = vld [vmem:[%s1 + $0xa38] sm:$0xff]
    %v351 = vld [vmem:[%s1 + $0xa40] sm:$0xff]
    %v352 = vld [vmem:[%s1 + $0xa48] sm:$0xff]
    %v353 = vld [vmem:[%s1 + $0xa50] sm:$0xff]
    %v354 = vld [vmem:[%s1 + $0xa58] sm:$0xff]
    %v355 = vld [vmem:[%s1 + $0xa60] sm:$0xff]
    %v356 = vld [vmem:[%s1 + $0xa68] sm:$0xff]
    %v357 = vld [vmem:[%s1 + $0xa70] sm:$0xff]
    %v358 = vld [vmem:[%s1 + $0xa78] sm:$0xff]
    %v359 = vld [vmem:[%s1 + $0xa80] sm:$0xff]
    %v360 = vld [vmem:[%s1 + $0xa88] sm:$0xff]
    %v361 = vld [vmem:[%s1 + $0xa90] sm:$0xff]
    %v362 = vld [vmem:[%s1 + $0xa98] sm:$0xff]
    %v363 = vld [vmem:[%s1 + $0xaa0] sm:$0xff]
    %v364 = vld [vmem:[%s1 + $0xaa8] sm:$0xff]
    %v365 = vld [vmem:[%s1 + $0xab0] sm:$0xff]
    %v366 = vld [vmem:[%s1 + $0xab8] sm:$0xff]
    %v367 = vld [vmem:[%s1 + $0xac0] sm:$0xff]
    %v368 = vld [vmem:[%s1 + $0xac8] sm:$0xff]
    %v369 = vld [vmem:[%s1 + $0xad0] sm:$0xff]
    %v370 = vld [vmem:[%s1 + $0xad8] sm:$0xff]
    %v371 = vld [vmem:[%s1 + $0xae0] sm:$0xff]
    %v372 = vld [vmem:[%s1 + $0xae8] sm:$0xff]
    %v373 = vld [vmem:[%s1 + $0xaf0] sm:$0xff]
    %v374 = vld [vmem:[%s1 + $0xaf8] sm:$0xff]
    %v375 = vld [vmem:[%s1 + $0xb00] sm:$0xff]
    %v376 = vld [vmem:[%s1 + $0xb08] sm:$0xff]
    %v377 = vld [vmem:[%s1 + $0xb10] sm:$0xff]
    %v378 = vld [vmem:[%s1 + $0xb18] sm:$0xff]
    %v379 = vld [vmem:[%s1 + $0xb20] sm:$0xff]
    %v380 = vld [vmem:[%s1 + $0xb28] sm:$0xff]
    %v381 = vld [vmem:[%s1 + $0xb30] sm:$0xff]
    %v382 = vld [vmem:[%s1 + $0xb38] sm:$0xff]
    %v383 = vld [vmem:[%s1 + $0xb40] sm:$0xff]
    %v384 = vld [vmem:[%s1 + $0xb48] sm:$0xff]
    %v385 = vld [vmem:[%s1 + $0xb50] sm:$0xff]
    %v386 = vld [vmem:[%s1 + $0xb58] sm:$0xff]
    %v387 = vld [vmem:[%s1 + $0xb60] sm:$0xff]
    %v388 = vld [vmem:[%s1 + $0xb68] sm:$0xff]
    %v389 = vld [vmem:[%s1 + $0xb70] sm:$0xff]
    %v390 = vld [vmem:[%s1 + $0xb78] sm:$0xff]
    %v391 = vld [vmem:[%s1 + $0xb80] sm:$0xff]
    %v392 = vld [vmem:[%s1 + $0xb88] sm:$0xff]
    %v393 = vld [vmem:[%s1 + $0xb90] sm:$0xff]
    %v394 = vld [vmem:[%s1 + $0xb98] sm:$0xff]
    %v395 = vld [vmem:[%s1 + $0xba0] sm:$0xff]
    %v396 = vld [vmem:[%s1 + $0xba8] sm:$0xff]
    %v397 = vld [vmem:[%s1 + $0xbb0] sm:$0xff]
    %v398 = vld [vmem:[%s1 + $0xbb8] sm:$0xff]
    %v399 = vld [vmem:[%s1 + $0xbc0] sm:$0xff]
    %v400 = vld [vmem:[%s1 + $0xbc8] sm:$0xff]
    %v401 = vld [vmem:[%s1 + $0xbd0] sm:$0xff]
    %v402 = vld [vmem:[%s1 + $0xbd8] sm:$0xff]
    %v403 = vld [vmem:[%s1 + $0xbe0] sm:$0xff]
    %v404 = vld [vmem:[%s1 + $0xbe8] sm:$0xff]
    %v405 = vld [vmem:[%s1 + $0xbf0] sm:$0xff]
    %v406 = vld [vmem:[%s1 + $0xbf8] sm:$0xff]
    %v407 = vld [vmem:[%s1 + $0xc00] sm:$0xff]
    %v408 = vld [vmem:[%s1 + $0xc08] sm:$0xff]
    %v409 = vld [vmem:[%s1 + $0xc10] sm:$0xff]
    %v410 = vld [vmem:[%s1 + $0xc18] sm:$0xff]
    %v411 = vld [vmem:[%s1 + $0xc20] sm:$0xff]
    %v412 = vld [vmem:[%s1 + $0xc28] sm:$0xff]
    %v413 = vld [vmem:[%s1 + $0xc30] sm:$0xff]
    %v414 = vld [vmem:[%s1 + $0xc38] sm:$0xff]
    %v415 = vld [vmem:[%s1 + $0xc40] sm:$0xff]
    %v416 = vld [vmem:[%s1 + $0xc48] sm:$0xff]
    %v417 = vld [vmem:[%s1 + $0xc50] sm:$0xff]
    %v418 = vld [vmem:[%s1 + $0xc58] sm:$0xff]
    %v419 = vld [vmem:[%s1 + $0xc60] sm:$0xff]
    %v420 = vld [vmem:[%s1 + $0xc68] sm:$0xff]
    %v421 = vld [vmem:[%s1 + $0xc70] sm:$0xff]
    %v422 = vld [vmem:[%s1 + $0xc78] sm:$0xff]
    %v423 = vld [vmem:[%s2] sm:$0xf]
    %v425 = vperm.slane %v423, 0
    %v426 = vperm.slane %v423, 1
    %v427 = vperm.slane %v423, 2
    %v428 = vperm.slane %v423, 3
    %435 = vst [vmem:[#allocation1] ss:$4 sm:$0xff] %v21
    %s436 = scalar_lea.vmem [#allocation1], 32
    %437 = vst [vmem:[%s436] ss:$4 sm:$0xff] %v22
    %v438 = vld.sshfl [vmem:[#allocation1] sm:$0xff pattern:$0x73625140]
    %v439 = vld.sshfl [vmem:[#allocation1 + $0x8] sm:$0xff pattern:$0x73625140]
    %v440 = vld.sshfl [vmem:[#allocation1 + $0x10] sm:$0xff pattern:$0x73625140]
    %v441 = vld.sshfl [vmem:[#allocation1 + $0x18] sm:$0xff pattern:$0x73625140]
    %v442 = vld.sshfl [vmem:[#allocation1 + $0x20] sm:$0xff pattern:$0x73625140]
    %v443 = vld.sshfl [vmem:[#allocation1 + $0x28] sm:$0xff pattern:$0x73625140]
    %v444 = vld.sshfl [vmem:[#allocation1 + $0x30] sm:$0xff pattern:$0x73625140]
    %vm451 = vcmask 261120
    %v452 = vsel %vm451, %v444, 0
    %454 = vmatpush.msra.mxu0 %v83
    %455 = vmatpush.msra.mxu0 %v79
    %456 = vmatpush.msra.mxu0 %v75
    %457 = vmatpush.msra.mxu0 %v71
    %458 = vmatpush.msra.mxu0 %v67
    %459 = vmatpush.msra.mxu0 %v63
    %460 = vmatpush.msra.mxu0 %v59
    %461 = vmatpush.msra.mxu0 %v55
    %462 = vmatpush.msra.mxu0 %v51
    %463 = vmatpush.msra.mxu0 %v47
    %464 = vmatpush.msra.mxu0 %v43
    %465 = vmatpush.msra.mxu0 %v39
    %466 = vmatpush.msra.mxu0 %v35
    %467 = vmatpush.msra.mxu0 %v31
    %468 = vmatpush.msra.mxu0 %v27
    %469 = vmatpush.msra.mxu0 %v23
    %470 = vmatmul.f32.gmra.mxu0 %v438
    %v471 = vpop.f32.mrf.mxu0
    %v472 = vadd.f32 %v425, %v471
    %473 = vdwg.mxu0
    %474 = vmatpush.msra.mxu0 %v147
    %475 = vmatpush.msra.mxu0 %v143
    %476 = vmatpush.msra.mxu0 %v139
    %477 = vmatpush.msra.mxu0 %v135
    %478 = vmatpush.msra.mxu0 %v131
    %479 = vmatpush.msra.mxu0 %v127
    %480 = vmatpush.msra.mxu0 %v123
    %481 = vmatpush.msra.mxu0 %v119
    %482 = vmatpush.msra.mxu0 %v115
    %483 = vmatpush.msra.mxu0 %v111
    %484 = vmatpush.msra.mxu0 %v107
    %485 = vmatpush.msra.mxu0 %v103
    %486 = vmatpush.msra.mxu0 %v99
    %487 = vmatpush.msra.mxu0 %v95
    %488 = vmatpush.msra.mxu0 %v91
    %489 = vmatpush.msra.mxu0 %v87
    %490 = vmatmul.f32.gmra.mxu0 %v439
    %v491 = vpop.f32.mrf.mxu0
    %v492 = vadd.f32 %v472, %v491
    %493 = vdwg.mxu0
    %494 = vmatpush.msra.mxu0 %v211
    %495 = vmatpush.msra.mxu0 %v207
    %496 = vmatpush.msra.mxu0 %v203
    %497 = vmatpush.msra.mxu0 %v199
    %498 = vmatpush.msra.mxu0 %v195
    %499 = vmatpush.msra.mxu0 %v191
    %500 = vmatpush.msra.mxu0 %v187
    %501 = vmatpush.msra.mxu0 %v183
    %502 = vmatpush.msra.mxu0 %v179
    %503 = vmatpush.msra.mxu0 %v175
    %504 = vmatpush.msra.mxu0 %v171
    %505 = vmatpush.msra.mxu0 %v167
    %506 = vmatpush.msra.mxu0 %v163
    %507 = vmatpush.msra.mxu0 %v159
    %508 = vmatpush.msra.mxu0 %v155
    %509 = vmatpush.msra.mxu0 %v151
    %510 = vmatmul.f32.gmra.mxu0 %v440
    %v511 = vpop.f32.mrf.mxu0
    %v512 = vadd.f32 %v492, %v511
    %513 = vdwg.mxu0
    %514 = vmatpush.msra.mxu0 %v275
    %515 = vmatpush.msra.mxu0 %v271
    %516 = vmatpush.msra.mxu0 %v267
    %517 = vmatpush.msra.mxu0 %v263
    %518 = vmatpush.msra.mxu0 %v259
    %519 = vmatpush.msra.mxu0 %v255
    %520 = vmatpush.msra.mxu0 %v251
    %521 = vmatpush.msra.mxu0 %v247
    %522 = vmatpush.msra.mxu0 %v243
    %523 = vmatpush.msra.mxu0 %v239
    %524 = vmatpush.msra.mxu0 %v235
    %525 = vmatpush.msra.mxu0 %v231
    %526 = vmatpush.msra.mxu0 %v227
    %527 = vmatpush.msra.mxu0 %v223
    %528 = vmatpush.msra.mxu0 %v219
    %529 = vmatpush.msra.mxu0 %v215
    %530 = vmatmul.f32.gmra.mxu0 %v441
    %v531 = vpop.f32.mrf.mxu0
    %v532 = vadd.f32 %v512, %v531
    %533 = vdwg.mxu0
    %534 = vmatpush.msra.mxu0 %v339
    %535 = vmatpush.msra.mxu0 %v335
    %536 = vmatpush.msra.mxu0 %v331
    %537 = vmatpush.msra.mxu0 %v327
    %538 = vmatpush.msra.mxu0 %v323
    %539 = vmatpush.msra.mxu0 %v319
    %540 = vmatpush.msra.mxu0 %v315
    %541 = vmatpush.msra.mxu0 %v311
    %542 = vmatpush.msra.mxu0 %v307
    %543 = vmatpush.msra.mxu0 %v303
    %544 = vmatpush.msra.mxu0 %v299
    %545 = vmatpush.msra.mxu0 %v295
    %546 = vmatpush.msra.mxu0 %v291
    %547 = vmatpush.msra.mxu0 %v287
    %548 = vmatpush.msra.mxu0 %v283
    %549 = vmatpush.msra.mxu0 %v279
    %550 = vmatmul.f32.gmra.mxu0 %v442
    %v551 = vpop.f32.mrf.mxu0
    %v552 = vadd.f32 %v532, %v551
    %553 = vdwg.mxu0
    %554 = vmatpush.msra.mxu0 %v403
    %555 = vmatpush.msra.mxu0 %v399
    %556 = vmatpush.msra.mxu0 %v395
    %557 = vmatpush.msra.mxu0 %v391
    %558 = vmatpush.msra.mxu0 %v387
    %559 = vmatpush.msra.mxu0 %v383
    %560 = vmatpush.msra.mxu0 %v379
    %561 = vmatpush.msra.mxu0 %v375
    %562 = vmatpush.msra.mxu0 %v371
    %563 = vmatpush.msra.mxu0 %v367
    %564 = vmatpush.msra.mxu0 %v363
    %565 = vmatpush.msra.mxu0 %v359
    %566 = vmatpush.msra.mxu0 %v355
    %567 = vmatpush.msra.mxu0 %v351
    %568 = vmatpush.msra.mxu0 %v347
    %569 = vmatpush.msra.mxu0 %v343
    %570 = vmatmul.f32.gmra.mxu0 %v443
    %v571 = vpop.f32.mrf.mxu0
    %v572 = vadd.f32 %v552, %v571
    %573 = vdwg.mxu0
    %574 = vmatpush.msra.mxu0 0.0
    %575 = vmatpush.msra.mxu0 0.0
    %576 = vmatpush.msra.mxu0 0.0
    %577 = vmatpush.msra.mxu0 0.0
    %578 = vmatpush.msra.mxu0 0.0
    %579 = vmatpush.msra.mxu0 0.0
    %580 = vmatpush.msra.mxu0 0.0
    %581 = vmatpush.msra.mxu0 0.0
    %582 = vmatpush.msra.mxu0 0.0
    %583 = vmatpush.msra.mxu0 0.0
    %584 = vmatpush.msra.mxu0 0.0
    %585 = vmatpush.msra.mxu0 0.0
    %586 = vmatpush.msra.mxu0 %v419
    %587 = vmatpush.msra.mxu0 %v415
    %588 = vmatpush.msra.mxu0 %v411
    %589 = vmatpush.msra.mxu0 %v407
    %590 = vmatmul.f32.gmra.mxu0 %v452
    %v591 = vpop.f32.mrf.mxu0
    %v592 = vadd.f32 %v572, %v591
    %593 = vdwg.mxu0
    %594 = vmatpush.msra.mxu0 %v84
    %595 = vmatpush.msra.mxu0 %v80
    %596 = vmatpush.msra.mxu0 %v76
    %597 = vmatpush.msra.mxu0 %v72
    %598 = vmatpush.msra.mxu0 %v68
    %599 = vmatpush.msra.mxu0 %v64
    %600 = vmatpush.msra.mxu0 %v60
    %601 = vmatpush.msra.mxu0 %v56
    %602 = vmatpush.msra.mxu0 %v52
    %603 = vmatpush.msra.mxu0 %v48
    %604 = vmatpush.msra.mxu0 %v44
    %605 = vmatpush.msra.mxu0 %v40
    %606 = vmatpush.msra.mxu0 %v36
    %607 = vmatpush.msra.mxu0 %v32
    %608 = vmatpush.msra.mxu0 %v28
    %609 = vmatpush.msra.mxu0 %v24
    %610 = vmatmul.f32.gmra.mxu0 %v438
    %v611 = vpop.f32.mrf.mxu0
    %v612 = vadd.f32 %v426, %v611
    %613 = vdwg.mxu0
    %614 = vmatpush.msra.mxu0 %v148
    %615 = vmatpush.msra.mxu0 %v144
    %616 = vmatpush.msra.mxu0 %v140
    %617 = vmatpush.msra.mxu0 %v136
    %618 = vmatpush.msra.mxu0 %v132
    %619 = vmatpush.msra.mxu0 %v128
    %620 = vmatpush.msra.mxu0 %v124
    %621 = vmatpush.msra.mxu0 %v120
    %622 = vmatpush.msra.mxu0 %v116
    %623 = vmatpush.msra.mxu0 %v112
    %624 = vmatpush.msra.mxu0 %v108
    %625 = vmatpush.msra.mxu0 %v104
    %626 = vmatpush.msra.mxu0 %v100
    %627 = vmatpush.msra.mxu0 %v96
    %628 = vmatpush.msra.mxu0 %v92
    %629 = vmatpush.msra.mxu0 %v88
    %630 = vmatmul.f32.gmra.mxu0 %v439
    %v631 = vpop.f32.mrf.mxu0
    %v632 = vadd.f32 %v612, %v631
    %633 = vdwg.mxu0
    %634 = vmatpush.msra.mxu0 %v212
    %635 = vmatpush.msra.mxu0 %v208
    %636 = vmatpush.msra.mxu0 %v204
    %637 = vmatpush.msra.mxu0 %v200
    %638 = vmatpush.msra.mxu0 %v196
    %639 = vmatpush.msra.mxu0 %v192
    %640 = vmatpush.msra.mxu0 %v188
    %641 = vmatpush.msra.mxu0 %v184
    %642 = vmatpush.msra.mxu0 %v180
    %643 = vmatpush.msra.mxu0 %v176
    %644 = vmatpush.msra.mxu0 %v172
    %645 = vmatpush.msra.mxu0 %v168
    %646 = vmatpush.msra.mxu0 %v164
    %647 = vmatpush.msra.mxu0 %v160
    %648 = vmatpush.msra.mxu0 %v156
    %649 = vmatpush.msra.mxu0 %v152
    %650 = vmatmul.f32.gmra.mxu0 %v440
    %v651 = vpop.f32.mrf.mxu0
    %v652 = vadd.f32 %v632, %v651
    %653 = vdwg.mxu0
    %654 = vmatpush.msra.mxu0 %v276
    %655 = vmatpush.msra.mxu0 %v272
    %656 = vmatpush.msra.mxu0 %v268
    %657 = vmatpush.msra.mxu0 %v264
    %658 = vmatpush.msra.mxu0 %v260
    %659 = vmatpush.msra.mxu0 %v256
    %660 = vmatpush.msra.mxu0 %v252
    %661 = vmatpush.msra.mxu0 %v248
    %662 = vmatpush.msra.mxu0 %v244
    %663 = vmatpush.msra.mxu0 %v240
    %664 = vmatpush.msra.mxu0 %v236
    %665 = vmatpush.msra.mxu0 %v232
    %666 = vmatpush.msra.mxu0 %v228
    %667 = vmatpush.msra.mxu0 %v224
    %668 = vmatpush.msra.mxu0 %v220
    %669 = vmatpush.msra.mxu0 %v216
    %670 = vmatmul.f32.gmra.mxu0 %v441
    %v671 = vpop.f32.mrf.mxu0
    %v672 = vadd.f32 %v652, %v671
    %673 = vdwg.mxu0
    %674 = vmatpush.msra.mxu0 %v340
    %675 = vmatpush.msra.mxu0 %v336
    %676 = vmatpush.msra.mxu0 %v332
    %677 = vmatpush.msra.mxu0 %v328
    %678 = vmatpush.msra.mxu0 %v324
    %679 = vmatpush.msra.mxu0 %v320
    %680 = vmatpush.msra.mxu0 %v316
    %681 = vmatpush.msra.mxu0 %v312
    %682 = vmatpush.msra.mxu0 %v308
    %683 = vmatpush.msra.mxu0 %v304
    %684 = vmatpush.msra.mxu0 %v300
    %685 = vmatpush.msra.mxu0 %v296
    %686 = vmatpush.msra.mxu0 %v292
    %687 = vmatpush.msra.mxu0 %v288
    %688 = vmatpush.msra.mxu0 %v284
    %689 = vmatpush.msra.mxu0 %v280
    %690 = vmatmul.f32.gmra.mxu0 %v442
    %v691 = vpop.f32.mrf.mxu0
    %v692 = vadd.f32 %v672, %v691
    %693 = vdwg.mxu0
    %694 = vmatpush.msra.mxu0 %v404
    %695 = vmatpush.msra.mxu0 %v400
    %696 = vmatpush.msra.mxu0 %v396
    %697 = vmatpush.msra.mxu0 %v392
    %698 = vmatpush.msra.mxu0 %v388
    %699 = vmatpush.msra.mxu0 %v384
    %700 = vmatpush.msra.mxu0 %v380
    %701 = vmatpush.msra.mxu0 %v376
    %702 = vmatpush.msra.mxu0 %v372
    %703 = vmatpush.msra.mxu0 %v368
    %704 = vmatpush.msra.mxu0 %v364
    %705 = vmatpush.msra.mxu0 %v360
    %706 = vmatpush.msra.mxu0 %v356
    %707 = vmatpush.msra.mxu0 %v352
    %708 = vmatpush.msra.mxu0 %v348
    %709 = vmatpush.msra.mxu0 %v344
    %710 = vmatmul.f32.gmra.mxu0 %v443
    %v711 = vpop.f32.mrf.mxu0
    %v712 = vadd.f32 %v692, %v711
    %713 = vdwg.mxu0
    %714 = vmatpush.msra.mxu0 0.0
    %715 = vmatpush.msra.mxu0 0.0
    %716 = vmatpush.msra.mxu0 0.0
    %717 = vmatpush.msra.mxu0 0.0
    %718 = vmatpush.msra.mxu0 0.0
    %719 = vmatpush.msra.mxu0 0.0
    %720 = vmatpush.msra.mxu0 0.0
    %721 = vmatpush.msra.mxu0 0.0
    %722 = vmatpush.msra.mxu0 0.0
    %723 = vmatpush.msra.mxu0 0.0
    %724 = vmatpush.msra.mxu0 0.0
    %725 = vmatpush.msra.mxu0 0.0
    %726 = vmatpush.msra.mxu0 %v420
    %727 = vmatpush.msra.mxu0 %v416
    %728 = vmatpush.msra.mxu0 %v412
    %729 = vmatpush.msra.mxu0 %v408
    %730 = vmatmul.f32.gmra.mxu0 %v452
    %v731 = vpop.f32.mrf.mxu0
    %v732 = vadd.f32 %v712, %v731
    %733 = vdwg.mxu0
    %734 = vmatpush.msra.mxu0 %v85
    %735 = vmatpush.msra.mxu0 %v81
    %736 = vmatpush.msra.mxu0 %v77
    %737 = vmatpush.msra.mxu0 %v73
    %738 = vmatpush.msra.mxu0 %v69
    %739 = vmatpush.msra.mxu0 %v65
    %740 = vmatpush.msra.mxu0 %v61
    %741 = vmatpush.msra.mxu0 %v57
    %742 = vmatpush.msra.mxu0 %v53
    %743 = vmatpush.msra.mxu0 %v49
    %744 = vmatpush.msra.mxu0 %v45
    %745 = vmatpush.msra.mxu0 %v41
    %746 = vmatpush.msra.mxu0 %v37
    %747 = vmatpush.msra.mxu0 %v33
    %748 = vmatpush.msra.mxu0 %v29
    %749 = vmatpush.msra.mxu0 %v25
    %750 = vmatmul.f32.gmra.mxu0 %v438
    %v751 = vpop.f32.mrf.mxu0
    %v752 = vadd.f32 %v427, %v751
    %753 = vdwg.mxu0
    %754 = vmatpush.msra.mxu0 %v149
    %755 = vmatpush.msra.mxu0 %v145
    %756 = vmatpush.msra.mxu0 %v141
    %757 = vmatpush.msra.mxu0 %v137
    %758 = vmatpush.msra.mxu0 %v133
    %759 = vmatpush.msra.mxu0 %v129
    %760 = vmatpush.msra.mxu0 %v125
    %761 = vmatpush.msra.mxu0 %v121
    %762 = vmatpush.msra.mxu0 %v117
    %763 = vmatpush.msra.mxu0 %v113
    %764 = vmatpush.msra.mxu0 %v109
    %765 = vmatpush.msra.mxu0 %v105
    %766 = vmatpush.msra.mxu0 %v101
    %767 = vmatpush.msra.mxu0 %v97
    %768 = vmatpush.msra.mxu0 %v93
    %769 = vmatpush.msra.mxu0 %v89
    %770 = vmatmul.f32.gmra.mxu0 %v439
    %v771 = vpop.f32.mrf.mxu0
    %v772 = vadd.f32 %v752, %v771
    %773 = vdwg.mxu0
    %774 = vmatpush.msra.mxu0 %v213
    %775 = vmatpush.msra.mxu0 %v209
    %776 = vmatpush.msra.mxu0 %v205
    %777 = vmatpush.msra.mxu0 %v201
    %778 = vmatpush.msra.mxu0 %v197
    %779 = vmatpush.msra.mxu0 %v193
    %780 = vmatpush.msra.mxu0 %v189
    %781 = vmatpush.msra.mxu0 %v185
    %782 = vmatpush.msra.mxu0 %v181
    %783 = vmatpush.msra.mxu0 %v177
    %784 = vmatpush.msra.mxu0 %v173
    %785 = vmatpush.msra.mxu0 %v169
    %786 = vmatpush.msra.mxu0 %v165
    %787 = vmatpush.msra.mxu0 %v161
    %788 = vmatpush.msra.mxu0 %v157
    %789 = vmatpush.msra.mxu0 %v153
    %790 = vmatmul.f32.gmra.mxu0 %v440
    %v791 = vpop.f32.mrf.mxu0
    %v792 = vadd.f32 %v772, %v791
    %793 = vdwg.mxu0
    %794 = vmatpush.msra.mxu0 %v277
    %795 = vmatpush.msra.mxu0 %v273
    %796 = vmatpush.msra.mxu0 %v269
    %797 = vmatpush.msra.mxu0 %v265
    %798 = vmatpush.msra.mxu0 %v261
    %799 = vmatpush.msra.mxu0 %v257
    %800 = vmatpush.msra.mxu0 %v253
    %801 = vmatpush.msra.mxu0 %v249
    %802 = vmatpush.msra.mxu0 %v245
    %803 = vmatpush.msra.mxu0 %v241
    %804 = vmatpush.msra.mxu0 %v237
    %805 = vmatpush.msra.mxu0 %v233
    %806 = vmatpush.msra.mxu0 %v229
    %807 = vmatpush.msra.mxu0 %v225
    %808 = vmatpush.msra.mxu0 %v221
    %809 = vmatpush.msra.mxu0 %v217
    %810 = vmatmul.f32.gmra.mxu0 %v441
    %v811 = vpop.f32.mrf.mxu0
    %v812 = vadd.f32 %v792, %v811
    %813 = vdwg.mxu0
    %814 = vmatpush.msra.mxu0 %v341
    %815 = vmatpush.msra.mxu0 %v337
    %816 = vmatpush.msra.mxu0 %v333
    %817 = vmatpush.msra.mxu0 %v329
    %818 = vmatpush.msra.mxu0 %v325
    %819 = vmatpush.msra.mxu0 %v321
    %820 = vmatpush.msra.mxu0 %v317
    %821 = vmatpush.msra.mxu0 %v313
    %822 = vmatpush.msra.mxu0 %v309
    %823 = vmatpush.msra.mxu0 %v305
    %824 = vmatpush.msra.mxu0 %v301
    %825 = vmatpush.msra.mxu0 %v297
    %826 = vmatpush.msra.mxu0 %v293
    %827 = vmatpush.msra.mxu0 %v289
    %828 = vmatpush.msra.mxu0 %v285
    %829 = vmatpush.msra.mxu0 %v281
    %830 = vmatmul.f32.gmra.mxu0 %v442
    %v831 = vpop.f32.mrf.mxu0
    %v832 = vadd.f32 %v812, %v831
    %833 = vdwg.mxu0
    %834 = vmatpush.msra.mxu0 %v405
    %835 = vmatpush.msra.mxu0 %v401
    %836 = vmatpush.msra.mxu0 %v397
    %837 = vmatpush.msra.mxu0 %v393
    %838 = vmatpush.msra.mxu0 %v389
    %839 = vmatpush.msra.mxu0 %v385
    %840 = vmatpush.msra.mxu0 %v381
    %841 = vmatpush.msra.mxu0 %v377
    %842 = vmatpush.msra.mxu0 %v373
    %843 = vmatpush.msra.mxu0 %v369
    %844 = vmatpush.msra.mxu0 %v365
    %845 = vmatpush.msra.mxu0 %v361
    %846 = vmatpush.msra.mxu0 %v357
    %847 = vmatpush.msra.mxu0 %v353
    %848 = vmatpush.msra.mxu0 %v349
    %849 = vmatpush.msra.mxu0 %v345
    %850 = vmatmul.f32.gmra.mxu0 %v443
    %v851 = vpop.f32.mrf.mxu0
    %v852 = vadd.f32 %v832, %v851
    %853 = vdwg.mxu0
    %854 = vmatpush.msra.mxu0 0.0
    %855 = vmatpush.msra.mxu0 0.0
    %856 = vmatpush.msra.mxu0 0.0
    %857 = vmatpush.msra.mxu0 0.0
    %858 = vmatpush.msra.mxu0 0.0
    %859 = vmatpush.msra.mxu0 0.0
    %860 = vmatpush.msra.mxu0 0.0
    %861 = vmatpush.msra.mxu0 0.0
    %862 = vmatpush.msra.mxu0 0.0
    %863 = vmatpush.msra.mxu0 0.0
    %864 = vmatpush.msra.mxu0 0.0
    %865 = vmatpush.msra.mxu0 0.0
    %866 = vmatpush.msra.mxu0 %v421
    %867 = vmatpush.msra.mxu0 %v417
    %868 = vmatpush.msra.mxu0 %v413
    %869 = vmatpush.msra.mxu0 %v409
    %870 = vmatmul.f32.gmra.mxu0 %v452
    %v871 = vpop.f32.mrf.mxu0
    %v872 = vadd.f32 %v852, %v871
    %873 = vdwg.mxu0
    %874 = vmatpush.msra.mxu0 %v86
    %875 = vmatpush.msra.mxu0 %v82
    %876 = vmatpush.msra.mxu0 %v78
    %877 = vmatpush.msra.mxu0 %v74
    %878 = vmatpush.msra.mxu0 %v70
    %879 = vmatpush.msra.mxu0 %v66
    %880 = vmatpush.msra.mxu0 %v62
    %881 = vmatpush.msra.mxu0 %v58
    %882 = vmatpush.msra.mxu0 %v54
    %883 = vmatpush.msra.mxu0 %v50
    %884 = vmatpush.msra.mxu0 %v46
    %885 = vmatpush.msra.mxu0 %v42
    %886 = vmatpush.msra.mxu0 %v38
    %887 = vmatpush.msra.mxu0 %v34
    %888 = vmatpush.msra.mxu0 %v30
    %889 = vmatpush.msra.mxu0 %v26
    %890 = vmatmul.f32.gmra.mxu0 %v438
    %v891 = vpop.f32.mrf.mxu0
    %v892 = vadd.f32 %v428, %v891
    %893 = vdwg.mxu0
    %894 = vmatpush.msra.mxu0 %v150
    %895 = vmatpush.msra.mxu0 %v146
    %896 = vmatpush.msra.mxu0 %v142
    %897 = vmatpush.msra.mxu0 %v138
    %898 = vmatpush.msra.mxu0 %v134
    %899 = vmatpush.msra.mxu0 %v130
    %900 = vmatpush.msra.mxu0 %v126
    %901 = vmatpush.msra.mxu0 %v122
    %902 = vmatpush.msra.mxu0 %v118
    %903 = vmatpush.msra.mxu0 %v114
    %904 = vmatpush.msra.mxu0 %v110
    %905 = vmatpush.msra.mxu0 %v106
    %906 = vmatpush.msra.mxu0 %v102
    %907 = vmatpush.msra.mxu0 %v98
    %908 = vmatpush.msra.mxu0 %v94
    %909 = vmatpush.msra.mxu0 %v90
    %910 = vmatmul.f32.gmra.mxu0 %v439
    %v911 = vpop.f32.mrf.mxu0
    %v912 = vadd.f32 %v892, %v911
    %913 = vdwg.mxu0
    %914 = vmatpush.msra.mxu0 %v214
    %915 = vmatpush.msra.mxu0 %v210
    %916 = vmatpush.msra.mxu0 %v206
    %917 = vmatpush.msra.mxu0 %v202
    %918 = vmatpush.msra.mxu0 %v198
    %919 = vmatpush.msra.mxu0 %v194
    %920 = vmatpush.msra.mxu0 %v190
    %921 = vmatpush.msra.mxu0 %v186
    %922 = vmatpush.msra.mxu0 %v182
    %923 = vmatpush.msra.mxu0 %v178
    %924 = vmatpush.msra.mxu0 %v174
    %925 = vmatpush.msra.mxu0 %v170
    %926 = vmatpush.msra.mxu0 %v166
    %927 = vmatpush.msra.mxu0 %v162
    %928 = vmatpush.msra.mxu0 %v158
    %929 = vmatpush.msra.mxu0 %v154
    %930 = vmatmul.f32.gmra.mxu0 %v440
    %v931 = vpop.f32.mrf.mxu0
    %v932 = vadd.f32 %v912, %v931
    %933 = vdwg.mxu0
    %934 = vmatpush.msra.mxu0 %v278
    %935 = vmatpush.msra.mxu0 %v274
    %936 = vmatpush.msra.mxu0 %v270
    %937 = vmatpush.msra.mxu0 %v266
    %938 = vmatpush.msra.mxu0 %v262
    %939 = vmatpush.msra.mxu0 %v258
    %940 = vmatpush.msra.mxu0 %v254
    %941 = vmatpush.msra.mxu0 %v250
    %942 = vmatpush.msra.mxu0 %v246
    %943 = vmatpush.msra.mxu0 %v242
    %944 = vmatpush.msra.mxu0 %v238
    %945 = vmatpush.msra.mxu0 %v234
    %946 = vmatpush.msra.mxu0 %v230
    %947 = vmatpush.msra.mxu0 %v226
    %948 = vmatpush.msra.mxu0 %v222
    %949 = vmatpush.msra.mxu0 %v218
    %950 = vmatmul.f32.gmra.mxu0 %v441
    %v951 = vpop.f32.mrf.mxu0
    %v952 = vadd.f32 %v932, %v951
    %953 = vdwg.mxu0
    %954 = vmatpush.msra.mxu0 %v342
    %955 = vmatpush.msra.mxu0 %v338
    %956 = vmatpush.msra.mxu0 %v334
    %957 = vmatpush.msra.mxu0 %v330
    %958 = vmatpush.msra.mxu0 %v326
    %959 = vmatpush.msra.mxu0 %v322
    %960 = vmatpush.msra.mxu0 %v318
    %961 = vmatpush.msra.mxu0 %v314
    %962 = vmatpush.msra.mxu0 %v310
    %963 = vmatpush.msra.mxu0 %v306
    %964 = vmatpush.msra.mxu0 %v302
    %965 = vmatpush.msra.mxu0 %v298
    %966 = vmatpush.msra.mxu0 %v294
    %967 = vmatpush.msra.mxu0 %v290
    %968 = vmatpush.msra.mxu0 %v286
    %969 = vmatpush.msra.mxu0 %v282
    %970 = vmatmul.f32.gmra.mxu0 %v442
    %v971 = vpop.f32.mrf.mxu0
    %v972 = vadd.f32 %v952, %v971
    %973 = vdwg.mxu0
    %974 = vmatpush.msra.mxu0 %v406
    %975 = vmatpush.msra.mxu0 %v402
    %976 = vmatpush.msra.mxu0 %v398
    %977 = vmatpush.msra.mxu0 %v394
    %978 = vmatpush.msra.mxu0 %v390
    %979 = vmatpush.msra.mxu0 %v386
    %980 = vmatpush.msra.mxu0 %v382
    %981 = vmatpush.msra.mxu0 %v378
    %982 = vmatpush.msra.mxu0 %v374
    %983 = vmatpush.msra.mxu0 %v370
    %984 = vmatpush.msra.mxu0 %v366
    %985 = vmatpush.msra.mxu0 %v362
    %986 = vmatpush.msra.mxu0 %v358
    %987 = vmatpush.msra.mxu0 %v354
    %988 = vmatpush.msra.mxu0 %v350
    %989 = vmatpush.msra.mxu0 %v346
    %990 = vmatmul.f32.gmra.mxu0 %v443
    %v991 = vpop.f32.mrf.mxu0
    %v992 = vadd.f32 %v972, %v991
    %993 = vdwg.mxu0
    %994 = vmatpush.msra.mxu0 0.0
    %995 = vmatpush.msra.mxu0 0.0
    %996 = vmatpush.msra.mxu0 0.0
    %997 = vmatpush.msra.mxu0 0.0
    %998 = vmatpush.msra.mxu0 0.0
    %999 = vmatpush.msra.mxu0 0.0
    %1000 = vmatpush.msra.mxu0 0.0
    %1001 = vmatpush.msra.mxu0 0.0
    %1002 = vmatpush.msra.mxu0 0.0
    %1003 = vmatpush.msra.mxu0 0.0
    %1004 = vmatpush.msra.mxu0 0.0
    %1005 = vmatpush.msra.mxu0 0.0
    %1006 = vmatpush.msra.mxu0 %v422
    %1007 = vmatpush.msra.mxu0 %v418
    %1008 = vmatpush.msra.mxu0 %v414
    %1009 = vmatpush.msra.mxu0 %v410
    %1010 = vmatmul.f32.gmra.mxu0 %v452
    %v1011 = vpop.f32.mrf.mxu0
    %v1012 = vadd.f32 %v992, %v1011
    %1013 = vdwg.mxu0
    %v1014 = vmax.f32 %v592, 0.0
    %v1015 = vmax.f32 %v732, 0.0
    %v1016 = vmax.f32 %v872, 0.0
    %v1017 = vmax.f32 %v1012, 0.0
    %v1018 = vld [vmem:[%s3] sm:$0xff]
    %v1019 = vld [vmem:[%s3 + $0x8] sm:$0xff]
    %v1020 = vld [vmem:[%s3 + $0x10] sm:$0xff]
    %v1021 = vld [vmem:[%s3 + $0x18] sm:$0xff]
    %v1022 = vld [vmem:[%s3 + $0x20] sm:$0xff]
    %v1023 = vld [vmem:[%s3 + $0x28] sm:$0xff]
    %v1024 = vld [vmem:[%s3 + $0x30] sm:$0xff]
    %v1025 = vld [vmem:[%s3 + $0x38] sm:$0xff]
    %v1026 = vld [vmem:[%s3 + $0x40] sm:$0xff]
    %v1027 = vld [vmem:[%s3 + $0x48] sm:$0xff]
    %v1028 = vld [vmem:[%s3 + $0x50] sm:$0xff]
    %v1029 = vld [vmem:[%s3 + $0x58] sm:$0xff]
    %v1030 = vld [vmem:[%s3 + $0x60] sm:$0xff]
    %v1031 = vld [vmem:[%s3 + $0x68] sm:$0xff]
    %v1032 = vld [vmem:[%s3 + $0x70] sm:$0xff]
    %v1033 = vld [vmem:[%s3 + $0x78] sm:$0xff]
    %v1034 = vld [vmem:[%s3 + $0x80] sm:$0xff]
    %v1035 = vld [vmem:[%s3 + $0x88] sm:$0xff]
    %v1036 = vld [vmem:[%s3 + $0x90] sm:$0xff]
    %v1037 = vld [vmem:[%s3 + $0x98] sm:$0xff]
    %v1038 = vld [vmem:[%s3 + $0xa0] sm:$0xff]
    %v1039 = vld [vmem:[%s3 + $0xa8] sm:$0xff]
    %v1040 = vld [vmem:[%s3 + $0xb0] sm:$0xff]
    %v1041 = vld [vmem:[%s3 + $0xb8] sm:$0xff]
    %v1042 = vld [vmem:[%s3 + $0xc0] sm:$0xff]
    %v1043 = vld [vmem:[%s3 + $0xc8] sm:$0xff]
    %v1044 = vld [vmem:[%s3 + $0xd0] sm:$0xff]
    %v1045 = vld [vmem:[%s3 + $0xd8] sm:$0xff]
    %v1046 = vld [vmem:[%s3 + $0xe0] sm:$0xff]
    %v1047 = vld [vmem:[%s3 + $0xe8] sm:$0xff]
    %v1048 = vld [vmem:[%s3 + $0xf0] sm:$0xff]
    %v1049 = vld [vmem:[%s3 + $0xf8] sm:$0xff]
    %v1050 = vld [vmem:[%s3 + $0x100] sm:$0xff]
    %v1051 = vld [vmem:[%s3 + $0x108] sm:$0xff]
    %v1052 = vld [vmem:[%s3 + $0x110] sm:$0xff]
    %v1053 = vld [vmem:[%s3 + $0x118] sm:$0xff]
    %v1054 = vld [vmem:[%s3 + $0x120] sm:$0xff]
    %v1055 = vld [vmem:[%s3 + $0x128] sm:$0xff]
    %v1056 = vld [vmem:[%s3 + $0x130] sm:$0xff]
    %v1057 = vld [vmem:[%s3 + $0x138] sm:$0xff]
    %v1058 = vld [vmem:[%s3 + $0x140] sm:$0xff]
    %v1059 = vld [vmem:[%s3 + $0x148] sm:$0xff]
    %v1060 = vld [vmem:[%s3 + $0x150] sm:$0xff]
    %v1061 = vld [vmem:[%s3 + $0x158] sm:$0xff]
    %v1062 = vld [vmem:[%s3 + $0x160] sm:$0xff]
    %v1063 = vld [vmem:[%s3 + $0x168] sm:$0xff]
    %v1064 = vld [vmem:[%s3 + $0x170] sm:$0xff]
    %v1065 = vld [vmem:[%s3 + $0x178] sm:$0xff]
    %v1066 = vld [vmem:[%s3 + $0x180] sm:$0xff]
    %v1067 = vld [vmem:[%s3 + $0x188] sm:$0xff]
    %v1068 = vld [vmem:[%s3 + $0x190] sm:$0xff]
    %v1069 = vld [vmem:[%s3 + $0x198] sm:$0xff]
    %v1070 = vld [vmem:[%s3 + $0x1a0] sm:$0xff]
    %v1071 = vld [vmem:[%s3 + $0x1a8] sm:$0xff]
    %v1072 = vld [vmem:[%s3 + $0x1b0] sm:$0xff]
    %v1073 = vld [vmem:[%s3 + $0x1b8] sm:$0xff]
    %v1074 = vld [vmem:[%s3 + $0x1c0] sm:$0xff]
    %v1075 = vld [vmem:[%s3 + $0x1c8] sm:$0xff]
    %v1076 = vld [vmem:[%s3 + $0x1d0] sm:$0xff]
    %v1077 = vld [vmem:[%s3 + $0x1d8] sm:$0xff]
    %v1078 = vld [vmem:[%s3 + $0x1e0] sm:$0xff]
    %v1079 = vld [vmem:[%s3 + $0x1e8] sm:$0xff]
    %v1080 = vld [vmem:[%s3 + $0x1f0] sm:$0xf]
    %v1081 = vld [vmem:[%s4] sm:$0x1]
    %v1083 = vperm.slane %v1081, 0
    %vm1085 = vcmask 949248
    %v1087 = vsel %vm1085, %v1017, 0
    %vm1089 = vcmask 1043456
    %v1091 = vsel %vm1089, %v1080, 0
    %1093 = vmatpush.msra.mxu0 %v1033
    %1094 = vmatpush.msra.mxu0 %v1032
    %1095 = vmatpush.msra.mxu0 %v1031
    %1096 = vmatpush.msra.mxu0 %v1030
    %1097 = vmatpush.msra.mxu0 %v1029
    %1098 = vmatpush.msra.mxu0 %v1028
    %1099 = vmatpush.msra.mxu0 %v1027
    %1100 = vmatpush.msra.mxu0 %v1026
    %1101 = vmatpush.msra.mxu0 %v1025
    %1102 = vmatpush.msra.mxu0 %v1024
    %1103 = vmatpush.msra.mxu0 %v1023
    %1104 = vmatpush.msra.mxu0 %v1022
    %1105 = vmatpush.msra.mxu0 %v1021
    %1106 = vmatpush.msra.mxu0 %v1020
    %1107 = vmatpush.msra.mxu0 %v1019
    %1108 = vmatpush.msra.mxu0 %v1018
    %1109 = vmatmul.f32.gmra.mxu0 %v1014
    %v1110 = vpop.f32.mrf.mxu0
    %v1111 = vadd.f32 %v1083, %v1110
    %1112 = vdwg.mxu0
    %1113 = vmatpush.msra.mxu0 %v1049
    %1114 = vmatpush.msra.mxu0 %v1048
    %1115 = vmatpush.msra.mxu0 %v1047
    %1116 = vmatpush.msra.mxu0 %v1046
    %1117 = vmatpush.msra.mxu0 %v1045
    %1118 = vmatpush.msra.mxu0 %v1044
    %1119 = vmatpush.msra.mxu0 %v1043
    %1120 = vmatpush.msra.mxu0 %v1042
    %1121 = vmatpush.msra.mxu0 %v1041
    %1122 = vmatpush.msra.mxu0 %v1040
    %1123 = vmatpush.msra.mxu0 %v1039
    %1124 = vmatpush.msra.mxu0 %v1038
    %1125 = vmatpush.msra.mxu0 %v1037
    %1126 = vmatpush.msra.mxu0 %v1036
    %1127 = vmatpush.msra.mxu0 %v1035
    %1128 = vmatpush.msra.mxu0 %v1034
    %1129 = vmatmul.f32.gmra.mxu0 %v1015
    %v1130 = vpop.f32.mrf.mxu0
    %v1131 = vadd.f32 %v1111, %v1130
    %1132 = vdwg.mxu0
    %1133 = vmatpush.msra.mxu0 %v1065
    %1134 = vmatpush.msra.mxu0 %v1064
    %1135 = vmatpush.msra.mxu0 %v1063
    %1136 = vmatpush.msra.mxu0 %v1062
    %1137 = vmatpush.msra.mxu0 %v1061
    %1138 = vmatpush.msra.mxu0 %v1060
    %1139 = vmatpush.msra.mxu0 %v1059
    %1140 = vmatpush.msra.mxu0 %v1058
    %1141 = vmatpush.msra.mxu0 %v1057
    %1142 = vmatpush.msra.mxu0 %v1056
    %1143 = vmatpush.msra.mxu0 %v1055
    %1144 = vmatpush.msra.mxu0 %v1054
    %1145 = vmatpush.msra.mxu0 %v1053
    %1146 = vmatpush.msra.mxu0 %v1052
    %1147 = vmatpush.msra.mxu0 %v1051
    %1148 = vmatpush.msra.mxu0 %v1050
    %1149 = vmatmul.f32.gmra.mxu0 %v1016
    %v1150 = vpop.f32.mrf.mxu0
    %v1151 = vadd.f32 %v1131, %v1150
    %1152 = vdwg.mxu0
    %1153 = vmatpush.msra.mxu0 0.0
    %1154 = vmatpush.msra.mxu0 %v1091
    %1155 = vmatpush.msra.mxu0 %v1079
    %1156 = vmatpush.msra.mxu0 %v1078
    %1157 = vmatpush.msra.mxu0 %v1077
    %1158 = vmatpush.msra.mxu0 %v1076
    %1159 = vmatpush.msra.mxu0 %v1075
    %1160 = vmatpush.msra.mxu0 %v1074
    %1161 = vmatpush.msra.mxu0 %v1073
    %1162 = vmatpush.msra.mxu0 %v1072
    %1163 = vmatpush.msra.mxu0 %v1071
    %1164 = vmatpush.msra.mxu0 %v1070
    %1165 = vmatpush.msra.mxu0 %v1069
    %1166 = vmatpush.msra.mxu0 %v1068
    %1167 = vmatpush.msra.mxu0 %v1067
    %1168 = vmatpush.msra.mxu0 %v1066
    %1169 = vmatmul.f32.gmra.mxu0 %v1087
    %v1170 = vpop.f32.mrf.mxu0
    %v1171 = vadd.f32 %v1151, %v1170
    %1172 = vdwg.mxu0
    %vm1173 = vcmask 1041408
    %v1174 = vsel %vm1173, %v1171, -inf
    %1175 = vmax.xlane.f32.xlu0 %v1174
    %v1176 = vpop.xlane.xlu0 %1175
    %v1177 = vsub.f32 %v1171, %v1176
    %v1178 = vmul.f32 %v1177, 1.442695
    %v1179 = vpow.pop %v1178
    %v1180 = vsel %vm1173, %v1179, 0.0
    %1181 = vadd.xlane.f32.xlu0 %v1180
    %v1182 = vpop.xlane.xlu0 %1181
    %v1183 = vlog2.pop %v1182
    %v1184 = vmul.f32 %v1183, 0.6931472
    %v1185 = vsub.f32 %v1177, %v1184
    %1186 = vst [vmem:[#allocation2] sm:$0x3] %v1185
    // Predicated region
    $region22: #{net_forward.5} parent=1 // pred_check
      _
    $region23: #{net_forward.5} parent=1 // pred_check_branch
      %1188 = sbr.rel (0) target = $region25
    $region24: #{net_forward.5} parent=1 // pred_region
      %1190 = vsyncadd [#allocation3], 0
      %s1192 = sshll.u32 [#allocation2], 4
      %s1193 = int_to_ptr.vmem [resolvable:$true] %s1192
      %s1194 = sshll.u32 %s5, 4
      %s1195 = int_to_ptr.hbm [resolvable:$true] %s1194
      %1197 = dma.vmem_to_hbm [thread:$0]  %s1193, 32, %s1195, [#allocation3]
    $region25: #{net_forward.5} parent=1 // pred_fallthru
      _
    // Predicated region
    $region26: #{net_forward.5} parent=1 // pred_check
      _
    $region27: #{net_forward.5} parent=1 // pred_check_branch
      %1199 = sbr.rel (0) target = $region29
    $region28: #{net_forward.5} parent=1 // pred_region
      %1201 = dma.done [#allocation3], 32
    $region29: #{net_forward.5} parent=1 // pred_fallthru
      _
    %1202 = vsyncpa [#allocation3], 1

</llo_original>
